<compile_context>
chip_gen: v6e
topology: v6e:2x2x1
jax: 0.10.0
libtpu: 0.0.40
codegen_flags: <defaults>
</compile_context>

<pallas_src>
import functools

import jax
import jax.numpy as jnp
from jax import lax
from jax.experimental import pallas as pl
from jax.experimental.pallas import tpu as pltpu

_LN_EPS = 1e-6
_NEG_INF = -1e9


# ------------------------------ hardware helpers ------------------------------

def _vmem_capacity_bytes():
    try:
        return int(pltpu.get_tpu_info().vmem_capacity_bytes)
    except Exception:
        return 128 * 1024 * 1024  # v5e/v6e physical VMEM


def _vmem_limit_bytes():
    # ~75% of physical VMEM, capped; leaves headroom for Mosaic-internal scratch.
    return int(min((3 * _vmem_capacity_bytes()) // 4, 96 * 1024 * 1024))


def _row_tile(m):
    """Largest row tile dividing m; capped lower on v7x (64 MiB VMEM)."""
    cap = 512 if _vmem_capacity_bytes() > (100 << 20) else 256
    for t in (512, 256, 128, 64, 32, 16, 8):
        if t <= cap and m % t == 0:
            return t
    # TODO(synk): pad B*S to a multiple of 256 instead of single-block fallback.
    return m


def _const_spec(shape, single_buffer):
    """Spec for a grid-invariant operand (weights / biases / LN params).

    The block index never changes across the grid, so one VMEM buffer is
    enough; pl.Buffered(1) reclaims the default second (double) buffer.
    Falls back to a plain spec if pipeline_mode is unavailable.
    """
    index_map = lambda i: (0,) * len(shape)
    if single_buffer:
        try:
            return pl.BlockSpec(shape, index_map, pipeline_mode=pl.Buffered(1))
        except TypeError:
            pass
    return pl.BlockSpec(shape, index_map)


def _compiler_params():
    return pltpu.CompilerParams(dimension_semantics=("parallel",),
                                vmem_limit_bytes=_vmem_limit_bytes())


# ------------------------------- Pallas kernels -------------------------------

def _ln_qkv_kernel(x_ref, g_ref, b_ref, w_ref, wb_ref, o_ref, *, eps):
    # LN1 (unbiased std, eps on std) fused with the head-major QKV projection.
    x = x_ref[...]                                        # (tm, D) f32
    d = x.shape[-1]
    mean = jnp.mean(x, axis=-1, keepdims=True)
    diff = x - mean
    var = jnp.sum(diff * diff, axis=-1, keepdims=True) * (1.0 / (d - 1))
    inv = pl.reciprocal(jnp.sqrt(var) + eps, approx=False)   # exact for LN
    xn = g_ref[...] * (diff * inv) + b_ref[...]               # f32 stats
    o_ref[...] = (jnp.dot(xn.astype(jnp.bfloat16), w_ref[...],     # bf16 x bf16 MXU
                          preferred_element_type=jnp.float32)
                  + wb_ref[...])                              # (tm, 3D) f32


def _attn_kernel(qkv_ref, m_ref, o_ref, *, n_heads, dk, scale):
    # One grid step = one batch element, all heads.  qkv is head-major
    # ([Q_h|K_h|V_h] per head), so per-head q/k/v are contiguous static slices.
    qkv = qkv_ref[...]                                    # (S, 3D) f32
    key_mask = m_ref[0, 0]                                # (S,) in {0,1}
    for h in range(n_heads):                              # static unroll
        base = h * 3 * dk
        q = qkv[:, base:base + dk].astype(jnp.bfloat16)
        k = qkv[:, base + dk:base + 2 * dk].astype(jnp.bfloat16)
        v = qkv[:, base + 2 * dk:base + 3 * dk].astype(jnp.bfloat16)
        # q @ k^T without materializing a transpose: contract the dk axis.
        s = lax.dot_general(q, k, (((1,), (1,)), ((), ())),
                            preferred_element_type=jnp.float32) * scale
        s = jnp.where(key_mask[None, :] == 0.0, _NEG_INF, s)   # exact reference mask
        s_max = jnp.max(s, axis=-1, keepdims=True)              # f32 stats
        p = jnp.exp(s - s_max)
        p = p * pl.reciprocal(jnp.sum(p, axis=-1, keepdims=True), approx=True)
        # Store this head's output directly (no H-way concatenate, no live H tiles).
        o_ref[:, h * dk:(h + 1) * dk] = jnp.dot(
            p.astype(jnp.bfloat16), v, preferred_element_type=jnp.float32)


def _out_ffn_kernel(a_ref, res_ref, wo_ref, bo_ref, g_ref, b_ref,
                    w1_ref, b1_ref, w2_ref, b2_ref, o_ref, *, eps):
    # Sublayer-0 tail + entire sublayer-1, fused per row tile:
    #   x_mid = attn @ Wo + bo + residual
    #   out   = x_mid + relu(LN2(x_mid) @ W1 + b1) @ W2 + b2
    x_mid = (jnp.dot(a_ref[...].astype(jnp.bfloat16), wo_ref[...],
                     preferred_element_type=jnp.float32)
             + bo_ref[...] + res_ref[...])                 # (tm, D) f32
    d = x_mid.shape[-1]
    mean = jnp.mean(x_mid, axis=-1, keepdims=True)
    diff = x_mid - mean
    var = jnp.sum(diff * diff, axis=-1, keepdims=True) * (1.0 / (d - 1))
    inv = pl.reciprocal(jnp.sqrt(var) + eps, approx=False)
    xn = g_ref[...] * (diff * inv) + b_ref[...]
    h = jnp.maximum(
        jnp.dot(xn.astype(jnp.bfloat16), w1_ref[...],
                preferred_element_type=jnp.float32) + b1_ref[...],
        0.0)                                               # (tm, Dff) f32, VMEM only
    o_ref[...] = (jnp.dot(h.astype(jnp.bfloat16), w2_ref[...],
                          preferred_element_type=jnp.float32)
                  + b2_ref[...] + x_mid)


# ------------------------------ Pallas wrappers --------------------------------

def ln_qkv(x2, g, b, wqkv, bqkv, single_buffer, eps=_LN_EPS):
    m, d = x2.shape
    d3 = wqkv.shape[1]
    tm = _row_tile(m)
    return pl.pallas_call(
        functools.partial(_ln_qkv_kernel, eps=eps),
        grid=(m // tm,),
        in_specs=[
            pl.BlockSpec((tm, d), lambda i: (i, 0)),
            _const_spec((1, d), single_buffer),
            _const_spec((1, d), single_buffer),
            _const_spec((d, d3), single_buffer),     # bf16 weight, VMEM-resident
            _const_spec((1, d3), single_buffer),
        ],
        out_specs=pl.BlockSpec((tm, d3), lambda i: (i, 0)),
        out_shape=jax.ShapeDtypeStruct((m, d3), jnp.float32),
        compiler_params=_compiler_params(),
    )(x2, g, b, wqkv, bqkv)


def attention(qkv, mask, n_heads, d_model):
    m, d3 = qkv.shape
    bsz = mask.shape[0]
    s = m // bsz
    dk = d_model // n_heads
    scale = 1.0 / float(dk) ** 0.5
    return pl.pallas_call(
        functools.partial(_attn_kernel, n_heads=n_heads, dk=dk, scale=scale),
        grid=(bsz,),
        in_specs=[
            pl.BlockSpec((s, d3), lambda i: (i, 0)),      # all heads of batch i
            pl.BlockSpec((1, 1, s), lambda i: (i, 0, 0)),
        ],
        out_specs=pl.BlockSpec((s, d_model), lambda i: (i, 0)),
        out_shape=jax.ShapeDtypeStruct((m, d_model), jnp.float32),
        compiler_params=_compiler_params(),
    )(qkv, mask)


def out_proj_ffn(attn, residual, params, single_buffer, eps=_LN_EPS):
    m, d = attn.shape
    dff = params["w1"].shape[1]
    tm = _row_tile(m)
    return pl.pallas_call(
        functools.partial(_out_ffn_kernel, eps=eps),
        grid=(m // tm,),
        in_specs=[
            pl.BlockSpec((tm, d), lambda i: (i, 0)),      # attention output
            pl.BlockSpec((tm, d), lambda i: (i, 0)),      # residual (sublayer-0 input)
            _const_spec((d, d), single_buffer),           # Wo (bf16)
            _const_spec((1, d), single_buffer),           # bo
            _const_spec((1, d), single_buffer),           # ln2_g
            _const_spec((1, d), single_buffer),           # ln2_b
            _const_spec((d, dff), single_buffer),         # W1 (bf16)
            _const_spec((1, dff), single_buffer),         # b1
            _const_spec((dff, d), single_buffer),         # W2 (bf16)
            _const_spec((1, d), single_buffer),           # b2
        ],
        out_specs=pl.BlockSpec((tm, d), lambda i: (i, 0)),
        out_shape=jax.ShapeDtypeStruct((m, d), jnp.float32),
        compiler_params=_compiler_params(),
    )(attn, residual, params["wo"], params["bo"], params["ln2_g"],
      params["ln2_b"], params["w1"], params["b1"], params["w2"], params["b2"])


# -------------------------------- EncoderLayer ---------------------------------

def init_params(key, d_model, d_ff, n_heads):
    ks = jax.random.split(key, 8)
    scale = 1.0 / float(d_model) ** 0.5
    dk = d_model // n_heads

    def lin(kw, kb, din, dout):
        w = jax.random.normal(kw, (din, dout), jnp.float32) * scale
        b = jax.random.normal(kb, (1, dout), jnp.float32) * 0.02
        return w, b

    wqkv, bqkv = lin(ks[0], ks[1], d_model, 3 * d_model)   # [Wq | Wk | Wv]
    # Reorder columns to head-major ([Q_h|K_h|V_h] per head) — free at init time;
    # lets the attention kernel slice contiguous per-head q/k/v blocks.
    wqkv = (wqkv.reshape(d_model, 3, n_heads, dk)
                 .transpose(0, 2, 1, 3).reshape(d_model, 3 * d_model))
    bqkv = (bqkv.reshape(1, 3, n_heads, dk)
                 .transpose(0, 2, 1, 3).reshape(1, 3 * d_model))
    wo, bo = lin(ks[2], ks[3], d_model, d_model)
    w1, b1 = lin(ks[4], ks[5], d_model, d_ff)
    w2, b2 = lin(ks[6], ks[7], d_ff, d_model)

    bf = jnp.bfloat16
    return dict(
        ln1_g=jnp.ones((1, d_model), jnp.float32),
        ln1_b=jnp.zeros((1, d_model), jnp.float32),
        ln2_g=jnp.ones((1, d_model), jnp.float32),
        ln2_b=jnp.zeros((1, d_model), jnp.float32),
        # Matmul weights stored bf16 (MXU-native); biases / LN params stay f32.
        wqkv=wqkv.astype(bf), bqkv=bqkv,
        wo=wo.astype(bf), bo=bo,
        w1=w1.astype(bf), b1=b1,
        w2=w2.astype(bf), b2=b2,
    )


def encoder_layer(x, mask, params, n_heads, single_buffer_weights=True):
    # TODO(synk): dropout is identity (eval mode / p=0); no stochastic path implemented.
    b, s, d = x.shape
    x2 = x.reshape(b * s, d)

    # K1: LN1 + fused (head-major) QKV projection -> [B*S, 3D]
    qkv = ln_qkv(x2, params["ln1_g"], params["ln1_b"],
                 params["wqkv"], params["bqkv"], single_buffer_weights)

    # K2: multi-head attention -> [B*S, D] (heads concatenated in order)
    attn = attention(qkv, mask, n_heads, d)

    # K3: Wo + residual + LN2 + FFN(ReLU) + residual -> [B*S, D]
    out = out_proj_ffn(attn, x2, params, single_buffer_weights)
    return out.reshape(b, s, d)


# -------------------------------- JAX reference ---------------------------------
# Mixed-precision reference matching the kernels' cast points (bf16 MXU operands,
# f32 accumulation / statistics) so the comparison isolates structural errors.

def encoder_layer_ref(x, mask, params, n_heads):
    b, s, d = x.shape
    dk = d // n_heads
    eps = _LN_EPS
    bf = jnp.bfloat16

    def ln(t, g, bb):
        mean = jnp.mean(t, axis=-1, keepdims=True)
        std = jnp.sqrt(jnp.sum((t - mean) ** 2, axis=-1, keepdims=True) / (d - 1))
        return g.reshape(-1) * (t - mean) / (std + eps) + bb.reshape(-1)

    def mm(a, w):
        return jnp.dot(a.astype(bf), w.astype(bf), preferred_element_type=jnp.float32)

    xn = ln(x, params["ln1_g"], params["ln1_b"])
    qkv = mm(xn, params["wqkv"]) + params["bqkv"].reshape(-1)     # head-major layout
    qkv = qkv.reshape(b, s, n_heads, 3, dk)
    q = qkv[..., 0, :].transpose(0, 2, 1, 3)                      # (b, h, s, dk)
    k = qkv[..., 1, :].transpose(0, 2, 1, 3)
    v = qkv[..., 2, :].transpose(0, 2, 1, 3)

    sc = jnp.einsum("bhqd,bhkd->bhqk", q.astype(bf), k.astype(bf),
                    preferred_element_type=jnp.float32) / jnp.sqrt(float(dk))
    sc = jnp.where(mask[:, None, :, :] == 0.0, _NEG_INF, sc)
    p = jax.nn.softmax(sc, axis=-1)
    attn = jnp.einsum("bhqk,bhkd->bhqd", p.astype(bf), v.astype(bf),
                      preferred_element_type=jnp.float32)
    attn = attn.transpose(0, 2, 1, 3).reshape(b, s, d)
    x = x + (mm(attn, params["wo"]) + params["bo"].reshape(-1))

    xn = ln(x, params["ln2_g"], params["ln2_b"])
    h = jnp.maximum(mm(xn, params["w1"]) + params["b1"].reshape(-1), 0.0)
    return x + (mm(h, params["w2"]) + params["b2"].reshape(-1))


# ------------------------------------- main -------------------------------------

if __name__ == "__main__":
    B, S, D, H, DFF = 2, 8, 32, 4, 64

    key = jax.random.PRNGKey(0)
    kx, kp = jax.random.split(key)
    x = jax.random.normal(kx, (B, S, D), jnp.float32)
    # key-padding mask (B, 1, S): last 3 positions of batch 1 are padding.
    mask = jnp.ones((B, 1, S), jnp.float32).at[1, 0, S - 3:].set(0.0)
    params = init_params(kp, D, DFF, H)

    try:
        fwd = jax.jit(functools.partial(encoder_layer, n_heads=H))
        out = jax.block_until_ready(fwd(x, mask, params))
    except Exception:
        # Conservative fallback if single-buffered weight specs fail to lower.
        fwd = jax.jit(functools.partial(encoder_layer, n_heads=H,
                                        single_buffer_weights=False))
        out = jax.block_until_ready(fwd(x, mask, params))

    ref = encoder_layer_ref(x, mask, params, H)
    assert out.shape == (B, S, D)
    assert bool(jnp.allclose(out, ref, atol=2e-2, rtol=2e-2)), \
        "mismatch vs mixed-precision JAX reference"

    print("KERNEL_OK")
</pallas_src>

<mosaic_0001>
module attributes {stable_mosaic.version = 11 : i64} {
  func.func @_ln_qkv_kernel(%arg0: i32, %arg1: memref<16x32xf32, #tpu.memory_space<vmem>>, %arg2: memref<1x32xf32, #tpu.memory_space<vmem>>, %arg3: memref<1x32xf32, #tpu.memory_space<vmem>>, %arg4: memref<32x96xbf16, #tpu.memory_space<vmem>>, %arg5: memref<1x96xf32, #tpu.memory_space<vmem>>, %arg6: memref<16x96xf32, #tpu.memory_space<vmem>>) attributes {dimension_semantics = [#tpu.dimension_semantics<parallel>], iteration_bounds = array<i64: 1>, scalar_prefetch = 0 : i64, scratch_operands = 0 : i64, tpu.core_type = #tpu.core_type<tc>, window_params = [{transform_indices = @transform_0, window_bounds = array<i64: 16, 32>}, {pipeline_mode = #tpu.pipeline_mode<synchronous>, transform_indices = @transform_1, window_bounds = array<i64: 1, 32>}, {pipeline_mode = #tpu.pipeline_mode<synchronous>, transform_indices = @transform_2, window_bounds = array<i64: 1, 32>}, {pipeline_mode = #tpu.pipeline_mode<synchronous>, transform_indices = @transform_3, window_bounds = array<i64: 32, 96>}, {pipeline_mode = #tpu.pipeline_mode<synchronous>, transform_indices = @transform_4, window_bounds = array<i64: 1, 96>}, {transform_indices = @transform_5, window_bounds = array<i64: 16, 96>}]} {
    %c0 = arith.constant 0 : index
    %c0_0 = arith.constant 0 : index
    %0 = vector.load %arg1[%c0, %c0_0] : memref<16x32xf32, #tpu.memory_space<vmem>>, vector<16x32xf32>
    %cst = arith.constant dense<0.000000e+00> : vector<16xf32>
    %1 = vector.multi_reduction <add>, %0, %cst [1] : vector<16x32xf32> to vector<16xf32>
    %2 = vector.shape_cast %1 : vector<16xf32> to vector<16x1xf32>
    %cst_1 = arith.constant 3.200000e+01 : f32
    %3 = vector.broadcast %cst_1 : f32 to vector<16x1xf32>
    %4 = arith.divf %2, %3 : vector<16x1xf32>
    %5 = vector.broadcast %4 : vector<16x1xf32> to vector<16x32xf32>
    %6 = arith.subf %0, %5 : vector<16x32xf32>
    %7 = arith.mulf %6, %6 : vector<16x32xf32>
    %cst_2 = arith.constant dense<0.000000e+00> : vector<16xf32>
    %8 = vector.multi_reduction <add>, %7, %cst_2 [1] : vector<16x32xf32> to vector<16xf32>
    %9 = vector.shape_cast %8 : vector<16xf32> to vector<16x1xf32>
    %cst_3 = arith.constant 0.0322580636 : f32
    %10 = vector.broadcast %cst_3 : f32 to vector<16x1xf32>
    %11 = arith.mulf %9, %10 : vector<16x1xf32>
    %12 = math.sqrt %11 : vector<16x1xf32>
    %cst_4 = arith.constant 9.99999997E-7 : f32
    %13 = vector.broadcast %cst_4 : f32 to vector<16x1xf32>
    %14 = arith.addf %12, %13 : vector<16x1xf32>
    %15 = tpu.reciprocal %14 : vector<16x1xf32> -> vector<16x1xf32>
    %c0_5 = arith.constant 0 : index
    %c0_6 = arith.constant 0 : index
    %16 = vector.load %arg2[%c0_5, %c0_6] : memref<1x32xf32, #tpu.memory_space<vmem>>, vector<1x32xf32>
    %17 = vector.broadcast %15 : vector<16x1xf32> to vector<16x32xf32>
    %18 = arith.mulf %6, %17 : vector<16x32xf32>
    %19 = vector.broadcast %16 : vector<1x32xf32> to vector<16x32xf32>
    %20 = arith.mulf %19, %18 : vector<16x32xf32>
    %c0_7 = arith.constant 0 : index
    %c0_8 = arith.constant 0 : index
    %21 = vector.load %arg3[%c0_7, %c0_8] : memref<1x32xf32, #tpu.memory_space<vmem>>, vector<1x32xf32>
    %22 = vector.broadcast %21 : vector<1x32xf32> to vector<16x32xf32>
    %23 = arith.addf %20, %22 : vector<16x32xf32>
    %24 = arith.truncf %23 : vector<16x32xf32> to vector<16x32xbf16>
    %c0_9 = arith.constant 0 : index
    %c0_10 = arith.constant 0 : index
    %25 = vector.load %arg4[%c0_9, %c0_10] : memref<32x96xbf16, #tpu.memory_space<vmem>>, vector<32x96xbf16>
    %cst_11 = arith.constant dense<0.000000e+00> : vector<16x96xf32>
    %26 = tpu.matmul %24, %25, %cst_11 {dimension_numbers = #tpu.dot_dimension_numbers<[1], [0], [0], [1], [0, 0, 1, 1], [], []>} : vector<16x32xbf16>, vector<32x96xbf16>, vector<16x96xf32> -> vector<16x96xf32>
    %c0_12 = arith.constant 0 : index
    %c0_13 = arith.constant 0 : index
    %27 = vector.load %arg5[%c0_12, %c0_13] : memref<1x96xf32, #tpu.memory_space<vmem>>, vector<1x96xf32>
    %28 = vector.broadcast %27 : vector<1x96xf32> to vector<16x96xf32>
    %29 = arith.addf %26, %28 : vector<16x96xf32>
    %c0_14 = arith.constant 0 : index
    %c0_15 = arith.constant 0 : index
    %30 = vector.load %arg6[%c0_14, %c0_15] : memref<16x96xf32, #tpu.memory_space<vmem>>, vector<16x96xf32>
    tpu.vector_store %arg6[%c0_14, %c0_15], %29 {strides = array<i32>} : memref<16x96xf32, #tpu.memory_space<vmem>>, vector<16x96xf32>,
    return
  }
  func.func @transform_0(%arg0: i32) -> (i32, i32) {
    %c0_i32 = arith.constant 0 : i32
    %c0_i32_0 = arith.constant 0 : i32
    return %arg0, %c0_i32 : i32, i32
  }
  func.func @transform_1(%arg0: i32) -> (i32, i32) {
    %c0_i32 = arith.constant 0 : i32
    %c0_i32_0 = arith.constant 0 : i32
    %c0_i32_1 = arith.constant 0 : i32
    return %c0_i32, %c0_i32_0 : i32, i32
  }
  func.func @transform_2(%arg0: i32) -> (i32, i32) {
    %c0_i32 = arith.constant 0 : i32
    %c0_i32_0 = arith.constant 0 : i32
    %c0_i32_1 = arith.constant 0 : i32
    return %c0_i32, %c0_i32_0 : i32, i32
  }
  func.func @transform_3(%arg0: i32) -> (i32, i32) {
    %c0_i32 = arith.constant 0 : i32
    %c0_i32_0 = arith.constant 0 : i32
    %c0_i32_1 = arith.constant 0 : i32
    return %c0_i32, %c0_i32_0 : i32, i32
  }
  func.func @transform_4(%arg0: i32) -> (i32, i32) {
    %c0_i32 = arith.constant 0 : i32
    %c0_i32_0 = arith.constant 0 : i32
    %c0_i32_1 = arith.constant 0 : i32
    return %c0_i32, %c0_i32_0 : i32, i32
  }
  func.func @transform_5(%arg0: i32) -> (i32, i32) {
    %c0_i32 = arith.constant 0 : i32
    %c0_i32_0 = arith.constant 0 : i32
    return %arg0, %c0_i32 : i32, i32
  }
}

module attributes {stable_mosaic.version = 11 : i64} {
  func.func @_attn_kernel(%arg0: i32, %arg1: memref<8x96xf32, #tpu.memory_space<vmem>>, %arg2: memref<1x1x8xf32, #tpu.memory_space<vmem>>, %arg3: memref<8x32xf32, #tpu.memory_space<vmem>>) attributes {dimension_semantics = [#tpu.dimension_semantics<parallel>], iteration_bounds = array<i64: 2>, scalar_prefetch = 0 : i64, scratch_operands = 0 : i64, tpu.core_type = #tpu.core_type<tc>, window_params = [{transform_indices = @transform_0, window_bounds = array<i64: 8, 96>}, {transform_indices = @transform_1, window_bounds = array<i64: 1, 1, 8>}, {transform_indices = @transform_2, window_bounds = array<i64: 8, 32>}]} {
    %c0 = arith.constant 0 : index
    %c0_0 = arith.constant 0 : index
    %0 = vector.load %arg1[%c0, %c0_0] : memref<8x96xf32, #tpu.memory_space<vmem>>, vector<8x96xf32>
    %c0_1 = arith.constant 0 : index
    %c0_2 = arith.constant 0 : index
    %c0_3 = arith.constant 0 : index
    %1 = vector.load %arg2[%c0_1, %c0_2, %c0_3] : memref<1x1x8xf32, #tpu.memory_space<vmem>>, vector<1x1x8xf32>
    %2 = vector.shape_cast %1 : vector<1x1x8xf32> to vector<8xf32>
    %3 = vector.extract_strided_slice %0 {offsets = [0, 0], sizes = [8, 8], strides = [1, 1]} : vector<8x96xf32> to vector<8x8xf32>
    %4 = arith.truncf %3 : vector<8x8xf32> to vector<8x8xbf16>
    %5 = vector.extract_strided_slice %0 {offsets = [0, 8], sizes = [8, 8], strides = [1, 1]} : vector<8x96xf32> to vector<8x8xf32>
    %6 = arith.truncf %5 : vector<8x8xf32> to vector<8x8xbf16>
    %7 = vector.extract_strided_slice %0 {offsets = [0, 16], sizes = [8, 8], strides = [1, 1]} : vector<8x96xf32> to vector<8x8xf32>
    %8 = arith.truncf %7 : vector<8x8xf32> to vector<8x8xbf16>
    %cst = arith.constant dense<0.000000e+00> : vector<8x8xf32>
    %9 = tpu.matmul %4, %6, %cst {dimension_numbers = #tpu.dot_dimension_numbers<[1], [1], [0], [0], [0, 0, 1, 0], [], []>} : vector<8x8xbf16>, vector<8x8xbf16>, vector<8x8xf32> -> vector<8x8xf32>
    %cst_4 = arith.constant 0.353553385 : f32
    %10 = vector.broadcast %cst_4 : f32 to vector<8x8xf32>
    %11 = arith.mulf %9, %10 : vector<8x8xf32>
    %12 = vector.shape_cast %2 : vector<8xf32> to vector<1x8xf32>
    %cst_5 = arith.constant 0.000000e+00 : f32
    %13 = vector.broadcast %cst_5 : f32 to vector<1x8xf32>
    %14 = arith.cmpf oeq, %12, %13 : vector<1x8xf32>
    %cst_6 = arith.constant -1.000000e+09 : f32
    %15 = vector.shape_cast %14 : vector<1x8xi1> to vector<1x8xi1>
    %16 = vector.broadcast %15 : vector<1x8xi1> to vector<8x8xi1>
    %17 = vector.broadcast %cst_6 : f32 to vector<8x8xf32>
    %18 = arith.select %16, %17, %11 : vector<8x8xi1>, vector<8x8xf32>
    %cst_7 = arith.constant dense<0xFF800000> : vector<8xf32>
    %19 = vector.multi_reduction <maximumf>, %18, %cst_7 [1] : vector<8x8xf32> to vector<8xf32>
    %20 = vector.shape_cast %19 : vector<8xf32> to vector<8x1xf32>
    %21 = vector.broadcast %20 : vector<8x1xf32> to vector<8x8xf32>
    %22 = arith.subf %18, %21 : vector<8x8xf32>
    %23 = math.exp %22 : vector<8x8xf32>
    %cst_8 = arith.constant dense<0.000000e+00> : vector<8xf32>
    %24 = vector.multi_reduction <add>, %23, %cst_8 [1] : vector<8x8xf32> to vector<8xf32>
    %25 = vector.shape_cast %24 : vector<8xf32> to vector<8x1xf32>
    %26 = tpu.reciprocal %25 {approx = true} : vector<8x1xf32> -> vector<8x1xf32>
    %27 = vector.broadcast %26 : vector<8x1xf32> to vector<8x8xf32>
    %28 = arith.mulf %23, %27 : vector<8x8xf32>
    %29 = arith.truncf %28 : vector<8x8xf32> to vector<8x8xbf16>
    %cst_9 = arith.constant dense<0.000000e+00> : vector<8x8xf32>
    %30 = tpu.matmul %29, %8, %cst_9 {dimension_numbers = #tpu.dot_dimension_numbers<[1], [0], [0], [1], [0, 0, 1, 1], [], []>} : vector<8x8xbf16>, vector<8x8xbf16>, vector<8x8xf32> -> vector<8x8xf32>
    %c0_10 = arith.constant 0 : index
    %c0_11 = arith.constant 0 : index
    %31 = vector.load %arg3[%c0_10, %c0_11] : memref<8x32xf32, #tpu.memory_space<vmem>>, vector<8x8xf32>
    tpu.vector_store %arg3[%c0_10, %c0_11], %30 {strides = array<i32>} : memref<8x32xf32, #tpu.memory_space<vmem>>, vector<8x8xf32>,
    %32 = vector.extract_strided_slice %0 {offsets = [0, 24], sizes = [8, 8], strides = [1, 1]} : vector<8x96xf32> to vector<8x8xf32>
    %33 = arith.truncf %32 : vector<8x8xf32> to vector<8x8xbf16>
    %34 = vector.extract_strided_slice %0 {offsets = [0, 32], sizes = [8, 8], strides = [1, 1]} : vector<8x96xf32> to vector<8x8xf32>
    %35 = arith.truncf %34 : vector<8x8xf32> to vector<8x8xbf16>
    %36 = vector.extract_strided_slice %0 {offsets = [0, 40], sizes = [8, 8], strides = [1, 1]} : vector<8x96xf32> to vector<8x8xf32>
    %37 = arith.truncf %36 : vector<8x8xf32> to vector<8x8xbf16>
    %cst_12 = arith.constant dense<0.000000e+00> : vector<8x8xf32>
    %38 = tpu.matmul %33, %35, %cst_12 {dimension_numbers = #tpu.dot_dimension_numbers<[1], [1], [0], [0], [0, 0, 1, 0], [], []>} : vector<8x8xbf16>, vector<8x8xbf16>, vector<8x8xf32> -> vector<8x8xf32>
    %cst_13 = arith.constant 0.353553385 : f32
    %39 = vector.broadcast %cst_13 : f32 to vector<8x8xf32>
    %40 = arith.mulf %38, %39 : vector<8x8xf32>
    %41 = vector.shape_cast %2 : vector<8xf32> to vector<1x8xf32>
    %cst_14 = arith.constant 0.000000e+00 : f32
    %42 = vector.broadcast %cst_14 : f32 to vector<1x8xf32>
    %43 = arith.cmpf oeq, %41, %42 : vector<1x8xf32>
    %cst_15 = arith.constant -1.000000e+09 : f32
    %44 = vector.shape_cast %43 : vector<1x8xi1> to vector<1x8xi1>
    %45 = vector.broadcast %44 : vector<1x8xi1> to vector<8x8xi1>
    %46 = vector.broadcast %cst_15 : f32 to vector<8x8xf32>
    %47 = arith.select %45, %46, %40 : vector<8x8xi1>, vector<8x8xf32>
    %cst_16 = arith.constant dense<0xFF800000> : vector<8xf32>
    %48 = vector.multi_reduction <maximumf>, %47, %cst_16 [1] : vector<8x8xf32> to vector<8xf32>
    %49 = vector.shape_cast %48 : vector<8xf32> to vector<8x1xf32>
    %50 = vector.broadcast %49 : vector<8x1xf32> to vector<8x8xf32>
    %51 = arith.subf %47, %50 : vector<8x8xf32>
    %52 = math.exp %51 : vector<8x8xf32>
    %cst_17 = arith.constant dense<0.000000e+00> : vector<8xf32>
    %53 = vector.multi_reduction <add>, %52, %cst_17 [1] : vector<8x8xf32> to vector<8xf32>
    %54 = vector.shape_cast %53 : vector<8xf32> to vector<8x1xf32>
    %55 = tpu.reciprocal %54 {approx = true} : vector<8x1xf32> -> vector<8x1xf32>
    %56 = vector.broadcast %55 : vector<8x1xf32> to vector<8x8xf32>
    %57 = arith.mulf %52, %56 : vector<8x8xf32>
    %58 = arith.truncf %57 : vector<8x8xf32> to vector<8x8xbf16>
    %cst_18 = arith.constant dense<0.000000e+00> : vector<8x8xf32>
    %59 = tpu.matmul %58, %37, %cst_18 {dimension_numbers = #tpu.dot_dimension_numbers<[1], [0], [0], [1], [0, 0, 1, 1], [], []>} : vector<8x8xbf16>, vector<8x8xbf16>, vector<8x8xf32> -> vector<8x8xf32>
    %c0_19 = arith.constant 0 : index
    %c8 = arith.constant 8 : index
    %60 = vector.load %arg3[%c0_19, %c8] : memref<8x32xf32, #tpu.memory_space<vmem>>, vector<8x8xf32>
    tpu.vector_store %arg3[%c0_19, %c8], %59 {strides = array<i32>} : memref<8x32xf32, #tpu.memory_space<vmem>>, vector<8x8xf32>,
    %61 = vector.extract_strided_slice %0 {offsets = [0, 48], sizes = [8, 8], strides = [1, 1]} : vector<8x96xf32> to vector<8x8xf32>
    %62 = arith.truncf %61 : vector<8x8xf32> to vector<8x8xbf16>
    %63 = vector.extract_strided_slice %0 {offsets = [0, 56], sizes = [8, 8], strides = [1, 1]} : vector<8x96xf32> to vector<8x8xf32>
    %64 = arith.truncf %63 : vector<8x8xf32> to vector<8x8xbf16>
    %65 = vector.extract_strided_slice %0 {offsets = [0, 64], sizes = [8, 8], strides = [1, 1]} : vector<8x96xf32> to vector<8x8xf32>
    %66 = arith.truncf %65 : vector<8x8xf32> to vector<8x8xbf16>
    %cst_20 = arith.constant dense<0.000000e+00> : vector<8x8xf32>
    %67 = tpu.matmul %62, %64, %cst_20 {dimension_numbers = #tpu.dot_dimension_numbers<[1], [1], [0], [0], [0, 0, 1, 0], [], []>} : vector<8x8xbf16>, vector<8x8xbf16>, vector<8x8xf32> -> vector<8x8xf32>
    %cst_21 = arith.constant 0.353553385 : f32
    %68 = vector.broadcast %cst_21 : f32 to vector<8x8xf32>
    %69 = arith.mulf %67, %68 : vector<8x8xf32>
    %70 = vector.shape_cast %2 : vector<8xf32> to vector<1x8xf32>
    %cst_22 = arith.constant 0.000000e+00 : f32
    %71 = vector.broadcast %cst_22 : f32 to vector<1x8xf32>
    %72 = arith.cmpf oeq, %70, %71 : vector<1x8xf32>
    %cst_23 = arith.constant -1.000000e+09 : f32
    %73 = vector.shape_cast %72 : vector<1x8xi1> to vector<1x8xi1>
    %74 = vector.broadcast %73 : vector<1x8xi1> to vector<8x8xi1>
    %75 = vector.broadcast %cst_23 : f32 to vector<8x8xf32>
    %76 = arith.select %74, %75, %69 : vector<8x8xi1>, vector<8x8xf32>
    %cst_24 = arith.constant dense<0xFF800000> : vector<8xf32>
    %77 = vector.multi_reduction <maximumf>, %76, %cst_24 [1] : vector<8x8xf32> to vector<8xf32>
    %78 = vector.shape_cast %77 : vector<8xf32> to vector<8x1xf32>
    %79 = vector.broadcast %78 : vector<8x1xf32> to vector<8x8xf32>
    %80 = arith.subf %76, %79 : vector<8x8xf32>
    %81 = math.exp %80 : vector<8x8xf32>
    %cst_25 = arith.constant dense<0.000000e+00> : vector<8xf32>
    %82 = vector.multi_reduction <add>, %81, %cst_25 [1] : vector<8x8xf32> to vector<8xf32>
    %83 = vector.shape_cast %82 : vector<8xf32> to vector<8x1xf32>
    %84 = tpu.reciprocal %83 {approx = true} : vector<8x1xf32> -> vector<8x1xf32>
    %85 = vector.broadcast %84 : vector<8x1xf32> to vector<8x8xf32>
    %86 = arith.mulf %81, %85 : vector<8x8xf32>
    %87 = arith.truncf %86 : vector<8x8xf32> to vector<8x8xbf16>
    %cst_26 = arith.constant dense<0.000000e+00> : vector<8x8xf32>
    %88 = tpu.matmul %87, %66, %cst_26 {dimension_numbers = #tpu.dot_dimension_numbers<[1], [0], [0], [1], [0, 0, 1, 1], [], []>} : vector<8x8xbf16>, vector<8x8xbf16>, vector<8x8xf32> -> vector<8x8xf32>
    %c0_27 = arith.constant 0 : index
    %c16 = arith.constant 16 : index
    %89 = vector.load %arg3[%c0_27, %c16] : memref<8x32xf32, #tpu.memory_space<vmem>>, vector<8x8xf32>
    tpu.vector_store %arg3[%c0_27, %c16], %88 {strides = array<i32>} : memref<8x32xf32, #tpu.memory_space<vmem>>, vector<8x8xf32>,
    %90 = vector.extract_strided_slice %0 {offsets = [0, 72], sizes = [8, 8], strides = [1, 1]} : vector<8x96xf32> to vector<8x8xf32>
    %91 = arith.truncf %90 : vector<8x8xf32> to vector<8x8xbf16>
    %92 = vector.extract_strided_slice %0 {offsets = [0, 80], sizes = [8, 8], strides = [1, 1]} : vector<8x96xf32> to vector<8x8xf32>
    %93 = arith.truncf %92 : vector<8x8xf32> to vector<8x8xbf16>
    %94 = vector.extract_strided_slice %0 {offsets = [0, 88], sizes = [8, 8], strides = [1, 1]} : vector<8x96xf32> to vector<8x8xf32>
    %95 = arith.truncf %94 : vector<8x8xf32> to vector<8x8xbf16>
    %cst_28 = arith.constant dense<0.000000e+00> : vector<8x8xf32>
    %96 = tpu.matmul %91, %93, %cst_28 {dimension_numbers = #tpu.dot_dimension_numbers<[1], [1], [0], [0], [0, 0, 1, 0], [], []>} : vector<8x8xbf16>, vector<8x8xbf16>, vector<8x8xf32> -> vector<8x8xf32>
    %cst_29 = arith.constant 0.353553385 : f32
    %97 = vector.broadcast %cst_29 : f32 to vector<8x8xf32>
    %98 = arith.mulf %96, %97 : vector<8x8xf32>
    %99 = vector.shape_cast %2 : vector<8xf32> to vector<1x8xf32>
    %cst_30 = arith.constant 0.000000e+00 : f32
    %100 = vector.broadcast %cst_30 : f32 to vector<1x8xf32>
    %101 = arith.cmpf oeq, %99, %100 : vector<1x8xf32>
    %cst_31 = arith.constant -1.000000e+09 : f32
    %102 = vector.shape_cast %101 : vector<1x8xi1> to vector<1x8xi1>
    %103 = vector.broadcast %102 : vector<1x8xi1> to vector<8x8xi1>
    %104 = vector.broadcast %cst_31 : f32 to vector<8x8xf32>
    %105 = arith.select %103, %104, %98 : vector<8x8xi1>, vector<8x8xf32>
    %cst_32 = arith.constant dense<0xFF800000> : vector<8xf32>
    %106 = vector.multi_reduction <maximumf>, %105, %cst_32 [1] : vector<8x8xf32> to vector<8xf32>
    %107 = vector.shape_cast %106 : vector<8xf32> to vector<8x1xf32>
    %108 = vector.broadcast %107 : vector<8x1xf32> to vector<8x8xf32>
    %109 = arith.subf %105, %108 : vector<8x8xf32>
    %110 = math.exp %109 : vector<8x8xf32>
    %cst_33 = arith.constant dense<0.000000e+00> : vector<8xf32>
    %111 = vector.multi_reduction <add>, %110, %cst_33 [1] : vector<8x8xf32> to vector<8xf32>
    %112 = vector.shape_cast %111 : vector<8xf32> to vector<8x1xf32>
    %113 = tpu.reciprocal %112 {approx = true} : vector<8x1xf32> -> vector<8x1xf32>
    %114 = vector.broadcast %113 : vector<8x1xf32> to vector<8x8xf32>
    %115 = arith.mulf %110, %114 : vector<8x8xf32>
    %116 = arith.truncf %115 : vector<8x8xf32> to vector<8x8xbf16>
    %cst_34 = arith.constant dense<0.000000e+00> : vector<8x8xf32>
    %117 = tpu.matmul %116, %95, %cst_34 {dimension_numbers = #tpu.dot_dimension_numbers<[1], [0], [0], [1], [0, 0, 1, 1], [], []>} : vector<8x8xbf16>, vector<8x8xbf16>, vector<8x8xf32> -> vector<8x8xf32>
    %c0_35 = arith.constant 0 : index
    %c24 = arith.constant 24 : index
    %118 = vector.load %arg3[%c0_35, %c24] : memref<8x32xf32, #tpu.memory_space<vmem>>, vector<8x8xf32>
    tpu.vector_store %arg3[%c0_35, %c24], %117 {strides = array<i32>} : memref<8x32xf32, #tpu.memory_space<vmem>>, vector<8x8xf32>,
    return
  }
  func.func @transform_0(%arg0: i32) -> (i32, i32) {
    %c0_i32 = arith.constant 0 : i32
    %c0_i32_0 = arith.constant 0 : i32
    return %arg0, %c0_i32 : i32, i32
  }
  func.func @transform_1(%arg0: i32) -> (i32, i32, i32) {
    %c0_i32 = arith.constant 0 : i32
    %c0_i32_0 = arith.constant 0 : i32
    %c0_i32_1 = arith.constant 0 : i32
    return %arg0, %c0_i32, %c0_i32_0 : i32, i32, i32
  }
  func.func @transform_2(%arg0: i32) -> (i32, i32) {
    %c0_i32 = arith.constant 0 : i32
    %c0_i32_0 = arith.constant 0 : i32
    return %arg0, %c0_i32 : i32, i32
  }
}

module attributes {stable_mosaic.version = 11 : i64} {
  func.func @_out_ffn_kernel(%arg0: i32, %arg1: memref<16x32xf32, #tpu.memory_space<vmem>>, %arg2: memref<16x32xf32, #tpu.memory_space<vmem>>, %arg3: memref<32x32xbf16, #tpu.memory_space<vmem>>, %arg4: memref<1x32xf32, #tpu.memory_space<vmem>>, %arg5: memref<1x32xf32, #tpu.memory_space<vmem>>, %arg6: memref<1x32xf32, #tpu.memory_space<vmem>>, %arg7: memref<32x64xbf16, #tpu.memory_space<vmem>>, %arg8: memref<1x64xf32, #tpu.memory_space<vmem>>, %arg9: memref<64x32xbf16, #tpu.memory_space<vmem>>, %arg10: memref<1x32xf32, #tpu.memory_space<vmem>>, %arg11: memref<16x32xf32, #tpu.memory_space<vmem>>) attributes {dimension_semantics = [#tpu.dimension_semantics<parallel>], iteration_bounds = array<i64: 1>, scalar_prefetch = 0 : i64, scratch_operands = 0 : i64, tpu.core_type = #tpu.core_type<tc>, window_params = [{transform_indices = @transform_0, window_bounds = array<i64: 16, 32>}, {transform_indices = @transform_1, window_bounds = array<i64: 16, 32>}, {pipeline_mode = #tpu.pipeline_mode<synchronous>, transform_indices = @transform_2, window_bounds = array<i64: 32, 32>}, {pipeline_mode = #tpu.pipeline_mode<synchronous>, transform_indices = @transform_3, window_bounds = array<i64: 1, 32>}, {pipeline_mode = #tpu.pipeline_mode<synchronous>, transform_indices = @transform_4, window_bounds = array<i64: 1, 32>}, {pipeline_mode = #tpu.pipeline_mode<synchronous>, transform_indices = @transform_5, window_bounds = array<i64: 1, 32>}, {pipeline_mode = #tpu.pipeline_mode<synchronous>, transform_indices = @transform_6, window_bounds = array<i64: 32, 64>}, {pipeline_mode = #tpu.pipeline_mode<synchronous>, transform_indices = @transform_7, window_bounds = array<i64: 1, 64>}, {pipeline_mode = #tpu.pipeline_mode<synchronous>, transform_indices = @transform_8, window_bounds = array<i64: 64, 32>}, {pipeline_mode = #tpu.pipeline_mode<synchronous>, transform_indices = @transform_9, window_bounds = array<i64: 1, 32>}, {transform_indices = @transform_10, window_bounds = array<i64: 16, 32>}]} {
    %c0 = arith.constant 0 : index
    %c0_0 = arith.constant 0 : index
    %0 = vector.load %arg1[%c0, %c0_0] : memref<16x32xf32, #tpu.memory_space<vmem>>, vector<16x32xf32>
    %1 = arith.truncf %0 : vector<16x32xf32> to vector<16x32xbf16>
    %c0_1 = arith.constant 0 : index
    %c0_2 = arith.constant 0 : index
    %2 = vector.load %arg3[%c0_1, %c0_2] : memref<32x32xbf16, #tpu.memory_space<vmem>>, vector<32x32xbf16>
    %cst = arith.constant dense<0.000000e+00> : vector<16x32xf32>
    %3 = tpu.matmul %1, %2, %cst {dimension_numbers = #tpu.dot_dimension_numbers<[1], [0], [0], [1], [0, 0, 1, 1], [], []>} : vector<16x32xbf16>, vector<32x32xbf16>, vector<16x32xf32> -> vector<16x32xf32>
    %c0_3 = arith.constant 0 : index
    %c0_4 = arith.constant 0 : index
    %4 = vector.load %arg4[%c0_3, %c0_4] : memref<1x32xf32, #tpu.memory_space<vmem>>, vector<1x32xf32>
    %5 = vector.broadcast %4 : vector<1x32xf32> to vector<16x32xf32>
    %6 = arith.addf %3, %5 : vector<16x32xf32>
    %c0_5 = arith.constant 0 : index
    %c0_6 = arith.constant 0 : index
    %7 = vector.load %arg2[%c0_5, %c0_6] : memref<16x32xf32, #tpu.memory_space<vmem>>, vector<16x32xf32>
    %8 = arith.addf %6, %7 : vector<16x32xf32>
    %cst_7 = arith.constant dense<0.000000e+00> : vector<16xf32>
    %9 = vector.multi_reduction <add>, %8, %cst_7 [1] : vector<16x32xf32> to vector<16xf32>
    %10 = vector.shape_cast %9 : vector<16xf32> to vector<16x1xf32>
    %cst_8 = arith.constant 3.200000e+01 : f32
    %11 = vector.broadcast %cst_8 : f32 to vector<16x1xf32>
    %12 = arith.divf %10, %11 : vector<16x1xf32>
    %13 = vector.broadcast %12 : vector<16x1xf32> to vector<16x32xf32>
    %14 = arith.subf %8, %13 : vector<16x32xf32>
    %15 = arith.mulf %14, %14 : vector<16x32xf32>
    %cst_9 = arith.constant dense<0.000000e+00> : vector<16xf32>
    %16 = vector.multi_reduction <add>, %15, %cst_9 [1] : vector<16x32xf32> to vector<16xf32>
    %17 = vector.shape_cast %16 : vector<16xf32> to vector<16x1xf32>
    %cst_10 = arith.constant 0.0322580636 : f32
    %18 = vector.broadcast %cst_10 : f32 to vector<16x1xf32>
    %19 = arith.mulf %17, %18 : vector<16x1xf32>
    %20 = math.sqrt %19 : vector<16x1xf32>
    %cst_11 = arith.constant 9.99999997E-7 : f32
    %21 = vector.broadcast %cst_11 : f32 to vector<16x1xf32>
    %22 = arith.addf %20, %21 : vector<16x1xf32>
    %23 = tpu.reciprocal %22 : vector<16x1xf32> -> vector<16x1xf32>
    %c0_12 = arith.constant 0 : index
    %c0_13 = arith.constant 0 : index
    %24 = vector.load %arg5[%c0_12, %c0_13] : memref<1x32xf32, #tpu.memory_space<vmem>>, vector<1x32xf32>
    %25 = vector.broadcast %23 : vector<16x1xf32> to vector<16x32xf32>
    %26 = arith.mulf %14, %25 : vector<16x32xf32>
    %27 = vector.broadcast %24 : vector<1x32xf32> to vector<16x32xf32>
    %28 = arith.mulf %27, %26 : vector<16x32xf32>
    %c0_14 = arith.constant 0 : index
    %c0_15 = arith.constant 0 : index
    %29 = vector.load %arg6[%c0_14, %c0_15] : memref<1x32xf32, #tpu.memory_space<vmem>>, vector<1x32xf32>
    %30 = vector.broadcast %29 : vector<1x32xf32> to vector<16x32xf32>
    %31 = arith.addf %28, %30 : vector<16x32xf32>
    %32 = arith.truncf %31 : vector<16x32xf32> to vector<16x32xbf16>
    %c0_16 = arith.constant 0 : index
    %c0_17 = arith.constant 0 : index
    %33 = vector.load %arg7[%c0_16, %c0_17] : memref<32x64xbf16, #tpu.memory_space<vmem>>, vector<32x64xbf16>
    %cst_18 = arith.constant dense<0.000000e+00> : vector<16x64xf32>
    %34 = tpu.matmul %32, %33, %cst_18 {dimension_numbers = #tpu.dot_dimension_numbers<[1], [0], [0], [1], [0, 0, 1, 1], [], []>} : vector<16x32xbf16>, vector<32x64xbf16>, vector<16x64xf32> -> vector<16x64xf32>
    %c0_19 = arith.constant 0 : index
    %c0_20 = arith.constant 0 : index
    %35 = vector.load %arg8[%c0_19, %c0_20] : memref<1x64xf32, #tpu.memory_space<vmem>>, vector<1x64xf32>
    %36 = vector.broadcast %35 : vector<1x64xf32> to vector<16x64xf32>
    %37 = arith.addf %34, %36 : vector<16x64xf32>
    %cst_21 = arith.constant 0.000000e+00 : f32
    %38 = vector.broadcast %cst_21 : f32 to vector<16x64xf32>
    %39 = arith.maximumf %37, %38 : vector<16x64xf32>
    %40 = arith.truncf %39 : vector<16x64xf32> to vector<16x64xbf16>
    %c0_22 = arith.constant 0 : index
    %c0_23 = arith.constant 0 : index
    %41 = vector.load %arg9[%c0_22, %c0_23] : memref<64x32xbf16, #tpu.memory_space<vmem>>, vector<64x32xbf16>
    %cst_24 = arith.constant dense<0.000000e+00> : vector<16x32xf32>
    %42 = tpu.matmul %40, %41, %cst_24 {dimension_numbers = #tpu.dot_dimension_numbers<[1], [0], [0], [1], [0, 0, 1, 1], [], []>} : vector<16x64xbf16>, vector<64x32xbf16>, vector<16x32xf32> -> vector<16x32xf32>
    %c0_25 = arith.constant 0 : index
    %c0_26 = arith.constant 0 : index
    %43 = vector.load %arg10[%c0_25, %c0_26] : memref<1x32xf32, #tpu.memory_space<vmem>>, vector<1x32xf32>
    %44 = vector.broadcast %43 : vector<1x32xf32> to vector<16x32xf32>
    %45 = arith.addf %42, %44 : vector<16x32xf32>
    %46 = arith.addf %45, %8 : vector<16x32xf32>
    %c0_27 = arith.constant 0 : index
    %c0_28 = arith.constant 0 : index
    %47 = vector.load %arg11[%c0_27, %c0_28] : memref<16x32xf32, #tpu.memory_space<vmem>>, vector<16x32xf32>
    tpu.vector_store %arg11[%c0_27, %c0_28], %46 {strides = array<i32>} : memref<16x32xf32, #tpu.memory_space<vmem>>, vector<16x32xf32>,
    return
  }
  func.func @transform_0(%arg0: i32) -> (i32, i32) {
    %c0_i32 = arith.constant 0 : i32
    %c0_i32_0 = arith.constant 0 : i32
    return %arg0, %c0_i32 : i32, i32
  }
  func.func @transform_1(%arg0: i32) -> (i32, i32) {
    %c0_i32 = arith.constant 0 : i32
    %c0_i32_0 = arith.constant 0 : i32
    return %arg0, %c0_i32 : i32, i32
  }
  func.func @transform_2(%arg0: i32) -> (i32, i32) {
    %c0_i32 = arith.constant 0 : i32
    %c0_i32_0 = arith.constant 0 : i32
    %c0_i32_1 = arith.constant 0 : i32
    return %c0_i32, %c0_i32_0 : i32, i32
  }
  func.func @transform_3(%arg0: i32) -> (i32, i32) {
    %c0_i32 = arith.constant 0 : i32
    %c0_i32_0 = arith.constant 0 : i32
    %c0_i32_1 = arith.constant 0 : i32
    return %c0_i32, %c0_i32_0 : i32, i32
  }
  func.func @transform_4(%arg0: i32) -> (i32, i32) {
    %c0_i32 = arith.constant 0 : i32
    %c0_i32_0 = arith.constant 0 : i32
    %c0_i32_1 = arith.constant 0 : i32
    return %c0_i32, %c0_i32_0 : i32, i32
  }
  func.func @transform_5(%arg0: i32) -> (i32, i32) {
    %c0_i32 = arith.constant 0 : i32
    %c0_i32_0 = arith.constant 0 : i32
    %c0_i32_1 = arith.constant 0 : i32
    return %c0_i32, %c0_i32_0 : i32, i32
  }
  func.func @transform_6(%arg0: i32) -> (i32, i32) {
    %c0_i32 = arith.constant 0 : i32
    %c0_i32_0 = arith.constant 0 : i32
    %c0_i32_1 = arith.constant 0 : i32
    return %c0_i32, %c0_i32_0 : i32, i32
  }
  func.func @transform_7(%arg0: i32) -> (i32, i32) {
    %c0_i32 = arith.constant 0 : i32
    %c0_i32_0 = arith.constant 0 : i32
    %c0_i32_1 = arith.constant 0 : i32
    return %c0_i32, %c0_i32_0 : i32, i32
  }
  func.func @transform_8(%arg0: i32) -> (i32, i32) {
    %c0_i32 = arith.constant 0 : i32
    %c0_i32_0 = arith.constant 0 : i32
    %c0_i32_1 = arith.constant 0 : i32
    return %c0_i32, %c0_i32_0 : i32, i32
  }
  func.func @transform_9(%arg0: i32) -> (i32, i32) {
    %c0_i32 = arith.constant 0 : i32
    %c0_i32_0 = arith.constant 0 : i32
    %c0_i32_1 = arith.constant 0 : i32
    return %c0_i32, %c0_i32_0 : i32, i32
  }
  func.func @transform_10(%arg0: i32) -> (i32, i32) {
    %c0_i32 = arith.constant 0 : i32
    %c0_i32_0 = arith.constant 0 : i32
    return %arg0, %c0_i32 : i32, i32
  }
}

module attributes {stable_mosaic.version = 11 : i64} {
  func.func @_ln_qkv_kernel(%arg0: i32, %arg1: memref<16x32xf32, #tpu.memory_space<vmem>>, %arg2: memref<1x32xf32, #tpu.memory_space<vmem>>, %arg3: memref<1x32xf32, #tpu.memory_space<vmem>>, %arg4: memref<32x96xbf16, #tpu.memory_space<vmem>>, %arg5: memref<1x96xf32, #tpu.memory_space<vmem>>, %arg6: memref<16x96xf32, #tpu.memory_space<vmem>>) attributes {dimension_semantics = [#tpu.dimension_semantics<parallel>], iteration_bounds = array<i64: 1>, scalar_prefetch = 0 : i64, scratch_operands = 0 : i64, tpu.core_type = #tpu.core_type<tc>, window_params = [{transform_indices = @transform_0, window_bounds = array<i64: 16, 32>}, {pipeline_mode = #tpu.pipeline_mode<synchronous>, transform_indices = @transform_1, window_bounds = array<i64: 1, 32>}, {pipeline_mode = #tpu.pipeline_mode<synchronous>, transform_indices = @transform_2, window_bounds = array<i64: 1, 32>}, {pipeline_mode = #tpu.pipeline_mode<synchronous>, transform_indices = @transform_3, window_bounds = array<i64: 32, 96>}, {pipeline_mode = #tpu.pipeline_mode<synchronous>, transform_indices = @transform_4, window_bounds = array<i64: 1, 96>}, {transform_indices = @transform_5, window_bounds = array<i64: 16, 96>}]} {
    %c0 = arith.constant 0 : index
    %c0_0 = arith.constant 0 : index
    %0 = vector.load %arg1[%c0, %c0_0] : memref<16x32xf32, #tpu.memory_space<vmem>>, vector<16x32xf32>
    %cst = arith.constant dense<0.000000e+00> : vector<16xf32>
    %1 = vector.multi_reduction <add>, %0, %cst [1] : vector<16x32xf32> to vector<16xf32>
    %2 = vector.shape_cast %1 : vector<16xf32> to vector<16x1xf32>
    %cst_1 = arith.constant 3.200000e+01 : f32
    %3 = vector.broadcast %cst_1 : f32 to vector<16x1xf32>
    %4 = arith.divf %2, %3 : vector<16x1xf32>
    %5 = vector.broadcast %4 : vector<16x1xf32> to vector<16x32xf32>
    %6 = arith.subf %0, %5 : vector<16x32xf32>
    %7 = arith.mulf %6, %6 : vector<16x32xf32>
    %cst_2 = arith.constant dense<0.000000e+00> : vector<16xf32>
    %8 = vector.multi_reduction <add>, %7, %cst_2 [1] : vector<16x32xf32> to vector<16xf32>
    %9 = vector.shape_cast %8 : vector<16xf32> to vector<16x1xf32>
    %cst_3 = arith.constant 0.0322580636 : f32
    %10 = vector.broadcast %cst_3 : f32 to vector<16x1xf32>
    %11 = arith.mulf %9, %10 : vector<16x1xf32>
    %12 = math.sqrt %11 : vector<16x1xf32>
    %cst_4 = arith.constant 9.99999997E-7 : f32
    %13 = vector.broadcast %cst_4 : f32 to vector<16x1xf32>
    %14 = arith.addf %12, %13 : vector<16x1xf32>
    %15 = tpu.reciprocal %14 : vector<16x1xf32> -> vector<16x1xf32>
    %c0_5 = arith.constant 0 : index
    %c0_6 = arith.constant 0 : index
    %16 = vector.load %arg2[%c0_5, %c0_6] : memref<1x32xf32, #tpu.memory_space<vmem>>, vector<1x32xf32>
    %17 = vector.broadcast %15 : vector<16x1xf32> to vector<16x32xf32>
    %18 = arith.mulf %6, %17 : vector<16x32xf32>
    %19 = vector.broadcast %16 : vector<1x32xf32> to vector<16x32xf32>
    %20 = arith.mulf %19, %18 : vector<16x32xf32>
    %c0_7 = arith.constant 0 : index
    %c0_8 = arith.constant 0 : index
    %21 = vector.load %arg3[%c0_7, %c0_8] : memref<1x32xf32, #tpu.memory_space<vmem>>, vector<1x32xf32>
    %22 = vector.broadcast %21 : vector<1x32xf32> to vector<16x32xf32>
    %23 = arith.addf %20, %22 : vector<16x32xf32>
    %24 = arith.truncf %23 : vector<16x32xf32> to vector<16x32xbf16>
    %c0_9 = arith.constant 0 : index
    %c0_10 = arith.constant 0 : index
    %25 = vector.load %arg4[%c0_9, %c0_10] : memref<32x96xbf16, #tpu.memory_space<vmem>>, vector<32x96xbf16>
    %cst_11 = arith.constant dense<0.000000e+00> : vector<16x96xf32>
    %26 = tpu.matmul %24, %25, %cst_11 {dimension_numbers = #tpu.dot_dimension_numbers<[1], [0], [0], [1], [0, 0, 1, 1], [], []>} : vector<16x32xbf16>, vector<32x96xbf16>, vector<16x96xf32> -> vector<16x96xf32>
    %c0_12 = arith.constant 0 : index
    %c0_13 = arith.constant 0 : index
    %27 = vector.load %arg5[%c0_12, %c0_13] : memref<1x96xf32, #tpu.memory_space<vmem>>, vector<1x96xf32>
    %28 = vector.broadcast %27 : vector<1x96xf32> to vector<16x96xf32>
    %29 = arith.addf %26, %28 : vector<16x96xf32>
    %c0_14 = arith.constant 0 : index
    %c0_15 = arith.constant 0 : index
    %30 = vector.load %arg6[%c0_14, %c0_15] : memref<16x96xf32, #tpu.memory_space<vmem>>, vector<16x96xf32>
    tpu.vector_store %arg6[%c0_14, %c0_15], %29 {strides = array<i32>} : memref<16x96xf32, #tpu.memory_space<vmem>>, vector<16x96xf32>,
    return
  }
  func.func @transform_0(%arg0: i32) -> (i32, i32) {
    %c0_i32 = arith.constant 0 : i32
    %c0_i32_0 = arith.constant 0 : i32
    return %arg0, %c0_i32 : i32, i32
  }
  func.func @transform_1(%arg0: i32) -> (i32, i32) {
    %c0_i32 = arith.constant 0 : i32
    %c0_i32_0 = arith.constant 0 : i32
    %c0_i32_1 = arith.constant 0 : i32
    return %c0_i32, %c0_i32_0 : i32, i32
  }
  func.func @transform_2(%arg0: i32) -> (i32, i32) {
    %c0_i32 = arith.constant 0 : i32
    %c0_i32_0 = arith.constant 0 : i32
    %c0_i32_1 = arith.constant 0 : i32
    return %c0_i32, %c0_i32_0 : i32, i32
  }
  func.func @transform_3(%arg0: i32) -> (i32, i32) {
    %c0_i32 = arith.constant 0 : i32
    %c0_i32_0 = arith.constant 0 : i32
    %c0_i32_1 = arith.constant 0 : i32
    return %c0_i32, %c0_i32_0 : i32, i32
  }
  func.func @transform_4(%arg0: i32) -> (i32, i32) {
    %c0_i32 = arith.constant 0 : i32
    %c0_i32_0 = arith.constant 0 : i32
    %c0_i32_1 = arith.constant 0 : i32
    return %c0_i32, %c0_i32_0 : i32, i32
  }
  func.func @transform_5(%arg0: i32) -> (i32, i32) {
    %c0_i32 = arith.constant 0 : i32
    %c0_i32_0 = arith.constant 0 : i32
    return %arg0, %c0_i32 : i32, i32
  }
}

module attributes {stable_mosaic.version = 11 : i64} {
  func.func @_attn_kernel(%arg0: i32, %arg1: memref<8x96xf32, #tpu.memory_space<vmem>>, %arg2: memref<1x1x8xf32, #tpu.memory_space<vmem>>, %arg3: memref<8x32xf32, #tpu.memory_space<vmem>>) attributes {dimension_semantics = [#tpu.dimension_semantics<parallel>], iteration_bounds = array<i64: 2>, scalar_prefetch = 0 : i64, scratch_operands = 0 : i64, tpu.core_type = #tpu.core_type<tc>, window_params = [{transform_indices = @transform_0, window_bounds = array<i64: 8, 96>}, {transform_indices = @transform_1, window_bounds = array<i64: 1, 1, 8>}, {transform_indices = @transform_2, window_bounds = array<i64: 8, 32>}]} {
    %c0 = arith.constant 0 : index
    %c0_0 = arith.constant 0 : index
    %0 = vector.load %arg1[%c0, %c0_0] : memref<8x96xf32, #tpu.memory_space<vmem>>, vector<8x96xf32>
    %c0_1 = arith.constant 0 : index
    %c0_2 = arith.constant 0 : index
    %c0_3 = arith.constant 0 : index
    %1 = vector.load %arg2[%c0_1, %c0_2, %c0_3] : memref<1x1x8xf32, #tpu.memory_space<vmem>>, vector<1x1x8xf32>
    %2 = vector.shape_cast %1 : vector<1x1x8xf32> to vector<8xf32>
    %3 = vector.extract_strided_slice %0 {offsets = [0, 0], sizes = [8, 8], strides = [1, 1]} : vector<8x96xf32> to vector<8x8xf32>
    %4 = arith.truncf %3 : vector<8x8xf32> to vector<8x8xbf16>
    %5 = vector.extract_strided_slice %0 {offsets = [0, 8], sizes = [8, 8], strides = [1, 1]} : vector<8x96xf32> to vector<8x8xf32>
    %6 = arith.truncf %5 : vector<8x8xf32> to vector<8x8xbf16>
    %7 = vector.extract_strided_slice %0 {offsets = [0, 16], sizes = [8, 8], strides = [1, 1]} : vector<8x96xf32> to vector<8x8xf32>
    %8 = arith.truncf %7 : vector<8x8xf32> to vector<8x8xbf16>
    %cst = arith.constant dense<0.000000e+00> : vector<8x8xf32>
    %9 = tpu.matmul %4, %6, %cst {dimension_numbers = #tpu.dot_dimension_numbers<[1], [1], [0], [0], [0, 0, 1, 0], [], []>} : vector<8x8xbf16>, vector<8x8xbf16>, vector<8x8xf32> -> vector<8x8xf32>
    %cst_4 = arith.constant 0.353553385 : f32
    %10 = vector.broadcast %cst_4 : f32 to vector<8x8xf32>
    %11 = arith.mulf %9, %10 : vector<8x8xf32>
    %12 = vector.shape_cast %2 : vector<8xf32> to vector<1x8xf32>
    %cst_5 = arith.constant 0.000000e+00 : f32
    %13 = vector.broadcast %cst_5 : f32 to vector<1x8xf32>
    %14 = arith.cmpf oeq, %12, %13 : vector<1x8xf32>
    %cst_6 = arith.constant -1.000000e+09 : f32
    %15 = vector.shape_cast %14 : vector<1x8xi1> to vector<1x8xi1>
    %16 = vector.broadcast %15 : vector<1x8xi1> to vector<8x8xi1>
    %17 = vector.broadcast %cst_6 : f32 to vector<8x8xf32>
    %18 = arith.select %16, %17, %11 : vector<8x8xi1>, vector<8x8xf32>
    %cst_7 = arith.constant dense<0xFF800000> : vector<8xf32>
    %19 = vector.multi_reduction <maximumf>, %18, %cst_7 [1] : vector<8x8xf32> to vector<8xf32>
    %20 = vector.shape_cast %19 : vector<8xf32> to vector<8x1xf32>
    %21 = vector.broadcast %20 : vector<8x1xf32> to vector<8x8xf32>
    %22 = arith.subf %18, %21 : vector<8x8xf32>
    %23 = math.exp %22 : vector<8x8xf32>
    %cst_8 = arith.constant dense<0.000000e+00> : vector<8xf32>
    %24 = vector.multi_reduction <add>, %23, %cst_8 [1] : vector<8x8xf32> to vector<8xf32>
    %25 = vector.shape_cast %24 : vector<8xf32> to vector<8x1xf32>
    %26 = tpu.reciprocal %25 {approx = true} : vector<8x1xf32> -> vector<8x1xf32>
    %27 = vector.broadcast %26 : vector<8x1xf32> to vector<8x8xf32>
    %28 = arith.mulf %23, %27 : vector<8x8xf32>
    %29 = arith.truncf %28 : vector<8x8xf32> to vector<8x8xbf16>
    %cst_9 = arith.constant dense<0.000000e+00> : vector<8x8xf32>
    %30 = tpu.matmul %29, %8, %cst_9 {dimension_numbers = #tpu.dot_dimension_numbers<[1], [0], [0], [1], [0, 0, 1, 1], [], []>} : vector<8x8xbf16>, vector<8x8xbf16>, vector<8x8xf32> -> vector<8x8xf32>
    %c0_10 = arith.constant 0 : index
    %c0_11 = arith.constant 0 : index
    %31 = vector.load %arg3[%c0_10, %c0_11] : memref<8x32xf32, #tpu.memory_space<vmem>>, vector<8x8xf32>
    tpu.vector_store %arg3[%c0_10, %c0_11], %30 {strides = array<i32>} : memref<8x32xf32, #tpu.memory_space<vmem>>, vector<8x8xf32>,
    %32 = vector.extract_strided_slice %0 {offsets = [0, 24], sizes = [8, 8], strides = [1, 1]} : vector<8x96xf32> to vector<8x8xf32>
    %33 = arith.truncf %32 : vector<8x8xf32> to vector<8x8xbf16>
    %34 = vector.extract_strided_slice %0 {offsets = [0, 32], sizes = [8, 8], strides = [1, 1]} : vector<8x96xf32> to vector<8x8xf32>
    %35 = arith.truncf %34 : vector<8x8xf32> to vector<8x8xbf16>
    %36 = vector.extract_strided_slice %0 {offsets = [0, 40], sizes = [8, 8], strides = [1, 1]} : vector<8x96xf32> to vector<8x8xf32>
    %37 = arith.truncf %36 : vector<8x8xf32> to vector<8x8xbf16>
    %cst_12 = arith.constant dense<0.000000e+00> : vector<8x8xf32>
    %38 = tpu.matmul %33, %35, %cst_12 {dimension_numbers = #tpu.dot_dimension_numbers<[1], [1], [0], [0], [0, 0, 1, 0], [], []>} : vector<8x8xbf16>, vector<8x8xbf16>, vector<8x8xf32> -> vector<8x8xf32>
    %cst_13 = arith.constant 0.353553385 : f32
    %39 = vector.broadcast %cst_13 : f32 to vector<8x8xf32>
    %40 = arith.mulf %38, %39 : vector<8x8xf32>
    %41 = vector.shape_cast %2 : vector<8xf32> to vector<1x8xf32>
    %cst_14 = arith.constant 0.000000e+00 : f32
    %42 = vector.broadcast %cst_14 : f32 to vector<1x8xf32>
    %43 = arith.cmpf oeq, %41, %42 : vector<1x8xf32>
    %cst_15 = arith.constant -1.000000e+09 : f32
    %44 = vector.shape_cast %43 : vector<1x8xi1> to vector<1x8xi1>
    %45 = vector.broadcast %44 : vector<1x8xi1> to vector<8x8xi1>
    %46 = vector.broadcast %cst_15 : f32 to vector<8x8xf32>
    %47 = arith.select %45, %46, %40 : vector<8x8xi1>, vector<8x8xf32>
    %cst_16 = arith.constant dense<0xFF800000> : vector<8xf32>
    %48 = vector.multi_reduction <maximumf>, %47, %cst_16 [1] : vector<8x8xf32> to vector<8xf32>
    %49 = vector.shape_cast %48 : vector<8xf32> to vector<8x1xf32>
    %50 = vector.broadcast %49 : vector<8x1xf32> to vector<8x8xf32>
    %51 = arith.subf %47, %50 : vector<8x8xf32>
    %52 = math.exp %51 : vector<8x8xf32>
    %cst_17 = arith.constant dense<0.000000e+00> : vector<8xf32>
    %53 = vector.multi_reduction <add>, %52, %cst_17 [1] : vector<8x8xf32> to vector<8xf32>
    %54 = vector.shape_cast %53 : vector<8xf32> to vector<8x1xf32>
    %55 = tpu.reciprocal %54 {approx = true} : vector<8x1xf32> -> vector<8x1xf32>
    %56 = vector.broadcast %55 : vector<8x1xf32> to vector<8x8xf32>
    %57 = arith.mulf %52, %56 : vector<8x8xf32>
    %58 = arith.truncf %57 : vector<8x8xf32> to vector<8x8xbf16>
    %cst_18 = arith.constant dense<0.000000e+00> : vector<8x8xf32>
    %59 = tpu.matmul %58, %37, %cst_18 {dimension_numbers = #tpu.dot_dimension_numbers<[1], [0], [0], [1], [0, 0, 1, 1], [], []>} : vector<8x8xbf16>, vector<8x8xbf16>, vector<8x8xf32> -> vector<8x8xf32>
    %c0_19 = arith.constant 0 : index
    %c8 = arith.constant 8 : index
    %60 = vector.load %arg3[%c0_19, %c8] : memref<8x32xf32, #tpu.memory_space<vmem>>, vector<8x8xf32>
    tpu.vector_store %arg3[%c0_19, %c8], %59 {strides = array<i32>} : memref<8x32xf32, #tpu.memory_space<vmem>>, vector<8x8xf32>,
    %61 = vector.extract_strided_slice %0 {offsets = [0, 48], sizes = [8, 8], strides = [1, 1]} : vector<8x96xf32> to vector<8x8xf32>
    %62 = arith.truncf %61 : vector<8x8xf32> to vector<8x8xbf16>
    %63 = vector.extract_strided_slice %0 {offsets = [0, 56], sizes = [8, 8], strides = [1, 1]} : vector<8x96xf32> to vector<8x8xf32>
    %64 = arith.truncf %63 : vector<8x8xf32> to vector<8x8xbf16>
    %65 = vector.extract_strided_slice %0 {offsets = [0, 64], sizes = [8, 8], strides = [1, 1]} : vector<8x96xf32> to vector<8x8xf32>
    %66 = arith.truncf %65 : vector<8x8xf32> to vector<8x8xbf16>
    %cst_20 = arith.constant dense<0.000000e+00> : vector<8x8xf32>
    %67 = tpu.matmul %62, %64, %cst_20 {dimension_numbers = #tpu.dot_dimension_numbers<[1], [1], [0], [0], [0, 0, 1, 0], [], []>} : vector<8x8xbf16>, vector<8x8xbf16>, vector<8x8xf32> -> vector<8x8xf32>
    %cst_21 = arith.constant 0.353553385 : f32
    %68 = vector.broadcast %cst_21 : f32 to vector<8x8xf32>
    %69 = arith.mulf %67, %68 : vector<8x8xf32>
    %70 = vector.shape_cast %2 : vector<8xf32> to vector<1x8xf32>
    %cst_22 = arith.constant 0.000000e+00 : f32
    %71 = vector.broadcast %cst_22 : f32 to vector<1x8xf32>
    %72 = arith.cmpf oeq, %70, %71 : vector<1x8xf32>
    %cst_23 = arith.constant -1.000000e+09 : f32
    %73 = vector.shape_cast %72 : vector<1x8xi1> to vector<1x8xi1>
    %74 = vector.broadcast %73 : vector<1x8xi1> to vector<8x8xi1>
    %75 = vector.broadcast %cst_23 : f32 to vector<8x8xf32>
    %76 = arith.select %74, %75, %69 : vector<8x8xi1>, vector<8x8xf32>
    %cst_24 = arith.constant dense<0xFF800000> : vector<8xf32>
    %77 = vector.multi_reduction <maximumf>, %76, %cst_24 [1] : vector<8x8xf32> to vector<8xf32>
    %78 = vector.shape_cast %77 : vector<8xf32> to vector<8x1xf32>
    %79 = vector.broadcast %78 : vector<8x1xf32> to vector<8x8xf32>
    %80 = arith.subf %76, %79 : vector<8x8xf32>
    %81 = math.exp %80 : vector<8x8xf32>
    %cst_25 = arith.constant dense<0.000000e+00> : vector<8xf32>
    %82 = vector.multi_reduction <add>, %81, %cst_25 [1] : vector<8x8xf32> to vector<8xf32>
    %83 = vector.shape_cast %82 : vector<8xf32> to vector<8x1xf32>
    %84 = tpu.reciprocal %83 {approx = true} : vector<8x1xf32> -> vector<8x1xf32>
    %85 = vector.broadcast %84 : vector<8x1xf32> to vector<8x8xf32>
    %86 = arith.mulf %81, %85 : vector<8x8xf32>
    %87 = arith.truncf %86 : vector<8x8xf32> to vector<8x8xbf16>
    %cst_26 = arith.constant dense<0.000000e+00> : vector<8x8xf32>
    %88 = tpu.matmul %87, %66, %cst_26 {dimension_numbers = #tpu.dot_dimension_numbers<[1], [0], [0], [1], [0, 0, 1, 1], [], []>} : vector<8x8xbf16>, vector<8x8xbf16>, vector<8x8xf32> -> vector<8x8xf32>
    %c0_27 = arith.constant 0 : index
    %c16 = arith.constant 16 : index
    %89 = vector.load %arg3[%c0_27, %c16] : memref<8x32xf32, #tpu.memory_space<vmem>>, vector<8x8xf32>
    tpu.vector_store %arg3[%c0_27, %c16], %88 {strides = array<i32>} : memref<8x32xf32, #tpu.memory_space<vmem>>, vector<8x8xf32>,
    %90 = vector.extract_strided_slice %0 {offsets = [0, 72], sizes = [8, 8], strides = [1, 1]} : vector<8x96xf32> to vector<8x8xf32>
    %91 = arith.truncf %90 : vector<8x8xf32> to vector<8x8xbf16>
    %92 = vector.extract_strided_slice %0 {offsets = [0, 80], sizes = [8, 8], strides = [1, 1]} : vector<8x96xf32> to vector<8x8xf32>
    %93 = arith.truncf %92 : vector<8x8xf32> to vector<8x8xbf16>
    %94 = vector.extract_strided_slice %0 {offsets = [0, 88], sizes = [8, 8], strides = [1, 1]} : vector<8x96xf32> to vector<8x8xf32>
    %95 = arith.truncf %94 : vector<8x8xf32> to vector<8x8xbf16>
    %cst_28 = arith.constant dense<0.000000e+00> : vector<8x8xf32>
    %96 = tpu.matmul %91, %93, %cst_28 {dimension_numbers = #tpu.dot_dimension_numbers<[1], [1], [0], [0], [0, 0, 1, 0], [], []>} : vector<8x8xbf16>, vector<8x8xbf16>, vector<8x8xf32> -> vector<8x8xf32>
    %cst_29 = arith.constant 0.353553385 : f32
    %97 = vector.broadcast %cst_29 : f32 to vector<8x8xf32>
    %98 = arith.mulf %96, %97 : vector<8x8xf32>
    %99 = vector.shape_cast %2 : vector<8xf32> to vector<1x8xf32>
    %cst_30 = arith.constant 0.000000e+00 : f32
    %100 = vector.broadcast %cst_30 : f32 to vector<1x8xf32>
    %101 = arith.cmpf oeq, %99, %100 : vector<1x8xf32>
    %cst_31 = arith.constant -1.000000e+09 : f32
    %102 = vector.shape_cast %101 : vector<1x8xi1> to vector<1x8xi1>
    %103 = vector.broadcast %102 : vector<1x8xi1> to vector<8x8xi1>
    %104 = vector.broadcast %cst_31 : f32 to vector<8x8xf32>
    %105 = arith.select %103, %104, %98 : vector<8x8xi1>, vector<8x8xf32>
    %cst_32 = arith.constant dense<0xFF800000> : vector<8xf32>
    %106 = vector.multi_reduction <maximumf>, %105, %cst_32 [1] : vector<8x8xf32> to vector<8xf32>
    %107 = vector.shape_cast %106 : vector<8xf32> to vector<8x1xf32>
    %108 = vector.broadcast %107 : vector<8x1xf32> to vector<8x8xf32>
    %109 = arith.subf %105, %108 : vector<8x8xf32>
    %110 = math.exp %109 : vector<8x8xf32>
    %cst_33 = arith.constant dense<0.000000e+00> : vector<8xf32>
    %111 = vector.multi_reduction <add>, %110, %cst_33 [1] : vector<8x8xf32> to vector<8xf32>
    %112 = vector.shape_cast %111 : vector<8xf32> to vector<8x1xf32>
    %113 = tpu.reciprocal %112 {approx = true} : vector<8x1xf32> -> vector<8x1xf32>
    %114 = vector.broadcast %113 : vector<8x1xf32> to vector<8x8xf32>
    %115 = arith.mulf %110, %114 : vector<8x8xf32>
    %116 = arith.truncf %115 : vector<8x8xf32> to vector<8x8xbf16>
    %cst_34 = arith.constant dense<0.000000e+00> : vector<8x8xf32>
    %117 = tpu.matmul %116, %95, %cst_34 {dimension_numbers = #tpu.dot_dimension_numbers<[1], [0], [0], [1], [0, 0, 1, 1], [], []>} : vector<8x8xbf16>, vector<8x8xbf16>, vector<8x8xf32> -> vector<8x8xf32>
    %c0_35 = arith.constant 0 : index
    %c24 = arith.constant 24 : index
    %118 = vector.load %arg3[%c0_35, %c24] : memref<8x32xf32, #tpu.memory_space<vmem>>, vector<8x8xf32>
    tpu.vector_store %arg3[%c0_35, %c24], %117 {strides = array<i32>} : memref<8x32xf32, #tpu.memory_space<vmem>>, vector<8x8xf32>,
    return
  }
  func.func @transform_0(%arg0: i32) -> (i32, i32) {
    %c0_i32 = arith.constant 0 : i32
    %c0_i32_0 = arith.constant 0 : i32
    return %arg0, %c0_i32 : i32, i32
  }
  func.func @transform_1(%arg0: i32) -> (i32, i32, i32) {
    %c0_i32 = arith.constant 0 : i32
    %c0_i32_0 = arith.constant 0 : i32
    %c0_i32_1 = arith.constant 0 : i32
    return %arg0, %c0_i32, %c0_i32_0 : i32, i32, i32
  }
  func.func @transform_2(%arg0: i32) -> (i32, i32) {
    %c0_i32 = arith.constant 0 : i32
    %c0_i32_0 = arith.constant 0 : i32
    return %arg0, %c0_i32 : i32, i32
  }
}

module attributes {stable_mosaic.version = 11 : i64} {
  func.func @_out_ffn_kernel(%arg0: i32, %arg1: memref<16x32xf32, #tpu.memory_space<vmem>>, %arg2: memref<16x32xf32, #tpu.memory_space<vmem>>, %arg3: memref<32x32xbf16, #tpu.memory_space<vmem>>, %arg4: memref<1x32xf32, #tpu.memory_space<vmem>>, %arg5: memref<1x32xf32, #tpu.memory_space<vmem>>, %arg6: memref<1x32xf32, #tpu.memory_space<vmem>>, %arg7: memref<32x64xbf16, #tpu.memory_space<vmem>>, %arg8: memref<1x64xf32, #tpu.memory_space<vmem>>, %arg9: memref<64x32xbf16, #tpu.memory_space<vmem>>, %arg10: memref<1x32xf32, #tpu.memory_space<vmem>>, %arg11: memref<16x32xf32, #tpu.memory_space<vmem>>) attributes {dimension_semantics = [#tpu.dimension_semantics<parallel>], iteration_bounds = array<i64: 1>, scalar_prefetch = 0 : i64, scratch_operands = 0 : i64, tpu.core_type = #tpu.core_type<tc>, window_params = [{transform_indices = @transform_0, window_bounds = array<i64: 16, 32>}, {transform_indices = @transform_1, window_bounds = array<i64: 16, 32>}, {pipeline_mode = #tpu.pipeline_mode<synchronous>, transform_indices = @transform_2, window_bounds = array<i64: 32, 32>}, {pipeline_mode = #tpu.pipeline_mode<synchronous>, transform_indices = @transform_3, window_bounds = array<i64: 1, 32>}, {pipeline_mode = #tpu.pipeline_mode<synchronous>, transform_indices = @transform_4, window_bounds = array<i64: 1, 32>}, {pipeline_mode = #tpu.pipeline_mode<synchronous>, transform_indices = @transform_5, window_bounds = array<i64: 1, 32>}, {pipeline_mode = #tpu.pipeline_mode<synchronous>, transform_indices = @transform_6, window_bounds = array<i64: 32, 64>}, {pipeline_mode = #tpu.pipeline_mode<synchronous>, transform_indices = @transform_7, window_bounds = array<i64: 1, 64>}, {pipeline_mode = #tpu.pipeline_mode<synchronous>, transform_indices = @transform_8, window_bounds = array<i64: 64, 32>}, {pipeline_mode = #tpu.pipeline_mode<synchronous>, transform_indices = @transform_9, window_bounds = array<i64: 1, 32>}, {transform_indices = @transform_10, window_bounds = array<i64: 16, 32>}]} {
    %c0 = arith.constant 0 : index
    %c0_0 = arith.constant 0 : index
    %0 = vector.load %arg1[%c0, %c0_0] : memref<16x32xf32, #tpu.memory_space<vmem>>, vector<16x32xf32>
    %1 = arith.truncf %0 : vector<16x32xf32> to vector<16x32xbf16>
    %c0_1 = arith.constant 0 : index
    %c0_2 = arith.constant 0 : index
    %2 = vector.load %arg3[%c0_1, %c0_2] : memref<32x32xbf16, #tpu.memory_space<vmem>>, vector<32x32xbf16>
    %cst = arith.constant dense<0.000000e+00> : vector<16x32xf32>
    %3 = tpu.matmul %1, %2, %cst {dimension_numbers = #tpu.dot_dimension_numbers<[1], [0], [0], [1], [0, 0, 1, 1], [], []>} : vector<16x32xbf16>, vector<32x32xbf16>, vector<16x32xf32> -> vector<16x32xf32>
    %c0_3 = arith.constant 0 : index
    %c0_4 = arith.constant 0 : index
    %4 = vector.load %arg4[%c0_3, %c0_4] : memref<1x32xf32, #tpu.memory_space<vmem>>, vector<1x32xf32>
    %5 = vector.broadcast %4 : vector<1x32xf32> to vector<16x32xf32>
    %6 = arith.addf %3, %5 : vector<16x32xf32>
    %c0_5 = arith.constant 0 : index
    %c0_6 = arith.constant 0 : index
    %7 = vector.load %arg2[%c0_5, %c0_6] : memref<16x32xf32, #tpu.memory_space<vmem>>, vector<16x32xf32>
    %8 = arith.addf %6, %7 : vector<16x32xf32>
    %cst_7 = arith.constant dense<0.000000e+00> : vector<16xf32>
    %9 = vector.multi_reduction <add>, %8, %cst_7 [1] : vector<16x32xf32> to vector<16xf32>
    %10 = vector.shape_cast %9 : vector<16xf32> to vector<16x1xf32>
    %cst_8 = arith.constant 3.200000e+01 : f32
    %11 = vector.broadcast %cst_8 : f32 to vector<16x1xf32>
    %12 = arith.divf %10, %11 : vector<16x1xf32>
    %13 = vector.broadcast %12 : vector<16x1xf32> to vector<16x32xf32>
    %14 = arith.subf %8, %13 : vector<16x32xf32>
    %15 = arith.mulf %14, %14 : vector<16x32xf32>
    %cst_9 = arith.constant dense<0.000000e+00> : vector<16xf32>
    %16 = vector.multi_reduction <add>, %15, %cst_9 [1] : vector<16x32xf32> to vector<16xf32>
    %17 = vector.shape_cast %16 : vector<16xf32> to vector<16x1xf32>
    %cst_10 = arith.constant 0.0322580636 : f32
    %18 = vector.broadcast %cst_10 : f32 to vector<16x1xf32>
    %19 = arith.mulf %17, %18 : vector<16x1xf32>
    %20 = math.sqrt %19 : vector<16x1xf32>
    %cst_11 = arith.constant 9.99999997E-7 : f32
    %21 = vector.broadcast %cst_11 : f32 to vector<16x1xf32>
    %22 = arith.addf %20, %21 : vector<16x1xf32>
    %23 = tpu.reciprocal %22 : vector<16x1xf32> -> vector<16x1xf32>
    %c0_12 = arith.constant 0 : index
    %c0_13 = arith.constant 0 : index
    %24 = vector.load %arg5[%c0_12, %c0_13] : memref<1x32xf32, #tpu.memory_space<vmem>>, vector<1x32xf32>
    %25 = vector.broadcast %23 : vector<16x1xf32> to vector<16x32xf32>
    %26 = arith.mulf %14, %25 : vector<16x32xf32>
    %27 = vector.broadcast %24 : vector<1x32xf32> to vector<16x32xf32>
    %28 = arith.mulf %27, %26 : vector<16x32xf32>
    %c0_14 = arith.constant 0 : index
    %c0_15 = arith.constant 0 : index
    %29 = vector.load %arg6[%c0_14, %c0_15] : memref<1x32xf32, #tpu.memory_space<vmem>>, vector<1x32xf32>
    %30 = vector.broadcast %29 : vector<1x32xf32> to vector<16x32xf32>
    %31 = arith.addf %28, %30 : vector<16x32xf32>
    %32 = arith.truncf %31 : vector<16x32xf32> to vector<16x32xbf16>
    %c0_16 = arith.constant 0 : index
    %c0_17 = arith.constant 0 : index
    %33 = vector.load %arg7[%c0_16, %c0_17] : memref<32x64xbf16, #tpu.memory_space<vmem>>, vector<32x64xbf16>
    %cst_18 = arith.constant dense<0.000000e+00> : vector<16x64xf32>
    %34 = tpu.matmul %32, %33, %cst_18 {dimension_numbers = #tpu.dot_dimension_numbers<[1], [0], [0], [1], [0, 0, 1, 1], [], []>} : vector<16x32xbf16>, vector<32x64xbf16>, vector<16x64xf32> -> vector<16x64xf32>
    %c0_19 = arith.constant 0 : index
    %c0_20 = arith.constant 0 : index
    %35 = vector.load %arg8[%c0_19, %c0_20] : memref<1x64xf32, #tpu.memory_space<vmem>>, vector<1x64xf32>
    %36 = vector.broadcast %35 : vector<1x64xf32> to vector<16x64xf32>
    %37 = arith.addf %34, %36 : vector<16x64xf32>
    %cst_21 = arith.constant 0.000000e+00 : f32
    %38 = vector.broadcast %cst_21 : f32 to vector<16x64xf32>
    %39 = arith.maximumf %37, %38 : vector<16x64xf32>
    %40 = arith.truncf %39 : vector<16x64xf32> to vector<16x64xbf16>
    %c0_22 = arith.constant 0 : index
    %c0_23 = arith.constant 0 : index
    %41 = vector.load %arg9[%c0_22, %c0_23] : memref<64x32xbf16, #tpu.memory_space<vmem>>, vector<64x32xbf16>
    %cst_24 = arith.constant dense<0.000000e+00> : vector<16x32xf32>
    %42 = tpu.matmul %40, %41, %cst_24 {dimension_numbers = #tpu.dot_dimension_numbers<[1], [0], [0], [1], [0, 0, 1, 1], [], []>} : vector<16x64xbf16>, vector<64x32xbf16>, vector<16x32xf32> -> vector<16x32xf32>
    %c0_25 = arith.constant 0 : index
    %c0_26 = arith.constant 0 : index
    %43 = vector.load %arg10[%c0_25, %c0_26] : memref<1x32xf32, #tpu.memory_space<vmem>>, vector<1x32xf32>
    %44 = vector.broadcast %43 : vector<1x32xf32> to vector<16x32xf32>
    %45 = arith.addf %42, %44 : vector<16x32xf32>
    %46 = arith.addf %45, %8 : vector<16x32xf32>
    %c0_27 = arith.constant 0 : index
    %c0_28 = arith.constant 0 : index
    %47 = vector.load %arg11[%c0_27, %c0_28] : memref<16x32xf32, #tpu.memory_space<vmem>>, vector<16x32xf32>
    tpu.vector_store %arg11[%c0_27, %c0_28], %46 {strides = array<i32>} : memref<16x32xf32, #tpu.memory_space<vmem>>, vector<16x32xf32>,
    return
  }
  func.func @transform_0(%arg0: i32) -> (i32, i32) {
    %c0_i32 = arith.constant 0 : i32
    %c0_i32_0 = arith.constant 0 : i32
    return %arg0, %c0_i32 : i32, i32
  }
  func.func @transform_1(%arg0: i32) -> (i32, i32) {
    %c0_i32 = arith.constant 0 : i32
    %c0_i32_0 = arith.constant 0 : i32
    return %arg0, %c0_i32 : i32, i32
  }
  func.func @transform_2(%arg0: i32) -> (i32, i32) {
    %c0_i32 = arith.constant 0 : i32
    %c0_i32_0 = arith.constant 0 : i32
    %c0_i32_1 = arith.constant 0 : i32
    return %c0_i32, %c0_i32_0 : i32, i32
  }
  func.func @transform_3(%arg0: i32) -> (i32, i32) {
    %c0_i32 = arith.constant 0 : i32
    %c0_i32_0 = arith.constant 0 : i32
    %c0_i32_1 = arith.constant 0 : i32
    return %c0_i32, %c0_i32_0 : i32, i32
  }
  func.func @transform_4(%arg0: i32) -> (i32, i32) {
    %c0_i32 = arith.constant 0 : i32
    %c0_i32_0 = arith.constant 0 : i32
    %c0_i32_1 = arith.constant 0 : i32
    return %c0_i32, %c0_i32_0 : i32, i32
  }
  func.func @transform_5(%arg0: i32) -> (i32, i32) {
    %c0_i32 = arith.constant 0 : i32
    %c0_i32_0 = arith.constant 0 : i32
    %c0_i32_1 = arith.constant 0 : i32
    return %c0_i32, %c0_i32_0 : i32, i32
  }
  func.func @transform_6(%arg0: i32) -> (i32, i32) {
    %c0_i32 = arith.constant 0 : i32
    %c0_i32_0 = arith.constant 0 : i32
    %c0_i32_1 = arith.constant 0 : i32
    return %c0_i32, %c0_i32_0 : i32, i32
  }
  func.func @transform_7(%arg0: i32) -> (i32, i32) {
    %c0_i32 = arith.constant 0 : i32
    %c0_i32_0 = arith.constant 0 : i32
    %c0_i32_1 = arith.constant 0 : i32
    return %c0_i32, %c0_i32_0 : i32, i32
  }
  func.func @transform_8(%arg0: i32) -> (i32, i32) {
    %c0_i32 = arith.constant 0 : i32
    %c0_i32_0 = arith.constant 0 : i32
    %c0_i32_1 = arith.constant 0 : i32
    return %c0_i32, %c0_i32_0 : i32, i32
  }
  func.func @transform_9(%arg0: i32) -> (i32, i32) {
    %c0_i32 = arith.constant 0 : i32
    %c0_i32_0 = arith.constant 0 : i32
    %c0_i32_1 = arith.constant 0 : i32
    return %c0_i32, %c0_i32_0 : i32, i32
  }
  func.func @transform_10(%arg0: i32) -> (i32, i32) {
    %c0_i32 = arith.constant 0 : i32
    %c0_i32_0 = arith.constant 0 : i32
    return %arg0, %c0_i32 : i32, i32
  }
}

</mosaic_0001>

<llo_original>
// kernel: encoder_layer.5
$region0: #{encoder_layer.5}
  #allocation0 [shape = 'u32[]', space=smem, size = 0x4, offset = 0x4, fixed_abs, tag = 'smem constant byte address 0x4 - core index']
  #allocation1 [shape = 'u32[144,128]{1,0:T(1,128)}', space=vmem, size = 0x12000, scoped, tag = 'internal scratch']
  %s0 = inlined_call_operand.vmem [shape: f32[16,32], index: 0, kind: input, shape index: {}]
  %s1 = inlined_call_operand.vmem [shape: f32[16,32], index: 1, kind: input, shape index: {}]
  %s2 = inlined_call_operand.vmem [shape: bf16[32,32], index: 2, kind: input, shape index: {}]
  %s3 = inlined_call_operand.vmem [shape: f32[1,32], index: 3, kind: input, shape index: {}]
  %s4 = inlined_call_operand.vmem [shape: f32[1,32], index: 4, kind: input, shape index: {}]
  %s5 = inlined_call_operand.vmem [shape: f32[1,32], index: 5, kind: input, shape index: {}]
  %s6 = inlined_call_operand.vmem [shape: bf16[32,64], index: 6, kind: input, shape index: {}]
  %s7 = inlined_call_operand.vmem [shape: f32[1,64], index: 7, kind: input, shape index: {}]
  %s8 = inlined_call_operand.vmem [shape: bf16[64,32], index: 8, kind: input, shape index: {}]
  %s9 = inlined_call_operand.vmem [shape: f32[1,32], index: 9, kind: input, shape index: {}]
  %s10 = inlined_call_operand.hbm [shape: f32[16,32], index: 10, kind: output, shape index: {}]
  %s11 = sld [smem:[#allocation0]]
  $region50: #{encoder_layer.5} parent=0
    _
  %s13 = ssub.s32 1, %s11
  %s14 = scalar_select 0, %s13, %s11
  $region1: #{encoder_layer.5} parent=0
    #allocation2 [shape = 'u8[8192]{0}', space=vmem, size = 0x2000, scoped, tag = 'output window, operand 0, single buffered']
    #allocation3 [shape = 's32[1]{0}', space=sflag, size = 0x4, scoped, tag = 'scoped memory for encoder_layer.5']
    %15 = vsyncpa [#allocation3], 0
    // Predicated region
    $region2: #{encoder_layer.5} parent=1 // pred_check
      _
    $region3: #{encoder_layer.5} parent=1 // pred_check_branch
      %17 = sbr.rel (0) target = $region5
    $region4: #{encoder_layer.5} parent=1 // pred_region
      _
    $region5: #{encoder_layer.5} parent=1 // pred_fallthru
      _
    // Predicated region
    $region6: #{encoder_layer.5} parent=1 // pred_check
      _
    $region7: #{encoder_layer.5} parent=1 // pred_check_branch
      %19 = sbr.rel (0) target = $region9
    $region8: #{encoder_layer.5} parent=1 // pred_region
      _
    $region9: #{encoder_layer.5} parent=1 // pred_fallthru
      _
    // Predicated region
    $region10: #{encoder_layer.5} parent=1 // pred_check
      _
    $region11: #{encoder_layer.5} parent=1 // pred_check_branch
      %21 = sbr.rel (0) target = $region13
    $region12: #{encoder_layer.5} parent=1 // pred_region
      _
    $region13: #{encoder_layer.5} parent=1 // pred_fallthru
      _
    // Predicated region
    $region14: #{encoder_layer.5} parent=1 // pred_check
      _
    $region15: #{encoder_layer.5} parent=1 // pred_check_branch
      %23 = sbr.rel (0) target = $region17
    $region16: #{encoder_layer.5} parent=1 // pred_region
      _
    $region17: #{encoder_layer.5} parent=1 // pred_fallthru
      _
    // Predicated region
    $region18: #{encoder_layer.5} parent=1 // pred_check
      _
    $region19: #{encoder_layer.5} parent=1 // pred_check_branch
      %25 = sbr.rel (0) target = $region21
    $region20: #{encoder_layer.5} parent=1 // pred_region
      _
    $region21: #{encoder_layer.5} parent=1 // pred_fallthru
      _
    // Predicated region
    $region22: #{encoder_layer.5} parent=1 // pred_check
      _
    $region23: #{encoder_layer.5} parent=1 // pred_check_branch
      %27 = sbr.rel (0) target = $region25
    $region24: #{encoder_layer.5} parent=1 // pred_region
      _
    $region25: #{encoder_layer.5} parent=1 // pred_fallthru
      _
    // Predicated region
    $region26: #{encoder_layer.5} parent=1 // pred_check
      _
    $region27: #{encoder_layer.5} parent=1 // pred_check_branch
      %29 = sbr.rel (0) target = $region29
    $region28: #{encoder_layer.5} parent=1 // pred_region
      _
    $region29: #{encoder_layer.5} parent=1 // pred_fallthru
      _
    // Predicated region
    $region30: #{encoder_layer.5} parent=1 // pred_check
      _
    $region31: #{encoder_layer.5} parent=1 // pred_check_branch
      %31 = sbr.rel (0) target = $region33
    $region32: #{encoder_layer.5} parent=1 // pred_region
      _
    $region33: #{encoder_layer.5} parent=1 // pred_fallthru
      _
    // Predicated region
    $region34: #{encoder_layer.5} parent=1 // pred_check
      _
    $region35: #{encoder_layer.5} parent=1 // pred_check_branch
      %33 = sbr.rel (0) target = $region37
    $region36: #{encoder_layer.5} parent=1 // pred_region
      _
    $region37: #{encoder_layer.5} parent=1 // pred_fallthru
      _
    // Predicated region
    $region38: #{encoder_layer.5} parent=1 // pred_check
      _
    $region39: #{encoder_layer.5} parent=1 // pred_check_branch
      %35 = sbr.rel (0) target = $region41
    $region40: #{encoder_layer.5} parent=1 // pred_region
      _
    $region41: #{encoder_layer.5} parent=1 // pred_fallthru
      _
    %v37 = vld [vmem:[%s0] sm:$0xff]
    %v38 = vld [vmem:[%s0 + $0x8] sm:$0xff]
    %v39 = vpack.c.bf16 %v38, %v37
    %v40 = vld [vmem:[%s2] sm:$0xf]
    %v41 = vld [vmem:[%s2 + $0x4] sm:$0xf]
    %v42 = vld [vmem:[%s2 + $0x8] sm:$0xf]
    %v43 = vld [vmem:[%s2 + $0xc] sm:$0xf]
    %v44 = vld [vmem:[%s3] sm:$0x1]
    %v46 = vlaneseq
    %v47 = vshrl.u32 %v46, 7
    %v48 = vsub.s32 0, %v47
    %v49 = vrot.slane %v44, %v48
    %v55 = vunpack.c.l.b16 %v40
    %v56 = vunpack.c.l.b16 %v41
    %v57 = vunpack.c.l.b16 %v42
    %v58 = vunpack.c.l.b16 %v43
    %v59 = vpack.c.b16 %v56, %v55
    %v60 = vpack.c.b16 %v58, %v57
    %vm63 = vcmask 261120
    %v65 = vsel %vm63, %v39, 0
    %67 = vmatprep.subr.bf16.mxu0 0
    %68 = vmatpush1.bf16.msra.mxu0 0
    %69 = vmatprep.subr.bf16.mxu0 0
    %70 = vmatpush1.bf16.msra.mxu0 0
    %71 = vmatprep.subr.bf16.mxu0 0
    %72 = vmatpush1.bf16.msra.mxu0 0
    %73 = vmatprep.subr.bf16.mxu0 0
    %74 = vmatpush1.bf16.msra.mxu0 0
    %75 = vmatprep.subr.bf16.mxu0 0
    %76 = vmatpush1.bf16.msra.mxu0 0
    %77 = vmatprep.subr.bf16.mxu0 0
    %78 = vmatpush1.bf16.msra.mxu0 0
    %79 = vmatprep.subr.bf16.mxu0 0
    %80 = vmatpush1.bf16.msra.mxu0 %v60
    %81 = vmatprep.subr.bf16.mxu0 0
    %82 = vmatpush1.bf16.msra.mxu0 %v59
    %83 = vmatprep.subr.bf16.mxu0 0
    %84 = vmatpush2.bf16.msra.mxu0 0
    %85 = vmatprep.subr.bf16.mxu0 0
    %86 = vmatpush2.bf16.msra.mxu0 0
    %87 = vmatprep.subr.bf16.mxu0 0
    %88 = vmatpush2.bf16.msra.mxu0 0
    %89 = vmatprep.subr.bf16.mxu0 0
    %90 = vmatpush2.bf16.msra.mxu0 0
    %91 = vmatprep.subr.bf16.mxu0 0
    %92 = vmatpush2.bf16.msra.mxu0 0
    %93 = vmatprep.subr.bf16.mxu0 0
    %94 = vmatpush2.bf16.msra.mxu0 0
    %95 = vmatprep.subr.bf16.mxu0 0
    %96 = vmatpush2.bf16.msra.mxu0 0
    %97 = vmatprep.subr.bf16.mxu0 0
    %98 = vmatpush2.bf16.msra.mxu0 0
    %99 = vmatprep.mubr.bf16.mxu0 0
    %100 = vmatmul.mubr.bf16.gmra.mxu0 %v65
    %v101 = vpop.f32.mrf.mxu0
    %v102 = vadd.f32 %v49, %v101
    %v103 = vpop.f32.mrf.mxu0
    %v104 = vpop.f32.mrf.mxu0
    %v105 = vadd.f32 %v49, %v104
    %v106 = vpop.f32.mrf.mxu0
    %107 = vdwg.mxu0
    %v108 = vld [vmem:[%s1] sm:$0xff]
    %v109 = vld [vmem:[%s1 + $0x8] sm:$0xff]
    %v110 = vadd.f32 %v102, %v108
    %v111 = vadd.f32 %v105, %v109
    %v112 = vsel %vm63, %v110, 0.0
    %113 = vadd.xlane.f32.xlu0 %v112
    %v114 = vpop.xlane.xlu0 %113
    %v115 = vsel %vm63, %v111, 0.0
    %116 = vadd.xlane.f32.xlu0 %v115
    %v117 = vpop.xlane.xlu0 %116
    %v118 = vrcp.pop 32.0
    %v119 = vmul.f32 %v114, %v118
    %v120 = vmul.f32 %v117, %v118
    %v121 = vsub.f32 %v110, %v119
    %v122 = vsub.f32 %v111, %v120
    %v123 = vmul.f32 %v121, %v121
    %v124 = vmul.f32 %v122, %v122
    %v125 = vsel %vm63, %v123, 0.0
    %126 = vadd.xlane.f32.xlu0 %v125
    %v127 = vpop.xlane.xlu0 %126
    %v128 = vsel %vm63, %v124, 0.0
    %129 = vadd.xlane.f32.xlu0 %v128
    %v130 = vpop.xlane.xlu0 %129
    %v131 = vmul.f32 %v127, 0.032258064
    %v132 = vmul.f32 %v130, 0.032258064
    %v133 = vrsqrt.pop %v131
    %v134 = vmul.f32 %v131, %v133
    %vm135 = vcmp.eq.f32.partialorder %v131, inf
    %v136 = vsel %vm135, %v131, %v134
    %vm137 = vcmp.eq.f32.partialorder %v131, 0.0
    %v138 = vand.u32 %v131, 2147483648
    %v139 = vsel %vm137, %v138, %v136
    %v140 = vrsqrt.pop %v132
    %v141 = vmul.f32 %v132, %v140
    %vm142 = vcmp.eq.f32.partialorder %v132, inf
    %v143 = vsel %vm142, %v132, %v141
    %vm144 = vcmp.eq.f32.partialorder %v132, 0.0
    %v145 = vand.u32 %v132, 2147483648
    %v146 = vsel %vm144, %v145, %v143
    %v147 = vadd.f32 %v139, 1e-06
    %v148 = vadd.f32 %v146, 1e-06
    %v149 = vrcp.pop %v147
    %v150 = vrcp.pop %v148
    %v151 = vld [vmem:[%s4] sm:$0x1]
    %v152 = vmul.f32 %v121, %v149
    %v153 = vmul.f32 %v122, %v150
    %v155 = vlaneseq
    %v156 = vshrl.u32 %v155, 7
    %v157 = vsub.s32 0, %v156
    %v158 = vrot.slane %v151, %v157
    %v160 = vmul.f32 %v158, %v152
    %v161 = vmul.f32 %v158, %v153
    %v162 = vld [vmem:[%s5] sm:$0x1]
    %v164 = vlaneseq
    %v165 = vshrl.u32 %v164, 7
    %v166 = vsub.s32 0, %v165
    %v167 = vrot.slane %v162, %v166
    %v169 = vadd.f32 %v160, %v167
    %v170 = vadd.f32 %v161, %v167
    %v171 = vpack.c.bf16 %v170, %v169
    %v172 = vld [vmem:[%s6] sm:$0xf]
    %v173 = vld [vmem:[%s6 + $0x4] sm:$0xf]
    %v174 = vld [vmem:[%s6 + $0x8] sm:$0xf]
    %v175 = vld [vmem:[%s6 + $0xc] sm:$0xf]
    %v176 = vld [vmem:[%s7] sm:$0x1]
    %v178 = vlaneseq
    %v179 = vshrl.u32 %v178, 7
    %v180 = vsub.s32 0, %v179
    %v181 = vrot.slane %v176, %v180
    %v187 = vunpack.c.l.b16 %v172
    %v188 = vunpack.c.l.b16 %v173
    %v189 = vunpack.c.l.b16 %v174
    %v190 = vunpack.c.l.b16 %v175
    %v191 = vpack.c.b16 %v188, %v187
    %v192 = vpack.c.b16 %v190, %v189
    %v196 = vsel %vm63, %v171, 0
    %198 = vmatprep.subr.bf16.mxu0 0
    %199 = vmatpush1.bf16.msra.mxu0 0
    %200 = vmatprep.subr.bf16.mxu0 0
    %201 = vmatpush1.bf16.msra.mxu0 0
    %202 = vmatprep.subr.bf16.mxu0 0
    %203 = vmatpush1.bf16.msra.mxu0 0
    %204 = vmatprep.subr.bf16.mxu0 0
    %205 = vmatpush1.bf16.msra.mxu0 0
    %206 = vmatprep.subr.bf16.mxu0 0
    %207 = vmatpush1.bf16.msra.mxu0 0
    %208 = vmatprep.subr.bf16.mxu0 0
    %209 = vmatpush1.bf16.msra.mxu0 0
    %210 = vmatprep.subr.bf16.mxu0 0
    %211 = vmatpush1.bf16.msra.mxu0 %v192
    %212 = vmatprep.subr.bf16.mxu0 0
    %213 = vmatpush1.bf16.msra.mxu0 %v191
    %214 = vmatprep.subr.bf16.mxu0 0
    %215 = vmatpush2.bf16.msra.mxu0 0
    %216 = vmatprep.subr.bf16.mxu0 0
    %217 = vmatpush2.bf16.msra.mxu0 0
    %218 = vmatprep.subr.bf16.mxu0 0
    %219 = vmatpush2.bf16.msra.mxu0 0
    %220 = vmatprep.subr.bf16.mxu0 0
    %221 = vmatpush2.bf16.msra.mxu0 0
    %222 = vmatprep.subr.bf16.mxu0 0
    %223 = vmatpush2.bf16.msra.mxu0 0
    %224 = vmatprep.subr.bf16.mxu0 0
    %225 = vmatpush2.bf16.msra.mxu0 0
    %226 = vmatprep.subr.bf16.mxu0 0
    %227 = vmatpush2.bf16.msra.mxu0 0
    %228 = vmatprep.subr.bf16.mxu0 0
    %229 = vmatpush2.bf16.msra.mxu0 0
    %230 = vmatprep.mubr.bf16.mxu0 0
    %231 = vmatmul.mubr.bf16.gmra.mxu0 %v196
    %v232 = vpop.f32.mrf.mxu0
    %v233 = vadd.f32 %v181, %v232
    %v234 = vpop.f32.mrf.mxu0
    %v235 = vpop.f32.mrf.mxu0
    %v236 = vadd.f32 %v181, %v235
    %v237 = vpop.f32.mrf.mxu0
    %238 = vdwg.mxu0
    %v239 = vmax.f32 %v233, 0.0
    %v240 = vmax.f32 %v236, 0.0
    %v241 = vpack.c.bf16 %v240, %v239
    %v242 = vld [vmem:[%s8] sm:$0xf]
    %v243 = vld [vmem:[%s8 + $0x4] sm:$0xf]
    %v244 = vld [vmem:[%s8 + $0x8] sm:$0xf]
    %v245 = vld [vmem:[%s8 + $0xc] sm:$0xf]
    %v246 = vld [vmem:[%s8 + $0x10] sm:$0xf]
    %v247 = vld [vmem:[%s8 + $0x14] sm:$0xf]
    %v248 = vld [vmem:[%s8 + $0x18] sm:$0xf]
    %v249 = vld [vmem:[%s8 + $0x1c] sm:$0xf]
    %v250 = vld [vmem:[%s9] sm:$0x1]
    %v252 = vlaneseq
    %v253 = vshrl.u32 %v252, 7
    %v254 = vsub.s32 0, %v253
    %v255 = vrot.slane %v250, %v254
    %v265 = vunpack.c.l.b16 %v242
    %v266 = vunpack.c.l.b16 %v243
    %v267 = vunpack.c.l.b16 %v244
    %v268 = vunpack.c.l.b16 %v245
    %v269 = vunpack.c.l.b16 %v246
    %v270 = vunpack.c.l.b16 %v247
    %v271 = vunpack.c.l.b16 %v248
    %v272 = vunpack.c.l.b16 %v249
    %v273 = vpack.c.b16 %v266, %v265
    %v274 = vpack.c.b16 %v268, %v267
    %v275 = vpack.c.b16 %v270, %v269
    %v276 = vpack.c.b16 %v272, %v271
    %vm281 = vcmask 523264
    %v283 = vsel %vm281, %v241, 0
    %285 = vmatprep.subr.bf16.mxu0 0
    %286 = vmatpush1.bf16.msra.mxu0 0
    %287 = vmatprep.subr.bf16.mxu0 0
    %288 = vmatpush1.bf16.msra.mxu0 0
    %289 = vmatprep.subr.bf16.mxu0 0
    %290 = vmatpush1.bf16.msra.mxu0 0
    %291 = vmatprep.subr.bf16.mxu0 0
    %292 = vmatpush1.bf16.msra.mxu0 0
    %293 = vmatprep.subr.bf16.mxu0 0
    %294 = vmatpush1.bf16.msra.mxu0 %v276
    %295 = vmatprep.subr.bf16.mxu0 0
    %296 = vmatpush1.bf16.msra.mxu0 %v275
    %297 = vmatprep.subr.bf16.mxu0 0
    %298 = vmatpush1.bf16.msra.mxu0 %v274
    %299 = vmatprep.subr.bf16.mxu0 0
    %300 = vmatpush1.bf16.msra.mxu0 %v273
    %301 = vmatprep.subr.bf16.mxu0 0
    %302 = vmatpush2.bf16.msra.mxu0 0
    %303 = vmatprep.subr.bf16.mxu0 0
    %304 = vmatpush2.bf16.msra.mxu0 0
    %305 = vmatprep.subr.bf16.mxu0 0
    %306 = vmatpush2.bf16.msra.mxu0 0
    %307 = vmatprep.subr.bf16.mxu0 0
    %308 = vmatpush2.bf16.msra.mxu0 0
    %309 = vmatprep.subr.bf16.mxu0 0
    %310 = vmatpush2.bf16.msra.mxu0 0
    %311 = vmatprep.subr.bf16.mxu0 0
    %312 = vmatpush2.bf16.msra.mxu0 0
    %313 = vmatprep.subr.bf16.mxu0 0
    %314 = vmatpush2.bf16.msra.mxu0 0
    %315 = vmatprep.subr.bf16.mxu0 0
    %316 = vmatpush2.bf16.msra.mxu0 0
    %317 = vmatprep.mubr.bf16.mxu0 0
    %318 = vmatmul.mubr.bf16.gmra.mxu0 %v283
    %v319 = vpop.f32.mrf.mxu0
    %v320 = vadd.f32 %v255, %v319
    %v321 = vpop.f32.mrf.mxu0
    %v322 = vpop.f32.mrf.mxu0
    %v323 = vadd.f32 %v255, %v322
    %v324 = vpop.f32.mrf.mxu0
    %325 = vdwg.mxu0
    %v326 = vadd.f32 %v320, %v110
    %v327 = vadd.f32 %v323, %v111
    %328 = vst.msk [vmem:[#allocation2] sm:$0xff] %vm63, %v326
    %329 = vst.msk [vmem:[#allocation2 + $0x8] sm:$0xff] %vm63, %v327
    // Predicated region
    $region42: #{encoder_layer.5} parent=1 // pred_check
      _
    $region43: #{encoder_layer.5} parent=1 // pred_check_branch
      %331 = sbr.rel (0) target = $region45
    $region44: #{encoder_layer.5} parent=1 // pred_region
      %s333 = ssub.s32 256, 256
      %334 = vsyncadd [#allocation3], %s333
      %s335 = sshll.u32 [#allocation2], 4
      %s336 = int_to_ptr.vmem [resolvable:$true] %s335
      %341 = dma.vmem_to_hbm [thread:$0]  %s336, 256, %s10, [#allocation3], 128, 128, 8
    $region45: #{encoder_layer.5} parent=1 // pred_fallthru
      _
    // Predicated region
    $region46: #{encoder_layer.5} parent=1 // pred_check
      _
    $region47: #{encoder_layer.5} parent=1 // pred_check_branch
      %343 = sbr.rel (0) target = $region49
    $region48: #{encoder_layer.5} parent=1 // pred_region
      %344 = dma.done [#allocation3], 256
    $region49: #{encoder_layer.5} parent=1 // pred_fallthru
      _
    %345 = vsyncpa [#allocation3], 1

// kernel: encoder_layer.3
$region0: #{encoder_layer.3}
  #allocation0 [shape = 'u32[]', space=smem, size = 0x4, offset = 0x4, fixed_abs, tag = 'smem constant byte address 0x4 - core index']
  #allocation1 [shape = 'u32[144,128]{1,0:T(1,128)}', space=vmem, size = 0x12000, scoped, tag = 'internal scratch']
  %s0 = inlined_call_operand.hbm [shape: f32[16,32], index: 0, kind: input, shape index: {}]
  %s1 = inlined_call_operand.vmem [shape: f32[1,32], index: 1, kind: input, shape index: {}]
  %s2 = inlined_call_operand.vmem [shape: f32[1,32], index: 2, kind: input, shape index: {}]
  %s3 = inlined_call_operand.vmem [shape: bf16[32,96], index: 3, kind: input, shape index: {}]
  %s4 = inlined_call_operand.vmem [shape: f32[1,96], index: 4, kind: input, shape index: {}]
  %s5 = inlined_call_operand.vmem [shape: f32[16,96], index: 5, kind: output, shape index: {}]
  %s6 = sld [smem:[#allocation0]]
  $region34: #{encoder_layer.3} parent=0
    _
  %s8 = ssub.s32 1, %s6
  %s9 = scalar_select 0, %s8, %s6
  $region1: #{encoder_layer.3} parent=0
    #allocation2 [shape = 'u8[8192]{0}', space=vmem, size = 0x2000, scoped, tag = 'input window, operand 0, single buffered']
    #allocation3 [shape = 's32[1]{0}', space=sflag, size = 0x4, scoped, tag = 'scoped memory for encoder_layer.3']
    %10 = vsyncpa [#allocation3], 0
    // Predicated region
    $region2: #{encoder_layer.3} parent=1 // pred_check
      _
    $region3: #{encoder_layer.3} parent=1 // pred_check_branch
      %12 = sbr.rel (0) target = $region5
    $region4: #{encoder_layer.3} parent=1 // pred_region
      %s14 = ssub.s32 256, 256
      %15 = vsyncadd [#allocation3], %s14
      %s16 = sshll.u32 [#allocation2], 4
      %s17 = int_to_ptr.vmem [resolvable:$true] %s16
      %22 = dma.hbm_to_vmem [thread:$0]  %s0, 256, %s17, [#allocation3], 128, 128, 8
    $region5: #{encoder_layer.3} parent=1 // pred_fallthru
      _
    // Predicated region
    $region6: #{encoder_layer.3} parent=1 // pred_check
      _
    $region7: #{encoder_layer.3} parent=1 // pred_check_branch
      %24 = sbr.rel (0) target = $region9
    $region8: #{encoder_layer.3} parent=1 // pred_region
      _
    $region9: #{encoder_layer.3} parent=1 // pred_fallthru
      _
    // Predicated region
    $region10: #{encoder_layer.3} parent=1 // pred_check
      _
    $region11: #{encoder_layer.3} parent=1 // pred_check_branch
      %26 = sbr.rel (0) target = $region13
    $region12: #{encoder_layer.3} parent=1 // pred_region
      _
    $region13: #{encoder_layer.3} parent=1 // pred_fallthru
      _
    // Predicated region
    $region14: #{encoder_layer.3} parent=1 // pred_check
      _
    $region15: #{encoder_layer.3} parent=1 // pred_check_branch
      %28 = sbr.rel (0) target = $region17
    $region16: #{encoder_layer.3} parent=1 // pred_region
      _
    $region17: #{encoder_layer.3} parent=1 // pred_fallthru
      _
    // Predicated region
    $region18: #{encoder_layer.3} parent=1 // pred_check
      _
    $region19: #{encoder_layer.3} parent=1 // pred_check_branch
      %30 = sbr.rel (0) target = $region21
    $region20: #{encoder_layer.3} parent=1 // pred_region
      _
    $region21: #{encoder_layer.3} parent=1 // pred_fallthru
      _
    // Predicated region
    $region22: #{encoder_layer.3} parent=1 // pred_check
      _
    $region23: #{encoder_layer.3} parent=1 // pred_check_branch
      %32 = sbr.rel (0) target = $region25
    $region24: #{encoder_layer.3} parent=1 // pred_region
      %33 = dma.done [#allocation3], 256
    $region25: #{encoder_layer.3} parent=1 // pred_fallthru
      _
    %v35 = vld [vmem:[#allocation2] sm:$0xff]
    %v36 = vld [vmem:[#allocation2 + $0x8] sm:$0xff]
    %vm37 = vcmask 261120
    %v38 = vsel %vm37, %v35, 0.0
    %39 = vadd.xlane.f32.xlu0 %v38
    %v40 = vpop.xlane.xlu0 %39
    %v41 = vsel %vm37, %v36, 0.0
    %42 = vadd.xlane.f32.xlu0 %v41
    %v43 = vpop.xlane.xlu0 %42
    %v44 = vrcp.pop 32.0
    %v45 = vmul.f32 %v40, %v44
    %v46 = vmul.f32 %v43, %v44
    %v47 = vsub.f32 %v35, %v45
    %v48 = vsub.f32 %v36, %v46
    %v49 = vmul.f32 %v47, %v47
    %v50 = vmul.f32 %v48, %v48
    %v51 = vsel %vm37, %v49, 0.0
    %52 = vadd.xlane.f32.xlu0 %v51
    %v53 = vpop.xlane.xlu0 %52
    %v54 = vsel %vm37, %v50, 0.0
    %55 = vadd.xlane.f32.xlu0 %v54
    %v56 = vpop.xlane.xlu0 %55
    %v57 = vmul.f32 %v53, 0.032258064
    %v58 = vmul.f32 %v56, 0.032258064
    %v59 = vrsqrt.pop %v57
    %v60 = vmul.f32 %v57, %v59
    %vm61 = vcmp.eq.f32.partialorder %v57, inf
    %v62 = vsel %vm61, %v57, %v60
    %vm63 = vcmp.eq.f32.partialorder %v57, 0.0
    %v64 = vand.u32 %v57, 2147483648
    %v65 = vsel %vm63, %v64, %v62
    %v66 = vrsqrt.pop %v58
    %v67 = vmul.f32 %v58, %v66
    %vm68 = vcmp.eq.f32.partialorder %v58, inf
    %v69 = vsel %vm68, %v58, %v67
    %vm70 = vcmp.eq.f32.partialorder %v58, 0.0
    %v71 = vand.u32 %v58, 2147483648
    %v72 = vsel %vm70, %v71, %v69
    %v73 = vadd.f32 %v65, 1e-06
    %v74 = vadd.f32 %v72, 1e-06
    %v75 = vrcp.pop %v73
    %v76 = vrcp.pop %v74
    %v77 = vld [vmem:[%s1] sm:$0x1]
    %v78 = vmul.f32 %v47, %v75
    %v79 = vmul.f32 %v48, %v76
    %v81 = vlaneseq
    %v82 = vshrl.u32 %v81, 7
    %v83 = vsub.s32 0, %v82
    %v84 = vrot.slane %v77, %v83
    %v86 = vmul.f32 %v84, %v78
    %v87 = vmul.f32 %v84, %v79
    %v88 = vld [vmem:[%s2] sm:$0x1]
    %v90 = vlaneseq
    %v91 = vshrl.u32 %v90, 7
    %v92 = vsub.s32 0, %v91
    %v93 = vrot.slane %v88, %v92
    %v95 = vadd.f32 %v86, %v93
    %v96 = vadd.f32 %v87, %v93
    %v97 = vpack.c.bf16 %v96, %v95
    %v98 = vld [vmem:[%s3] sm:$0xf]
    %v99 = vld [vmem:[%s3 + $0x4] sm:$0xf]
    %v100 = vld [vmem:[%s3 + $0x8] sm:$0xf]
    %v101 = vld [vmem:[%s3 + $0xc] sm:$0xf]
    %v102 = vld [vmem:[%s4] sm:$0x1]
    %v104 = vlaneseq
    %v105 = vshrl.u32 %v104, 7
    %v106 = vsub.s32 0, %v105
    %v107 = vrot.slane %v102, %v106
    %v113 = vunpack.c.l.b16 %v98
    %v114 = vunpack.c.l.b16 %v99
    %v115 = vunpack.c.l.b16 %v100
    %v116 = vunpack.c.l.b16 %v101
    %v117 = vpack.c.b16 %v114, %v113
    %v118 = vpack.c.b16 %v116, %v115
    %v122 = vsel %vm37, %v97, 0
    %124 = vmatprep.subr.bf16.mxu0 0
    %125 = vmatpush1.bf16.msra.mxu0 0
    %126 = vmatprep.subr.bf16.mxu0 0
    %127 = vmatpush1.bf16.msra.mxu0 0
    %128 = vmatprep.subr.bf16.mxu0 0
    %129 = vmatpush1.bf16.msra.mxu0 0
    %130 = vmatprep.subr.bf16.mxu0 0
    %131 = vmatpush1.bf16.msra.mxu0 0
    %132 = vmatprep.subr.bf16.mxu0 0
    %133 = vmatpush1.bf16.msra.mxu0 0
    %134 = vmatprep.subr.bf16.mxu0 0
    %135 = vmatpush1.bf16.msra.mxu0 0
    %136 = vmatprep.subr.bf16.mxu0 0
    %137 = vmatpush1.bf16.msra.mxu0 %v118
    %138 = vmatprep.subr.bf16.mxu0 0
    %139 = vmatpush1.bf16.msra.mxu0 %v117
    %140 = vmatprep.subr.bf16.mxu0 0
    %141 = vmatpush2.bf16.msra.mxu0 0
    %142 = vmatprep.subr.bf16.mxu0 0
    %143 = vmatpush2.bf16.msra.mxu0 0
    %144 = vmatprep.subr.bf16.mxu0 0
    %145 = vmatpush2.bf16.msra.mxu0 0
    %146 = vmatprep.subr.bf16.mxu0 0
    %147 = vmatpush2.bf16.msra.mxu0 0
    %148 = vmatprep.subr.bf16.mxu0 0
    %149 = vmatpush2.bf16.msra.mxu0 0
    %150 = vmatprep.subr.bf16.mxu0 0
    %151 = vmatpush2.bf16.msra.mxu0 0
    %152 = vmatprep.subr.bf16.mxu0 0
    %153 = vmatpush2.bf16.msra.mxu0 0
    %154 = vmatprep.subr.bf16.mxu0 0
    %155 = vmatpush2.bf16.msra.mxu0 0
    %156 = vmatprep.mubr.bf16.mxu0 0
    %157 = vmatmul.mubr.bf16.gmra.mxu0 %v122
    %v158 = vpop.f32.mrf.mxu0
    %v159 = vadd.f32 %v107, %v158
    %v160 = vpop.f32.mrf.mxu0
    %v161 = vpop.f32.mrf.mxu0
    %v162 = vadd.f32 %v107, %v161
    %v163 = vpop.f32.mrf.mxu0
    %164 = vdwg.mxu0
    %vm165 = vcmask 785408
    %166 = vst.msk [vmem:[%s5] sm:$0xff] %vm165, %v159
    %167 = vst.msk [vmem:[%s5 + $0x8] sm:$0xff] %vm165, %v162
    // Predicated region
    $region26: #{encoder_layer.3} parent=1 // pred_check
      _
    $region27: #{encoder_layer.3} parent=1 // pred_check_branch
      %169 = sbr.rel (0) target = $region29
    $region28: #{encoder_layer.3} parent=1 // pred_region
      _
    $region29: #{encoder_layer.3} parent=1 // pred_fallthru
      _
    // Predicated region
    $region30: #{encoder_layer.3} parent=1 // pred_check
      _
    $region31: #{encoder_layer.3} parent=1 // pred_check_branch
      %171 = sbr.rel (0) target = $region33
    $region32: #{encoder_layer.3} parent=1 // pred_region
      _
    $region33: #{encoder_layer.3} parent=1 // pred_fallthru
      _
    %172 = vsyncpa [#allocation3], 1

// kernel: encoder_layer.4
$region0: #{encoder_layer.4}
  #allocation0 [shape = 'u32[]', space=smem, size = 0x4, offset = 0x4, fixed_abs, tag = 'smem constant byte address 0x4 - core index']
  #allocation1 [shape = 'u32[144,128]{1,0:T(1,128)}', space=vmem, size = 0x12000, scoped, tag = 'internal scratch']
  %s0 = inlined_call_operand.vmem [shape: f32[16,96], index: 0, kind: input, shape index: {}]
  %s1 = inlined_call_operand.vmem [shape: f32[2,1,8], index: 1, kind: input, shape index: {}]
  %s2 = inlined_call_operand.vmem [shape: f32[16,32], index: 2, kind: output, shape index: {}]
  %s3 = sld [smem:[#allocation0]]
  $region41: #{encoder_layer.4} parent=0
    _
  %s5 = ssub.s32 1, %s3
  %s6 = scalar_select 0, %s5, %s3
  loop: start=0, step=1, limit=4
  $region2: #{encoder_layer.4} parent=0 // loop_pre_header
    _
  $region3: #{encoder_layer.4} parent=0 // loop_header
    %s8 = sphi 0, %s12
    %p9 = scmp.ge.s32.totalorder %s8, 4
    %s18 = sphi 0, %s20
    %s21 = sphi 0, %s18
    %s22 = sphi 0, %s21
    %s38 = sphi 0, %s22
    %s44 = sphi 0, %s46
    %s47 = sphi 0, %s44
    %s48 = sphi 0, %s47
    %s64 = sphi 0, %s48
    %s70 = sphi 0, %s72
    %s73 = sphi 0, %s70
    %s74 = sphi 0, %s73
    %s90 = sphi 0, %s74
  $region4: #{encoder_layer.4} parent=0 // loop_header_branch
    %11 = sbr.rel (%p9) target = $region8
  $region5: #{encoder_layer.4} parent=0 // loop_body
    %s13 = ssub.s32 %s8, 1
    %s14 = ssub.s32 %s8, 2
    %s15 = sadd.s32 %s8, 1
    %s16 = ssub.s32 %s8, %s15
    %p17 = scmp.eq.s32.totalorder %s16, 0
    %s19 = sadd.s32 %s18, 1
    %s20 = scalar_select %p17, %s18, %s19
    %p23 = pneg %p17
    %p24 = scmp.eq.s32.totalorder %s8, 1
    %p25 = por %p23, %p24
    %p26 = scmp.ne.s32.totalorder %s18, %s21
    %p27 = scmp.eq.s32.totalorder %s8, 0
    %p28 = por %p26, %p27
    %p29 = scmp.ne.s32.totalorder %s18, %s21
    %p30 = scmp.eq.s32.totalorder %s13, 1
    %p31 = por %p29, %p30
    %p32 = scmp.ne.s32.totalorder %s21, %s22
    %p33 = scmp.eq.s32.totalorder %s13, 0
    %p34 = por %p32, %p33
    %p35 = scmp.ne.s32.totalorder %s21, %s22
    %p36 = scmp.eq.s32.totalorder %s14, 1
    %p37 = por %p35, %p36
    %p39 = scmp.ne.s32.totalorder %s22, %s38
    %p40 = scmp.eq.s32.totalorder %s14, 0
    %p41 = por %p39, %p40
    %s42 = ssub.s32 %s8, %s15
    %p43 = scmp.eq.s32.totalorder %s42, 0
    %s45 = sadd.s32 %s44, 1
    %s46 = scalar_select %p43, %s44, %s45
    %p49 = pneg %p43
    %p50 = scmp.eq.s32.totalorder %s8, 1
    %p51 = por %p49, %p50
    %p52 = scmp.ne.s32.totalorder %s44, %s47
    %p53 = scmp.eq.s32.totalorder %s8, 0
    %p54 = por %p52, %p53
    %p55 = scmp.ne.s32.totalorder %s44, %s47
    %p56 = scmp.eq.s32.totalorder %s13, 1
    %p57 = por %p55, %p56
    %p58 = scmp.ne.s32.totalorder %s47, %s48
    %p59 = scmp.eq.s32.totalorder %s13, 0
    %p60 = por %p58, %p59
    %p61 = scmp.ne.s32.totalorder %s47, %s48
    %p62 = scmp.eq.s32.totalorder %s14, 1
    %p63 = por %p61, %p62
    %p65 = scmp.ne.s32.totalorder %s48, %s64
    %p66 = scmp.eq.s32.totalorder %s14, 0
    %p67 = por %p65, %p66
    %s68 = ssub.s32 %s8, %s15
    %p69 = scmp.eq.s32.totalorder %s68, 0
    %s71 = sadd.s32 %s70, 1
    %s72 = scalar_select %p69, %s70, %s71
    %p75 = pneg %p69
    %p76 = scmp.eq.s32.totalorder %s8, 1
    %p77 = por %p75, %p76
    %p78 = scmp.ne.s32.totalorder %s70, %s73
    %p79 = scmp.eq.s32.totalorder %s8, 0
    %p80 = por %p78, %p79
    %p81 = scmp.ne.s32.totalorder %s70, %s73
    %p82 = scmp.eq.s32.totalorder %s13, 1
    %p83 = por %p81, %p82
    %p84 = scmp.ne.s32.totalorder %s73, %s74
    %p85 = scmp.eq.s32.totalorder %s13, 0
    %p86 = por %p84, %p85
    %p87 = scmp.ne.s32.totalorder %s73, %s74
    %p88 = scmp.eq.s32.totalorder %s14, 1
    %p89 = por %p87, %p88
    %p91 = scmp.ne.s32.totalorder %s74, %s90
    %p92 = scmp.eq.s32.totalorder %s14, 0
    %p93 = por %p91, %p92
    %p94 = scmp.le.s32.totalorder 1, %s8
    %p95 = scmp.lt.s32.totalorder %s8, 3
    %p96 = pnand %p94, %p95
    %p97 = pneg %p96
    // Predicated region
    $region9: #{encoder_layer.4} parent=5 // pred_check
      _
    $region10: #{encoder_layer.4} parent=5 // pred_check_branch
      %99 = sbr.rel (%p96) target = $region12
    $region11: #{encoder_layer.4} parent=5 // pred_region
      %s100 = ssub.s32 %s8, 1
    $region12: #{encoder_layer.4} parent=5 // pred_fallthru
      _
    %p101 = scmp.lt.s32.totalorder %s8, 2
    // Predicated region
    $region13: #{encoder_layer.4} parent=5 // pred_check
      %p102 = pneg %p101
    $region14: #{encoder_layer.4} parent=5 // pred_check_branch
      %104 = sbr.rel (%p102) target = $region16
    $region15: #{encoder_layer.4} parent=5 // pred_region
      // Predicated region
      $region17: #{encoder_layer.4} parent=15 // pred_check
        %p105 = pneg %p28
      $region18: #{encoder_layer.4} parent=15 // pred_check_branch
        %107 = sbr.rel (%p105) target = $region20
      $region19: #{encoder_layer.4} parent=15 // pred_region
        %p108 = scmp.lt.s32.totalorder %s8, 1
        %s109 = scalar_select %p108, %s8, 1
        %s110 = smul.addr %s109, 8
        %s111 = scalar_lea.vmem %s0, %s110
      $region20: #{encoder_layer.4} parent=15 // pred_fallthru
        _
      // Predicated region
      $region21: #{encoder_layer.4} parent=15 // pred_check
        %p112 = pneg %p54
      $region22: #{encoder_layer.4} parent=15 // pred_check_branch
        %114 = sbr.rel (%p112) target = $region24
      $region23: #{encoder_layer.4} parent=15 // pred_region
        %p115 = scmp.lt.s32.totalorder %s8, 1
        %s116 = scalar_select %p115, %s8, 1
        %s117 = scalar_lea.vmem %s1, %s116
      $region24: #{encoder_layer.4} parent=15 // pred_fallthru
        _
    $region16: #{encoder_layer.4} parent=5 // pred_fallthru
      _
    %p118 = scmp.le.s32.totalorder 1, %s8
    %p119 = scmp.lt.s32.totalorder %s8, 3
    %p120 = pnand %p118, %p119
    %p121 = pneg %p120
    // Predicated region
    $region25: #{encoder_layer.4} parent=5 // pred_check
      _
    $region26: #{encoder_layer.4} parent=5 // pred_check_branch
      %123 = sbr.rel (%p120) target = $region28
    $region27: #{encoder_layer.4} parent=5 // pred_region
      %s124 = ssub.s32 %s8, 1
      %p125 = scmp.lt.s32.totalorder %s13, 1
      %s126 = scalar_select %p125, %s13, 1
      %s127 = smul.addr %s126, 8
      %s128 = scalar_lea.vmem %s0, %s127
      %p129 = pneg %p34
      %p130 = pneg %p31
      %p131 = scmp.lt.s32.totalorder %s13, 1
      %s132 = scalar_select %p131, %s13, 1
      %s133 = scalar_lea.vmem %s1, %s132
      %p134 = pneg %p60
      %p135 = pneg %p57
      %p136 = pneg %p86
      %p137 = pneg %p83
      %p138 = scmp.lt.s32.totalorder %s13, 1
      %s139 = scalar_select %p138, %s13, 1
      %s140 = smul.addr %s139, 8
      %s141 = scalar_lea.vmem %s2, %s140
      %p142 = scmp.lt.s32.totalorder %s13, 1
      %s143 = scalar_select %p142, %s13, 1
      %s144 = smul.addr %s143, 8
      %s145 = scalar_lea.vmem %s0, %s144
      %p146 = scmp.lt.s32.totalorder %s13, 1
      %s147 = scalar_select %p146, %s13, 1
      %s148 = scalar_lea.vmem %s1, %s147
      %p149 = scmp.lt.s32.totalorder %s13, 1
      %s150 = scalar_select %p149, %s13, 1
      %s151 = smul.addr %s150, 8
      %s152 = scalar_lea.vmem %s2, %s151
      %v154 = vld [vmem:[%s145] sm:$0xff]
      %v155 = vld [vmem:[%s148] sm:$0x1]
      %v156 = vpack.c.bf16 %v154, %v154
      %158 = vrot.lane.b32.xlu0 %v156, 120
      %v159 = vpop.permute.xlu0 %158
      %vm160 = vcmask 64512
      %v162 = vsel %vm160, %v156, 0
      %v165 = vsel %vm160, %v159, 0
      %167 = vmatprep.subr.bf16.mxu0 0
      %168 = vmatpush1.bf16.xpose.msra.mxu0 0
      %169 = vmatprep.subr.bf16.mxu0 0
      %170 = vmatpush1.bf16.xpose.msra.mxu0 0
      %171 = vmatprep.subr.bf16.mxu0 0
      %172 = vmatpush1.bf16.xpose.msra.mxu0 0
      %173 = vmatprep.subr.bf16.mxu0 0
      %174 = vmatpush1.bf16.xpose.msra.mxu0 0
      %175 = vmatprep.subr.bf16.mxu0 0
      %176 = vmatpush1.bf16.xpose.msra.mxu0 0
      %177 = vmatprep.subr.bf16.mxu0 0
      %178 = vmatpush1.bf16.xpose.msra.mxu0 0
      %179 = vmatprep.subr.bf16.mxu0 0
      %180 = vmatpush1.bf16.xpose.msra.mxu0 0
      %181 = vmatprep.subr.bf16.mxu0 0
      %182 = vmatpush1.bf16.xpose.msra.mxu0 %v165
      %183 = vmatprep.subr.bf16.mxu0 0
      %184 = vmatpush2.bf16.xpose.msra.mxu0 0
      %185 = vmatprep.subr.bf16.mxu0 0
      %186 = vmatpush2.bf16.xpose.msra.mxu0 0
      %187 = vmatprep.subr.bf16.mxu0 0
      %188 = vmatpush2.bf16.xpose.msra.mxu0 0
      %189 = vmatprep.subr.bf16.mxu0 0
      %190 = vmatpush2.bf16.xpose.msra.mxu0 0
      %191 = vmatprep.subr.bf16.mxu0 0
      %192 = vmatpush2.bf16.xpose.msra.mxu0 0
      %193 = vmatprep.subr.bf16.mxu0 0
      %194 = vmatpush2.bf16.xpose.msra.mxu0 0
      %195 = vmatprep.subr.bf16.mxu0 0
      %196 = vmatpush2.bf16.xpose.msra.mxu0 0
      %197 = vmatprep.subr.bf16.mxu0 0
      %198 = vmatpush2.bf16.xpose.msra.mxu0 0
      %199 = vmatprep.mubr.bf16.mxu0 0
      %200 = vmatmul.mubr.bf16.gmra.mxu0 %v162
      %v201 = vpop.f32.mrf.mxu0
      %v202 = vadd.f32 0.0, %v201
      %v203 = vpop.f32.mrf.mxu0
      %v204 = vpop.f32.mrf.mxu0
      %v205 = vpop.f32.mrf.mxu0
      %206 = vdwg.mxu0
      %v207 = vmul.f32 %v202, 0.35355338
      %vm208 = vcmp.eq.f32.partialorder %v155, 0.0
      %v209 = vsel %vm208, 1, 0
      %v210 = vlaneseq
      %v211 = vshrl.u32 %v210, 7
      %v212 = vsub.s32 0, %v211
      %v213 = vrot.slane %v209, %v212
      %vm214 = vcmp.eq.s32.totalorder %v213, 1
      %v215 = vsel %vm214, -1e+09, %v207
      %v216 = vsel %vm160, %v215, -inf
      %217 = vmax.xlane.f32.xlu0 %v216
      %v218 = vpop.xlane.xlu0 %217
      %v219 = vsub.f32 %v215, %v218
      %v220 = vmul.f32 %v219, 1.442695
      %v221 = vpow.pop %v220
      %v222 = vsel %vm160, %v221, 0.0
      %223 = vadd.xlane.f32.xlu0 %v222
      %v224 = vpop.xlane.xlu0 %223
      %v225 = vrcp.pop %v224
      %v226 = vmul.f32 %v221, %v225
      %v227 = vpack.c.bf16 %v226, %v226
      %228 = vrot.lane.b32.xlu0 %v156, 112
      %v229 = vpop.permute.xlu0 %228
      %v231 = vsel %vm160, %v227, 0
      %vm233 = vcmask 1043456
      %v235 = vsel %vm233, %v229, 0
      %237 = vmatprep.subr.bf16.mxu0 0
      %238 = vmatpush1.bf16.msra.mxu0 0
      %239 = vmatprep.subr.bf16.mxu0 0
      %240 = vmatpush1.bf16.msra.mxu0 0
      %241 = vmatprep.subr.bf16.mxu0 0
      %242 = vmatpush1.bf16.msra.mxu0 0
      %243 = vmatprep.subr.bf16.mxu0 0
      %244 = vmatpush1.bf16.msra.mxu0 0
      %245 = vmatprep.subr.bf16.mxu0 0
      %246 = vmatpush1.bf16.msra.mxu0 0
      %247 = vmatprep.subr.bf16.mxu0 0
      %248 = vmatpush1.bf16.msra.mxu0 0
      %249 = vmatprep.subr.bf16.mxu0 0
      %250 = vmatpush1.bf16.msra.mxu0 0
      %251 = vmatprep.subr.bf16.mxu0 0
      %252 = vmatpush1.bf16.msra.mxu0 %v235
      %253 = vmatprep.subr.bf16.mxu0 0
      %254 = vmatpush2.bf16.msra.mxu0 0
      %255 = vmatprep.subr.bf16.mxu0 0
      %256 = vmatpush2.bf16.msra.mxu0 0
      %257 = vmatprep.subr.bf16.mxu0 0
      %258 = vmatpush2.bf16.msra.mxu0 0
      %259 = vmatprep.subr.bf16.mxu0 0
      %260 = vmatpush2.bf16.msra.mxu0 0
      %261 = vmatprep.subr.bf16.mxu0 0
      %262 = vmatpush2.bf16.msra.mxu0 0
      %263 = vmatprep.subr.bf16.mxu0 0
      %264 = vmatpush2.bf16.msra.mxu0 0
      %265 = vmatprep.subr.bf16.mxu0 0
      %266 = vmatpush2.bf16.msra.mxu0 0
      %267 = vmatprep.subr.bf16.mxu0 0
      %268 = vmatpush2.bf16.msra.mxu0 0
      %269 = vmatprep.mubr.bf16.mxu0 0
      %270 = vmatmul.mubr.bf16.gmra.mxu0 %v231
      %v271 = vpop.f32.mrf.mxu0
      %v272 = vadd.f32 0.0, %v271
      %v273 = vpop.f32.mrf.mxu0
      %v274 = vpop.f32.mrf.mxu0
      %v275 = vpop.f32.mrf.mxu0
      %276 = vdwg.mxu0
      %277 = vst.msk [vmem:[%s152] sm:$0xff] %vm160, %v272
      %278 = vrot.lane.b32.xlu0 %v156, 104
      %v279 = vpop.permute.xlu0 %278
      %280 = vrot.lane.b32.xlu0 %v156, 96
      %v281 = vpop.permute.xlu0 %280
      %v283 = vsel %vm160, %v279, 0
      %v286 = vsel %vm160, %v281, 0
      %288 = vmatprep.subr.bf16.mxu0 0
      %289 = vmatpush1.bf16.xpose.msra.mxu0 0
      %290 = vmatprep.subr.bf16.mxu0 0
      %291 = vmatpush1.bf16.xpose.msra.mxu0 0
      %292 = vmatprep.subr.bf16.mxu0 0
      %293 = vmatpush1.bf16.xpose.msra.mxu0 0
      %294 = vmatprep.subr.bf16.mxu0 0
      %295 = vmatpush1.bf16.xpose.msra.mxu0 0
      %296 = vmatprep.subr.bf16.mxu0 0
      %297 = vmatpush1.bf16.xpose.msra.mxu0 0
      %298 = vmatprep.subr.bf16.mxu0 0
      %299 = vmatpush1.bf16.xpose.msra.mxu0 0
      %300 = vmatprep.subr.bf16.mxu0 0
      %301 = vmatpush1.bf16.xpose.msra.mxu0 0
      %302 = vmatprep.subr.bf16.mxu0 0
      %303 = vmatpush1.bf16.xpose.msra.mxu0 %v286
      %304 = vmatprep.subr.bf16.mxu0 0
      %305 = vmatpush2.bf16.xpose.msra.mxu0 0
      %306 = vmatprep.subr.bf16.mxu0 0
      %307 = vmatpush2.bf16.xpose.msra.mxu0 0
      %308 = vmatprep.subr.bf16.mxu0 0
      %309 = vmatpush2.bf16.xpose.msra.mxu0 0
      %310 = vmatprep.subr.bf16.mxu0 0
      %311 = vmatpush2.bf16.xpose.msra.mxu0 0
      %312 = vmatprep.subr.bf16.mxu0 0
      %313 = vmatpush2.bf16.xpose.msra.mxu0 0
      %314 = vmatprep.subr.bf16.mxu0 0
      %315 = vmatpush2.bf16.xpose.msra.mxu0 0
      %316 = vmatprep.subr.bf16.mxu0 0
      %317 = vmatpush2.bf16.xpose.msra.mxu0 0
      %318 = vmatprep.subr.bf16.mxu0 0
      %319 = vmatpush2.bf16.xpose.msra.mxu0 0
      %320 = vmatprep.mubr.bf16.mxu0 0
      %321 = vmatmul.mubr.bf16.gmra.mxu0 %v283
      %v322 = vpop.f32.mrf.mxu0
      %v323 = vadd.f32 0.0, %v322
      %v324 = vpop.f32.mrf.mxu0
      %v325 = vpop.f32.mrf.mxu0
      %v326 = vpop.f32.mrf.mxu0
      %327 = vdwg.mxu0
      %v328 = vmul.f32 %v323, 0.35355338
      %v329 = vsel %vm214, -1e+09, %v328
      %v330 = vsel %vm160, %v329, -inf
      %331 = vmax.xlane.f32.xlu0 %v330
      %v332 = vpop.xlane.xlu0 %331
      %v333 = vsub.f32 %v329, %v332
      %v334 = vmul.f32 %v333, 1.442695
      %v335 = vpow.pop %v334
      %v336 = vsel %vm160, %v335, 0.0
      %337 = vadd.xlane.f32.xlu0 %v336
      %v338 = vpop.xlane.xlu0 %337
      %v339 = vrcp.pop %v338
      %v340 = vmul.f32 %v335, %v339
      %v341 = vpack.c.bf16 %v340, %v340
      %342 = vrot.lane.b32.xlu0 %v156, 88
      %v343 = vpop.permute.xlu0 %342
      %v345 = vsel %vm160, %v341, 0
      %v348 = vsel %vm233, %v343, 0
      %350 = vmatprep.subr.bf16.mxu0 0
      %351 = vmatpush1.bf16.msra.mxu0 0
      %352 = vmatprep.subr.bf16.mxu0 0
      %353 = vmatpush1.bf16.msra.mxu0 0
      %354 = vmatprep.subr.bf16.mxu0 0
      %355 = vmatpush1.bf16.msra.mxu0 0
      %356 = vmatprep.subr.bf16.mxu0 0
      %357 = vmatpush1.bf16.msra.mxu0 0
      %358 = vmatprep.subr.bf16.mxu0 0
      %359 = vmatpush1.bf16.msra.mxu0 0
      %360 = vmatprep.subr.bf16.mxu0 0
      %361 = vmatpush1.bf16.msra.mxu0 0
      %362 = vmatprep.subr.bf16.mxu0 0
      %363 = vmatpush1.bf16.msra.mxu0 0
      %364 = vmatprep.subr.bf16.mxu0 0
      %365 = vmatpush1.bf16.msra.mxu0 %v348
      %366 = vmatprep.subr.bf16.mxu0 0
      %367 = vmatpush2.bf16.msra.mxu0 0
      %368 = vmatprep.subr.bf16.mxu0 0
      %369 = vmatpush2.bf16.msra.mxu0 0
      %370 = vmatprep.subr.bf16.mxu0 0
      %371 = vmatpush2.bf16.msra.mxu0 0
      %372 = vmatprep.subr.bf16.mxu0 0
      %373 = vmatpush2.bf16.msra.mxu0 0
      %374 = vmatprep.subr.bf16.mxu0 0
      %375 = vmatpush2.bf16.msra.mxu0 0
      %376 = vmatprep.subr.bf16.mxu0 0
      %377 = vmatpush2.bf16.msra.mxu0 0
      %378 = vmatprep.subr.bf16.mxu0 0
      %379 = vmatpush2.bf16.msra.mxu0 0
      %380 = vmatprep.subr.bf16.mxu0 0
      %381 = vmatpush2.bf16.msra.mxu0 0
      %382 = vmatprep.mubr.bf16.mxu0 0
      %383 = vmatmul.mubr.bf16.gmra.mxu0 %v345
      %v384 = vpop.f32.mrf.mxu0
      %v385 = vadd.f32 0.0, %v384
      %v386 = vpop.f32.mrf.mxu0
      %v387 = vpop.f32.mrf.mxu0
      %v388 = vpop.f32.mrf.mxu0
      %389 = vdwg.mxu0
      %391 = vrot.lane.b32.xlu0 %v385, 8
      %v392 = vpop.permute.xlu0 %391
      %vm394 = vcmask 130112
      %395 = vst.msk [vmem:[%s152] sm:$0xff] %vm394, %v392
      %396 = vrot.lane.b32.xlu0 %v156, 80
      %v397 = vpop.permute.xlu0 %396
      %398 = vrot.lane.b32.xlu0 %v156, 72
      %v399 = vpop.permute.xlu0 %398
      %v401 = vsel %vm160, %v397, 0
      %v404 = vsel %vm160, %v399, 0
      %406 = vmatprep.subr.bf16.mxu0 0
      %407 = vmatpush1.bf16.xpose.msra.mxu0 0
      %408 = vmatprep.subr.bf16.mxu0 0
      %409 = vmatpush1.bf16.xpose.msra.mxu0 0
      %410 = vmatprep.subr.bf16.mxu0 0
      %411 = vmatpush1.bf16.xpose.msra.mxu0 0
      %412 = vmatprep.subr.bf16.mxu0 0
      %413 = vmatpush1.bf16.xpose.msra.mxu0 0
      %414 = vmatprep.subr.bf16.mxu0 0
      %415 = vmatpush1.bf16.xpose.msra.mxu0 0
      %416 = vmatprep.subr.bf16.mxu0 0
      %417 = vmatpush1.bf16.xpose.msra.mxu0 0
      %418 = vmatprep.subr.bf16.mxu0 0
      %419 = vmatpush1.bf16.xpose.msra.mxu0 0
      %420 = vmatprep.subr.bf16.mxu0 0
      %421 = vmatpush1.bf16.xpose.msra.mxu0 %v404
      %422 = vmatprep.subr.bf16.mxu0 0
      %423 = vmatpush2.bf16.xpose.msra.mxu0 0
      %424 = vmatprep.subr.bf16.mxu0 0
      %425 = vmatpush2.bf16.xpose.msra.mxu0 0
      %426 = vmatprep.subr.bf16.mxu0 0
      %427 = vmatpush2.bf16.xpose.msra.mxu0 0
      %428 = vmatprep.subr.bf16.mxu0 0
      %429 = vmatpush2.bf16.xpose.msra.mxu0 0
      %430 = vmatprep.subr.bf16.mxu0 0
      %431 = vmatpush2.bf16.xpose.msra.mxu0 0
      %432 = vmatprep.subr.bf16.mxu0 0
      %433 = vmatpush2.bf16.xpose.msra.mxu0 0
      %434 = vmatprep.subr.bf16.mxu0 0
      %435 = vmatpush2.bf16.xpose.msra.mxu0 0
      %436 = vmatprep.subr.bf16.mxu0 0
      %437 = vmatpush2.bf16.xpose.msra.mxu0 0
      %438 = vmatprep.mubr.bf16.mxu0 0
      %439 = vmatmul.mubr.bf16.gmra.mxu0 %v401
      %v440 = vpop.f32.mrf.mxu0
      %v441 = vadd.f32 0.0, %v440
      %v442 = vpop.f32.mrf.mxu0
      %v443 = vpop.f32.mrf.mxu0
      %v444 = vpop.f32.mrf.mxu0
      %445 = vdwg.mxu0
      %v446 = vmul.f32 %v441, 0.35355338
      %v447 = vsel %vm214, -1e+09, %v446
      %v448 = vsel %vm160, %v447, -inf
      %449 = vmax.xlane.f32.xlu0 %v448
      %v450 = vpop.xlane.xlu0 %449
      %v451 = vsub.f32 %v447, %v450
      %v452 = vmul.f32 %v451, 1.442695
      %v453 = vpow.pop %v452
      %v454 = vsel %vm160, %v453, 0.0
      %455 = vadd.xlane.f32.xlu0 %v454
      %v456 = vpop.xlane.xlu0 %455
      %v457 = vrcp.pop %v456
      %v458 = vmul.f32 %v453, %v457
      %v459 = vpack.c.bf16 %v458, %v458
      %460 = vrot.lane.b32.xlu0 %v156, 64
      %v461 = vpop.permute.xlu0 %460
      %v463 = vsel %vm160, %v459, 0
      %v466 = vsel %vm233, %v461, 0
      %468 = vmatprep.subr.bf16.mxu0 0
      %469 = vmatpush1.bf16.msra.mxu0 0
      %470 = vmatprep.subr.bf16.mxu0 0
      %471 = vmatpush1.bf16.msra.mxu0 0
      %472 = vmatprep.subr.bf16.mxu0 0
      %473 = vmatpush1.bf16.msra.mxu0 0
      %474 = vmatprep.subr.bf16.mxu0 0
      %475 = vmatpush1.bf16.msra.mxu0 0
      %476 = vmatprep.subr.bf16.mxu0 0
      %477 = vmatpush1.bf16.msra.mxu0 0
      %478 = vmatprep.subr.bf16.mxu0 0
      %479 = vmatpush1.bf16.msra.mxu0 0
      %480 = vmatprep.subr.bf16.mxu0 0
      %481 = vmatpush1.bf16.msra.mxu0 0
      %482 = vmatprep.subr.bf16.mxu0 0
      %483 = vmatpush1.bf16.msra.mxu0 %v466
      %484 = vmatprep.subr.bf16.mxu0 0
      %485 = vmatpush2.bf16.msra.mxu0 0
      %486 = vmatprep.subr.bf16.mxu0 0
      %487 = vmatpush2.bf16.msra.mxu0 0
      %488 = vmatprep.subr.bf16.mxu0 0
      %489 = vmatpush2.bf16.msra.mxu0 0
      %490 = vmatprep.subr.bf16.mxu0 0
      %491 = vmatpush2.bf16.msra.mxu0 0
      %492 = vmatprep.subr.bf16.mxu0 0
      %493 = vmatpush2.bf16.msra.mxu0 0
      %494 = vmatprep.subr.bf16.mxu0 0
      %495 = vmatpush2.bf16.msra.mxu0 0
      %496 = vmatprep.subr.bf16.mxu0 0
      %497 = vmatpush2.bf16.msra.mxu0 0
      %498 = vmatprep.subr.bf16.mxu0 0
      %499 = vmatpush2.bf16.msra.mxu0 0
      %500 = vmatprep.mubr.bf16.mxu0 0
      %501 = vmatmul.mubr.bf16.gmra.mxu0 %v463
      %v502 = vpop.f32.mrf.mxu0
      %v503 = vadd.f32 0.0, %v502
      %v504 = vpop.f32.mrf.mxu0
      %v505 = vpop.f32.mrf.mxu0
      %v506 = vpop.f32.mrf.mxu0
      %507 = vdwg.mxu0
      %509 = vrot.lane.b32.xlu0 %v503, 16
      %v510 = vpop.permute.xlu0 %509
      %vm512 = vcmask 195712
      %513 = vst.msk [vmem:[%s152] sm:$0xff] %vm512, %v510
      %514 = vrot.lane.b32.xlu0 %v156, 56
      %v515 = vpop.permute.xlu0 %514
      %516 = vrot.lane.b32.xlu0 %v156, 48
      %v517 = vpop.permute.xlu0 %516
      %v519 = vsel %vm160, %v515, 0
      %v522 = vsel %vm160, %v517, 0
      %524 = vmatprep.subr.bf16.mxu0 0
      %525 = vmatpush1.bf16.xpose.msra.mxu0 0
      %526 = vmatprep.subr.bf16.mxu0 0
      %527 = vmatpush1.bf16.xpose.msra.mxu0 0
      %528 = vmatprep.subr.bf16.mxu0 0
      %529 = vmatpush1.bf16.xpose.msra.mxu0 0
      %530 = vmatprep.subr.bf16.mxu0 0
      %531 = vmatpush1.bf16.xpose.msra.mxu0 0
      %532 = vmatprep.subr.bf16.mxu0 0
      %533 = vmatpush1.bf16.xpose.msra.mxu0 0
      %534 = vmatprep.subr.bf16.mxu0 0
      %535 = vmatpush1.bf16.xpose.msra.mxu0 0
      %536 = vmatprep.subr.bf16.mxu0 0
      %537 = vmatpush1.bf16.xpose.msra.mxu0 0
      %538 = vmatprep.subr.bf16.mxu0 0
      %539 = vmatpush1.bf16.xpose.msra.mxu0 %v522
      %540 = vmatprep.subr.bf16.mxu0 0
      %541 = vmatpush2.bf16.xpose.msra.mxu0 0
      %542 = vmatprep.subr.bf16.mxu0 0
      %543 = vmatpush2.bf16.xpose.msra.mxu0 0
      %544 = vmatprep.subr.bf16.mxu0 0
      %545 = vmatpush2.bf16.xpose.msra.mxu0 0
      %546 = vmatprep.subr.bf16.mxu0 0
      %547 = vmatpush2.bf16.xpose.msra.mxu0 0
      %548 = vmatprep.subr.bf16.mxu0 0
      %549 = vmatpush2.bf16.xpose.msra.mxu0 0
      %550 = vmatprep.subr.bf16.mxu0 0
      %551 = vmatpush2.bf16.xpose.msra.mxu0 0
      %552 = vmatprep.subr.bf16.mxu0 0
      %553 = vmatpush2.bf16.xpose.msra.mxu0 0
      %554 = vmatprep.subr.bf16.mxu0 0
      %555 = vmatpush2.bf16.xpose.msra.mxu0 0
      %556 = vmatprep.mubr.bf16.mxu0 0
      %557 = vmatmul.mubr.bf16.gmra.mxu0 %v519
      %v558 = vpop.f32.mrf.mxu0
      %v559 = vadd.f32 0.0, %v558
      %v560 = vpop.f32.mrf.mxu0
      %v561 = vpop.f32.mrf.mxu0
      %v562 = vpop.f32.mrf.mxu0
      %563 = vdwg.mxu0
      %v564 = vmul.f32 %v559, 0.35355338
      %v565 = vsel %vm214, -1e+09, %v564
      %v566 = vsel %vm160, %v565, -inf
      %567 = vmax.xlane.f32.xlu0 %v566
      %v568 = vpop.xlane.xlu0 %567
      %v569 = vsub.f32 %v565, %v568
      %v570 = vmul.f32 %v569, 1.442695
      %v571 = vpow.pop %v570
      %v572 = vsel %vm160, %v571, 0.0
      %573 = vadd.xlane.f32.xlu0 %v572
      %v574 = vpop.xlane.xlu0 %573
      %v575 = vrcp.pop %v574
      %v576 = vmul.f32 %v571, %v575
      %v577 = vpack.c.bf16 %v576, %v576
      %578 = vrot.lane.b32.xlu0 %v156, 40
      %v579 = vpop.permute.xlu0 %578
      %v581 = vsel %vm160, %v577, 0
      %v584 = vsel %vm233, %v579, 0
      %586 = vmatprep.subr.bf16.mxu0 0
      %587 = vmatpush1.bf16.msra.mxu0 0
      %588 = vmatprep.subr.bf16.mxu0 0
      %589 = vmatpush1.bf16.msra.mxu0 0
      %590 = vmatprep.subr.bf16.mxu0 0
      %591 = vmatpush1.bf16.msra.mxu0 0
      %592 = vmatprep.subr.bf16.mxu0 0
      %593 = vmatpush1.bf16.msra.mxu0 0
      %594 = vmatprep.subr.bf16.mxu0 0
      %595 = vmatpush1.bf16.msra.mxu0 0
      %596 = vmatprep.subr.bf16.mxu0 0
      %597 = vmatpush1.bf16.msra.mxu0 0
      %598 = vmatprep.subr.bf16.mxu0 0
      %599 = vmatpush1.bf16.msra.mxu0 0
      %600 = vmatprep.subr.bf16.mxu0 0
      %601 = vmatpush1.bf16.msra.mxu0 %v584
      %602 = vmatprep.subr.bf16.mxu0 0
      %603 = vmatpush2.bf16.msra.mxu0 0
      %604 = vmatprep.subr.bf16.mxu0 0
      %605 = vmatpush2.bf16.msra.mxu0 0
      %606 = vmatprep.subr.bf16.mxu0 0
      %607 = vmatpush2.bf16.msra.mxu0 0
      %608 = vmatprep.subr.bf16.mxu0 0
      %609 = vmatpush2.bf16.msra.mxu0 0
      %610 = vmatprep.subr.bf16.mxu0 0
      %611 = vmatpush2.bf16.msra.mxu0 0
      %612 = vmatprep.subr.bf16.mxu0 0
      %613 = vmatpush2.bf16.msra.mxu0 0
      %614 = vmatprep.subr.bf16.mxu0 0
      %615 = vmatpush2.bf16.msra.mxu0 0
      %616 = vmatprep.subr.bf16.mxu0 0
      %617 = vmatpush2.bf16.msra.mxu0 0
      %618 = vmatprep.mubr.bf16.mxu0 0
      %619 = vmatmul.mubr.bf16.gmra.mxu0 %v581
      %v620 = vpop.f32.mrf.mxu0
      %v621 = vadd.f32 0.0, %v620
      %v622 = vpop.f32.mrf.mxu0
      %v623 = vpop.f32.mrf.mxu0
      %v624 = vpop.f32.mrf.mxu0
      %625 = vdwg.mxu0
      %627 = vrot.lane.b32.xlu0 %v621, 24
      %v628 = vpop.permute.xlu0 %627
      %vm630 = vcmask 261312
      %631 = vst.msk [vmem:[%s152] sm:$0xff] %vm630, %v628
      %p632 = scmp.lt.s32.totalorder %s13, 1
      %s633 = scalar_select %p632, %s13, 1
      %s634 = smul.addr %s633, 8
      %s635 = scalar_lea.vmem %s2, %s634
      // Predicated region
      $region29: #{encoder_layer.4} parent=27 // pred_check
        %p636 = pneg %p83
      $region30: #{encoder_layer.4} parent=27 // pred_check_branch
        %638 = sbr.rel (%p636) target = $region32
      $region31: #{encoder_layer.4} parent=27 // pred_region
        _
      $region32: #{encoder_layer.4} parent=27 // pred_fallthru
        _
    $region28: #{encoder_layer.4} parent=5 // pred_fallthru
      _
    %p639 = scmp.le.s32.totalorder 2, %s8
    // Predicated region
    $region33: #{encoder_layer.4} parent=5 // pred_check
      %p640 = pneg %p639
    $region34: #{encoder_layer.4} parent=5 // pred_check_branch
      %642 = sbr.rel (%p640) target = $region36
    $region35: #{encoder_layer.4} parent=5 // pred_region
      %s643 = ssub.s32 %s8, 2
      // Predicated region
      $region37: #{encoder_layer.4} parent=35 // pred_check
        %p644 = pneg %p89
      $region38: #{encoder_layer.4} parent=35 // pred_check_branch
        %646 = sbr.rel (%p644) target = $region40
      $region39: #{encoder_layer.4} parent=35 // pred_region
        %p647 = scmp.lt.s32.totalorder %s14, 1
        %s648 = scalar_select %p647, %s14, 1
        %s649 = smul.addr %s648, 8
        %s650 = scalar_lea.vmem %s2, %s649
      $region40: #{encoder_layer.4} parent=35 // pred_fallthru
        _
    $region36: #{encoder_layer.4} parent=5 // pred_fallthru
      _
  $region6: #{encoder_layer.4} parent=0 // loop_footer
    %s12 = sadd.s32 1, %s8
  $region7: #{encoder_layer.4} parent=0 // loop_footer_branch
    %7 = sbr.rel target = $region3
  $region8: #{encoder_layer.4} parent=0 // loop_exit
    _

// kernel: encoder_layer.3
$region0: #{encoder_layer.3}
  #allocation0 [shape = 'u32[]', space=smem, size = 0x4, offset = 0x4, fixed_abs, tag = 'smem constant byte address 0x4 - core index']
  #allocation1 [shape = 'u32[144,128]{1,0:T(1,128)}', space=vmem, size = 0x12000, scoped, tag = 'internal scratch']
  %s0 = inlined_call_operand.hbm [shape: f32[16,32], index: 0, kind: input, shape index: {}]
  %s1 = inlined_call_operand.vmem [shape: f32[1,32], index: 1, kind: input, shape index: {}]
  %s2 = inlined_call_operand.vmem [shape: f32[1,32], index: 2, kind: input, shape index: {}]
  %s3 = inlined_call_operand.vmem [shape: bf16[32,96], index: 3, kind: input, shape index: {}]
  %s4 = inlined_call_operand.vmem [shape: f32[1,96], index: 4, kind: input, shape index: {}]
  %s5 = inlined_call_operand.vmem [shape: f32[16,96], index: 5, kind: output, shape index: {}]
  %s6 = sld [smem:[#allocation0]]
  $region34: #{encoder_layer.3} parent=0
    _
  %s8 = ssub.s32 1, %s6
  %s9 = scalar_select 0, %s8, %s6
  $region1: #{encoder_layer.3} parent=0
    #allocation2 [shape = 'u8[8192]{0}', space=vmem, size = 0x2000, scoped, tag = 'input window, operand 0, single buffered']
    #allocation3 [shape = 's32[1]{0}', space=sflag, size = 0x4, scoped, tag = 'scoped memory for encoder_layer.3']
    %10 = vsyncpa [#allocation3], 0
    // Predicated region
    $region2: #{encoder_layer.3} parent=1 // pred_check
      _
    $region3: #{encoder_layer.3} parent=1 // pred_check_branch
      %12 = sbr.rel (0) target = $region5
    $region4: #{encoder_layer.3} parent=1 // pred_region
      %s14 = ssub.s32 256, 256
      %15 = vsyncadd [#allocation3], %s14
      %s16 = sshll.u32 [#allocation2], 4
      %s17 = int_to_ptr.vmem [resolvable:$true] %s16
      %22 = dma.hbm_to_vmem [thread:$0]  %s0, 256, %s17, [#allocation3], 128, 128, 8
    $region5: #{encoder_layer.3} parent=1 // pred_fallthru
      _
    // Predicated region
    $region6: #{encoder_layer.3} parent=1 // pred_check
      _
    $region7: #{encoder_layer.3} parent=1 // pred_check_branch
      %24 = sbr.rel (0) target = $region9
    $region8: #{encoder_layer.3} parent=1 // pred_region
      _
    $region9: #{encoder_layer.3} parent=1 // pred_fallthru
      _
    // Predicated region
    $region10: #{encoder_layer.3} parent=1 // pred_check
      _
    $region11: #{encoder_layer.3} parent=1 // pred_check_branch
      %26 = sbr.rel (0) target = $region13
    $region12: #{encoder_layer.3} parent=1 // pred_region
      _
    $region13: #{encoder_layer.3} parent=1 // pred_fallthru
      _
    // Predicated region
    $region14: #{encoder_layer.3} parent=1 // pred_check
      _
    $region15: #{encoder_layer.3} parent=1 // pred_check_branch
      %28 = sbr.rel (0) target = $region17
    $region16: #{encoder_layer.3} parent=1 // pred_region
      _
    $region17: #{encoder_layer.3} parent=1 // pred_fallthru
      _
    // Predicated region
    $region18: #{encoder_layer.3} parent=1 // pred_check
      _
    $region19: #{encoder_layer.3} parent=1 // pred_check_branch
      %30 = sbr.rel (0) target = $region21
    $region20: #{encoder_layer.3} parent=1 // pred_region
      _
    $region21: #{encoder_layer.3} parent=1 // pred_fallthru
      _
    // Predicated region
    $region22: #{encoder_layer.3} parent=1 // pred_check
      _
    $region23: #{encoder_layer.3} parent=1 // pred_check_branch
      %32 = sbr.rel (0) target = $region25
    $region24: #{encoder_layer.3} parent=1 // pred_region
      %33 = dma.done [#allocation3], 256
    $region25: #{encoder_layer.3} parent=1 // pred_fallthru
      _
    %v35 = vld [vmem:[#allocation2] sm:$0xff]
    %v36 = vld [vmem:[#allocation2 + $0x8] sm:$0xff]
    %vm37 = vcmask 261120
    %v38 = vsel %vm37, %v35, 0.0
    %39 = vadd.xlane.f32.xlu0 %v38
    %v40 = vpop.xlane.xlu0 %39
    %v41 = vsel %vm37, %v36, 0.0
    %42 = vadd.xlane.f32.xlu0 %v41
    %v43 = vpop.xlane.xlu0 %42
    %v44 = vrcp.pop 32.0
    %v45 = vmul.f32 %v40, %v44
    %v46 = vmul.f32 %v43, %v44
    %v47 = vsub.f32 %v35, %v45
    %v48 = vsub.f32 %v36, %v46
    %v49 = vmul.f32 %v47, %v47
    %v50 = vmul.f32 %v48, %v48
    %v51 = vsel %vm37, %v49, 0.0
    %52 = vadd.xlane.f32.xlu0 %v51
    %v53 = vpop.xlane.xlu0 %52
    %v54 = vsel %vm37, %v50, 0.0
    %55 = vadd.xlane.f32.xlu0 %v54
    %v56 = vpop.xlane.xlu0 %55
    %v57 = vmul.f32 %v53, 0.032258064
    %v58 = vmul.f32 %v56, 0.032258064
    %v59 = vrsqrt.pop %v57
    %v60 = vmul.f32 %v57, %v59
    %vm61 = vcmp.eq.f32.partialorder %v57, inf
    %v62 = vsel %vm61, %v57, %v60
    %vm63 = vcmp.eq.f32.partialorder %v57, 0.0
    %v64 = vand.u32 %v57, 2147483648
    %v65 = vsel %vm63, %v64, %v62
    %v66 = vrsqrt.pop %v58
    %v67 = vmul.f32 %v58, %v66
    %vm68 = vcmp.eq.f32.partialorder %v58, inf
    %v69 = vsel %vm68, %v58, %v67
    %vm70 = vcmp.eq.f32.partialorder %v58, 0.0
    %v71 = vand.u32 %v58, 2147483648
    %v72 = vsel %vm70, %v71, %v69
    %v73 = vadd.f32 %v65, 1e-06
    %v74 = vadd.f32 %v72, 1e-06
    %v75 = vrcp.pop %v73
    %v76 = vrcp.pop %v74
    %v77 = vld [vmem:[%s1] sm:$0x1]
    %v78 = vmul.f32 %v47, %v75
    %v79 = vmul.f32 %v48, %v76
    %v81 = vlaneseq
    %v82 = vshrl.u32 %v81, 7
    %v83 = vsub.s32 0, %v82
    %v84 = vrot.slane %v77, %v83
    %v86 = vmul.f32 %v84, %v78
    %v87 = vmul.f32 %v84, %v79
    %v88 = vld [vmem:[%s2] sm:$0x1]
    %v90 = vlaneseq
    %v91 = vshrl.u32 %v90, 7
    %v92 = vsub.s32 0, %v91
    %v93 = vrot.slane %v88, %v92
    %v95 = vadd.f32 %v86, %v93
    %v96 = vadd.f32 %v87, %v93
    %v97 = vpack.c.bf16 %v96, %v95
    %v98 = vld [vmem:[%s3] sm:$0xf]
    %v99 = vld [vmem:[%s3 + $0x4] sm:$0xf]
    %v100 = vld [vmem:[%s3 + $0x8] sm:$0xf]
    %v101 = vld [vmem:[%s3 + $0xc] sm:$0xf]
    %v102 = vld [vmem:[%s4] sm:$0x1]
    %v104 = vlaneseq
    %v105 = vshrl.u32 %v104, 7
    %v106 = vsub.s32 0, %v105
    %v107 = vrot.slane %v102, %v106
    %v113 = vunpack.c.l.b16 %v98
    %v114 = vunpack.c.l.b16 %v99
    %v115 = vunpack.c.l.b16 %v100
    %v116 = vunpack.c.l.b16 %v101
    %v117 = vpack.c.b16 %v114, %v113
    %v118 = vpack.c.b16 %v116, %v115
    %v122 = vsel %vm37, %v97, 0
    %124 = vmatprep.subr.bf16.mxu0 0
    %125 = vmatpush1.bf16.msra.mxu0 0
    %126 = vmatprep.subr.bf16.mxu0 0
    %127 = vmatpush1.bf16.msra.mxu0 0
    %128 = vmatprep.subr.bf16.mxu0 0
    %129 = vmatpush1.bf16.msra.mxu0 0
    %130 = vmatprep.subr.bf16.mxu0 0
    %131 = vmatpush1.bf16.msra.mxu0 0
    %132 = vmatprep.subr.bf16.mxu0 0
    %133 = vmatpush1.bf16.msra.mxu0 0
    %134 = vmatprep.subr.bf16.mxu0 0
    %135 = vmatpush1.bf16.msra.mxu0 0
    %136 = vmatprep.subr.bf16.mxu0 0
    %137 = vmatpush1.bf16.msra.mxu0 %v118
    %138 = vmatprep.subr.bf16.mxu0 0
    %139 = vmatpush1.bf16.msra.mxu0 %v117
    %140 = vmatprep.subr.bf16.mxu0 0
    %141 = vmatpush2.bf16.msra.mxu0 0
    %142 = vmatprep.subr.bf16.mxu0 0
    %143 = vmatpush2.bf16.msra.mxu0 0
    %144 = vmatprep.subr.bf16.mxu0 0
    %145 = vmatpush2.bf16.msra.mxu0 0
    %146 = vmatprep.subr.bf16.mxu0 0
    %147 = vmatpush2.bf16.msra.mxu0 0
    %148 = vmatprep.subr.bf16.mxu0 0
    %149 = vmatpush2.bf16.msra.mxu0 0
    %150 = vmatprep.subr.bf16.mxu0 0
    %151 = vmatpush2.bf16.msra.mxu0 0
    %152 = vmatprep.subr.bf16.mxu0 0
    %153 = vmatpush2.bf16.msra.mxu0 0
    %154 = vmatprep.subr.bf16.mxu0 0
    %155 = vmatpush2.bf16.msra.mxu0 0
    %156 = vmatprep.mubr.bf16.mxu0 0
    %157 = vmatmul.mubr.bf16.gmra.mxu0 %v122
    %v158 = vpop.f32.mrf.mxu0
    %v159 = vadd.f32 %v107, %v158
    %v160 = vpop.f32.mrf.mxu0
    %v161 = vpop.f32.mrf.mxu0
    %v162 = vadd.f32 %v107, %v161
    %v163 = vpop.f32.mrf.mxu0
    %164 = vdwg.mxu0
    %vm165 = vcmask 785408
    %166 = vst.msk [vmem:[%s5] sm:$0xff] %vm165, %v159
    %167 = vst.msk [vmem:[%s5 + $0x8] sm:$0xff] %vm165, %v162
    // Predicated region
    $region26: #{encoder_layer.3} parent=1 // pred_check
      _
    $region27: #{encoder_layer.3} parent=1 // pred_check_branch
      %169 = sbr.rel (0) target = $region29
    $region28: #{encoder_layer.3} parent=1 // pred_region
      _
    $region29: #{encoder_layer.3} parent=1 // pred_fallthru
      _
    // Predicated region
    $region30: #{encoder_layer.3} parent=1 // pred_check
      _
    $region31: #{encoder_layer.3} parent=1 // pred_check_branch
      %171 = sbr.rel (0) target = $region33
    $region32: #{encoder_layer.3} parent=1 // pred_region
      _
    $region33: #{encoder_layer.3} parent=1 // pred_fallthru
      _
    %172 = vsyncpa [#allocation3], 1

// kernel: encoder_layer.5
$region0: #{encoder_layer.5}
  #allocation0 [shape = 'u32[]', space=smem, size = 0x4, offset = 0x4, fixed_abs, tag = 'smem constant byte address 0x4 - core index']
  #allocation1 [shape = 'u32[144,128]{1,0:T(1,128)}', space=vmem, size = 0x12000, scoped, tag = 'internal scratch']
  %s0 = inlined_call_operand.vmem [shape: f32[16,32], index: 0, kind: input, shape index: {}]
  %s1 = inlined_call_operand.vmem [shape: f32[16,32], index: 1, kind: input, shape index: {}]
  %s2 = inlined_call_operand.vmem [shape: bf16[32,32], index: 2, kind: input, shape index: {}]
  %s3 = inlined_call_operand.vmem [shape: f32[1,32], index: 3, kind: input, shape index: {}]
  %s4 = inlined_call_operand.vmem [shape: f32[1,32], index: 4, kind: input, shape index: {}]
  %s5 = inlined_call_operand.vmem [shape: f32[1,32], index: 5, kind: input, shape index: {}]
  %s6 = inlined_call_operand.vmem [shape: bf16[32,64], index: 6, kind: input, shape index: {}]
  %s7 = inlined_call_operand.vmem [shape: f32[1,64], index: 7, kind: input, shape index: {}]
  %s8 = inlined_call_operand.vmem [shape: bf16[64,32], index: 8, kind: input, shape index: {}]
  %s9 = inlined_call_operand.vmem [shape: f32[1,32], index: 9, kind: input, shape index: {}]
  %s10 = inlined_call_operand.hbm [shape: f32[16,32], index: 10, kind: output, shape index: {}]
  %s11 = sld [smem:[#allocation0]]
  $region50: #{encoder_layer.5} parent=0
    _
  %s13 = ssub.s32 1, %s11
  %s14 = scalar_select 0, %s13, %s11
  $region1: #{encoder_layer.5} parent=0
    #allocation2 [shape = 'u8[8192]{0}', space=vmem, size = 0x2000, scoped, tag = 'output window, operand 0, single buffered']
    #allocation3 [shape = 's32[1]{0}', space=sflag, size = 0x4, scoped, tag = 'scoped memory for encoder_layer.5']
    %15 = vsyncpa [#allocation3], 0
    // Predicated region
    $region2: #{encoder_layer.5} parent=1 // pred_check
      _
    $region3: #{encoder_layer.5} parent=1 // pred_check_branch
      %17 = sbr.rel (0) target = $region5
    $region4: #{encoder_layer.5} parent=1 // pred_region
      _
    $region5: #{encoder_layer.5} parent=1 // pred_fallthru
      _
    // Predicated region
    $region6: #{encoder_layer.5} parent=1 // pred_check
      _
    $region7: #{encoder_layer.5} parent=1 // pred_check_branch
      %19 = sbr.rel (0) target = $region9
    $region8: #{encoder_layer.5} parent=1 // pred_region
      _
    $region9: #{encoder_layer.5} parent=1 // pred_fallthru
      _
    // Predicated region
    $region10: #{encoder_layer.5} parent=1 // pred_check
      _
    $region11: #{encoder_layer.5} parent=1 // pred_check_branch
      %21 = sbr.rel (0) target = $region13
    $region12: #{encoder_layer.5} parent=1 // pred_region
      _
    $region13: #{encoder_layer.5} parent=1 // pred_fallthru
      _
    // Predicated region
    $region14: #{encoder_layer.5} parent=1 // pred_check
      _
    $region15: #{encoder_layer.5} parent=1 // pred_check_branch
      %23 = sbr.rel (0) target = $region17
    $region16: #{encoder_layer.5} parent=1 // pred_region
      _
    $region17: #{encoder_layer.5} parent=1 // pred_fallthru
      _
    // Predicated region
    $region18: #{encoder_layer.5} parent=1 // pred_check
      _
    $region19: #{encoder_layer.5} parent=1 // pred_check_branch
      %25 = sbr.rel (0) target = $region21
    $region20: #{encoder_layer.5} parent=1 // pred_region
      _
    $region21: #{encoder_layer.5} parent=1 // pred_fallthru
      _
    // Predicated region
    $region22: #{encoder_layer.5} parent=1 // pred_check
      _
    $region23: #{encoder_layer.5} parent=1 // pred_check_branch
      %27 = sbr.rel (0) target = $region25
    $region24: #{encoder_layer.5} parent=1 // pred_region
      _
    $region25: #{encoder_layer.5} parent=1 // pred_fallthru
      _
    // Predicated region
    $region26: #{encoder_layer.5} parent=1 // pred_check
      _
    $region27: #{encoder_layer.5} parent=1 // pred_check_branch
      %29 = sbr.rel (0) target = $region29
    $region28: #{encoder_layer.5} parent=1 // pred_region
      _
    $region29: #{encoder_layer.5} parent=1 // pred_fallthru
      _
    // Predicated region
    $region30: #{encoder_layer.5} parent=1 // pred_check
      _
    $region31: #{encoder_layer.5} parent=1 // pred_check_branch
      %31 = sbr.rel (0) target = $region33
    $region32: #{encoder_layer.5} parent=1 // pred_region
      _
    $region33: #{encoder_layer.5} parent=1 // pred_fallthru
      _
    // Predicated region
    $region34: #{encoder_layer.5} parent=1 // pred_check
      _
    $region35: #{encoder_layer.5} parent=1 // pred_check_branch
      %33 = sbr.rel (0) target = $region37
    $region36: #{encoder_layer.5} parent=1 // pred_region
      _
    $region37: #{encoder_layer.5} parent=1 // pred_fallthru
      _
    // Predicated region
    $region38: #{encoder_layer.5} parent=1 // pred_check
      _
    $region39: #{encoder_layer.5} parent=1 // pred_check_branch
      %35 = sbr.rel (0) target = $region41
    $region40: #{encoder_layer.5} parent=1 // pred_region
      _
    $region41: #{encoder_layer.5} parent=1 // pred_fallthru
      _
    %v37 = vld [vmem:[%s0] sm:$0xff]
    %v38 = vld [vmem:[%s0 + $0x8] sm:$0xff]
    %v39 = vpack.c.bf16 %v38, %v37
    %v40 = vld [vmem:[%s2] sm:$0xf]
    %v41 = vld [vmem:[%s2 + $0x4] sm:$0xf]
    %v42 = vld [vmem:[%s2 + $0x8] sm:$0xf]
    %v43 = vld [vmem:[%s2 + $0xc] sm:$0xf]
    %v44 = vld [vmem:[%s3] sm:$0x1]
    %v46 = vlaneseq
    %v47 = vshrl.u32 %v46, 7
    %v48 = vsub.s32 0, %v47
    %v49 = vrot.slane %v44, %v48
    %v55 = vunpack.c.l.b16 %v40
    %v56 = vunpack.c.l.b16 %v41
    %v57 = vunpack.c.l.b16 %v42
    %v58 = vunpack.c.l.b16 %v43
    %v59 = vpack.c.b16 %v56, %v55
    %v60 = vpack.c.b16 %v58, %v57
    %vm63 = vcmask 261120
    %v65 = vsel %vm63, %v39, 0
    %67 = vmatprep.subr.bf16.mxu0 0
    %68 = vmatpush1.bf16.msra.mxu0 0
    %69 = vmatprep.subr.bf16.mxu0 0
    %70 = vmatpush1.bf16.msra.mxu0 0
    %71 = vmatprep.subr.bf16.mxu0 0
    %72 = vmatpush1.bf16.msra.mxu0 0
    %73 = vmatprep.subr.bf16.mxu0 0
    %74 = vmatpush1.bf16.msra.mxu0 0
    %75 = vmatprep.subr.bf16.mxu0 0
    %76 = vmatpush1.bf16.msra.mxu0 0
    %77 = vmatprep.subr.bf16.mxu0 0
    %78 = vmatpush1.bf16.msra.mxu0 0
    %79 = vmatprep.subr.bf16.mxu0 0
    %80 = vmatpush1.bf16.msra.mxu0 %v60
    %81 = vmatprep.subr.bf16.mxu0 0
    %82 = vmatpush1.bf16.msra.mxu0 %v59
    %83 = vmatprep.subr.bf16.mxu0 0
    %84 = vmatpush2.bf16.msra.mxu0 0
    %85 = vmatprep.subr.bf16.mxu0 0
    %86 = vmatpush2.bf16.msra.mxu0 0
    %87 = vmatprep.subr.bf16.mxu0 0
    %88 = vmatpush2.bf16.msra.mxu0 0
    %89 = vmatprep.subr.bf16.mxu0 0
    %90 = vmatpush2.bf16.msra.mxu0 0
    %91 = vmatprep.subr.bf16.mxu0 0
    %92 = vmatpush2.bf16.msra.mxu0 0
    %93 = vmatprep.subr.bf16.mxu0 0
    %94 = vmatpush2.bf16.msra.mxu0 0
    %95 = vmatprep.subr.bf16.mxu0 0
    %96 = vmatpush2.bf16.msra.mxu0 0
    %97 = vmatprep.subr.bf16.mxu0 0
    %98 = vmatpush2.bf16.msra.mxu0 0
    %99 = vmatprep.mubr.bf16.mxu0 0
    %100 = vmatmul.mubr.bf16.gmra.mxu0 %v65
    %v101 = vpop.f32.mrf.mxu0
    %v102 = vadd.f32 %v49, %v101
    %v103 = vpop.f32.mrf.mxu0
    %v104 = vpop.f32.mrf.mxu0
    %v105 = vadd.f32 %v49, %v104
    %v106 = vpop.f32.mrf.mxu0
    %107 = vdwg.mxu0
    %v108 = vld [vmem:[%s1] sm:$0xff]
    %v109 = vld [vmem:[%s1 + $0x8] sm:$0xff]
    %v110 = vadd.f32 %v102, %v108
    %v111 = vadd.f32 %v105, %v109
    %v112 = vsel %vm63, %v110, 0.0
    %113 = vadd.xlane.f32.xlu0 %v112
    %v114 = vpop.xlane.xlu0 %113
    %v115 = vsel %vm63, %v111, 0.0
    %116 = vadd.xlane.f32.xlu0 %v115
    %v117 = vpop.xlane.xlu0 %116
    %v118 = vrcp.pop 32.0
    %v119 = vmul.f32 %v114, %v118
    %v120 = vmul.f32 %v117, %v118
    %v121 = vsub.f32 %v110, %v119
    %v122 = vsub.f32 %v111, %v120
    %v123 = vmul.f32 %v121, %v121
    %v124 = vmul.f32 %v122, %v122
    %v125 = vsel %vm63, %v123, 0.0
    %126 = vadd.xlane.f32.xlu0 %v125
    %v127 = vpop.xlane.xlu0 %126
    %v128 = vsel %vm63, %v124, 0.0
    %129 = vadd.xlane.f32.xlu0 %v128
    %v130 = vpop.xlane.xlu0 %129
    %v131 = vmul.f32 %v127, 0.032258064
    %v132 = vmul.f32 %v130, 0.032258064
    %v133 = vrsqrt.pop %v131
    %v134 = vmul.f32 %v131, %v133
    %vm135 = vcmp.eq.f32.partialorder %v131, inf
    %v136 = vsel %vm135, %v131, %v134
    %vm137 = vcmp.eq.f32.partialorder %v131, 0.0
    %v138 = vand.u32 %v131, 2147483648
    %v139 = vsel %vm137, %v138, %v136
    %v140 = vrsqrt.pop %v132
    %v141 = vmul.f32 %v132, %v140
    %vm142 = vcmp.eq.f32.partialorder %v132, inf
    %v143 = vsel %vm142, %v132, %v141
    %vm144 = vcmp.eq.f32.partialorder %v132, 0.0
    %v145 = vand.u32 %v132, 2147483648
    %v146 = vsel %vm144, %v145, %v143
    %v147 = vadd.f32 %v139, 1e-06
    %v148 = vadd.f32 %v146, 1e-06
    %v149 = vrcp.pop %v147
    %v150 = vrcp.pop %v148
    %v151 = vld [vmem:[%s4] sm:$0x1]
    %v152 = vmul.f32 %v121, %v149
    %v153 = vmul.f32 %v122, %v150
    %v155 = vlaneseq
    %v156 = vshrl.u32 %v155, 7
    %v157 = vsub.s32 0, %v156
    %v158 = vrot.slane %v151, %v157
    %v160 = vmul.f32 %v158, %v152
    %v161 = vmul.f32 %v158, %v153
    %v162 = vld [vmem:[%s5] sm:$0x1]
    %v164 = vlaneseq
    %v165 = vshrl.u32 %v164, 7
    %v166 = vsub.s32 0, %v165
    %v167 = vrot.slane %v162, %v166
    %v169 = vadd.f32 %v160, %v167
    %v170 = vadd.f32 %v161, %v167
    %v171 = vpack.c.bf16 %v170, %v169
    %v172 = vld [vmem:[%s6] sm:$0xf]
    %v173 = vld [vmem:[%s6 + $0x4] sm:$0xf]
    %v174 = vld [vmem:[%s6 + $0x8] sm:$0xf]
    %v175 = vld [vmem:[%s6 + $0xc] sm:$0xf]
    %v176 = vld [vmem:[%s7] sm:$0x1]
    %v178 = vlaneseq
    %v179 = vshrl.u32 %v178, 7
    %v180 = vsub.s32 0, %v179
    %v181 = vrot.slane %v176, %v180
    %v187 = vunpack.c.l.b16 %v172
    %v188 = vunpack.c.l.b16 %v173
    %v189 = vunpack.c.l.b16 %v174
    %v190 = vunpack.c.l.b16 %v175
    %v191 = vpack.c.b16 %v188, %v187
    %v192 = vpack.c.b16 %v190, %v189
    %v196 = vsel %vm63, %v171, 0
    %198 = vmatprep.subr.bf16.mxu0 0
    %199 = vmatpush1.bf16.msra.mxu0 0
    %200 = vmatprep.subr.bf16.mxu0 0
    %201 = vmatpush1.bf16.msra.mxu0 0
    %202 = vmatprep.subr.bf16.mxu0 0
    %203 = vmatpush1.bf16.msra.mxu0 0
    %204 = vmatprep.subr.bf16.mxu0 0
    %205 = vmatpush1.bf16.msra.mxu0 0
    %206 = vmatprep.subr.bf16.mxu0 0
    %207 = vmatpush1.bf16.msra.mxu0 0
    %208 = vmatprep.subr.bf16.mxu0 0
    %209 = vmatpush1.bf16.msra.mxu0 0
    %210 = vmatprep.subr.bf16.mxu0 0
    %211 = vmatpush1.bf16.msra.mxu0 %v192
    %212 = vmatprep.subr.bf16.mxu0 0
    %213 = vmatpush1.bf16.msra.mxu0 %v191
    %214 = vmatprep.subr.bf16.mxu0 0
    %215 = vmatpush2.bf16.msra.mxu0 0
    %216 = vmatprep.subr.bf16.mxu0 0
    %217 = vmatpush2.bf16.msra.mxu0 0
    %218 = vmatprep.subr.bf16.mxu0 0
    %219 = vmatpush2.bf16.msra.mxu0 0
    %220 = vmatprep.subr.bf16.mxu0 0
    %221 = vmatpush2.bf16.msra.mxu0 0
    %222 = vmatprep.subr.bf16.mxu0 0
    %223 = vmatpush2.bf16.msra.mxu0 0
    %224 = vmatprep.subr.bf16.mxu0 0
    %225 = vmatpush2.bf16.msra.mxu0 0
    %226 = vmatprep.subr.bf16.mxu0 0
    %227 = vmatpush2.bf16.msra.mxu0 0
    %228 = vmatprep.subr.bf16.mxu0 0
    %229 = vmatpush2.bf16.msra.mxu0 0
    %230 = vmatprep.mubr.bf16.mxu0 0
    %231 = vmatmul.mubr.bf16.gmra.mxu0 %v196
    %v232 = vpop.f32.mrf.mxu0
    %v233 = vadd.f32 %v181, %v232
    %v234 = vpop.f32.mrf.mxu0
    %v235 = vpop.f32.mrf.mxu0
    %v236 = vadd.f32 %v181, %v235
    %v237 = vpop.f32.mrf.mxu0
    %238 = vdwg.mxu0
    %v239 = vmax.f32 %v233, 0.0
    %v240 = vmax.f32 %v236, 0.0
    %v241 = vpack.c.bf16 %v240, %v239
    %v242 = vld [vmem:[%s8] sm:$0xf]
    %v243 = vld [vmem:[%s8 + $0x4] sm:$0xf]
    %v244 = vld [vmem:[%s8 + $0x8] sm:$0xf]
    %v245 = vld [vmem:[%s8 + $0xc] sm:$0xf]
    %v246 = vld [vmem:[%s8 + $0x10] sm:$0xf]
    %v247 = vld [vmem:[%s8 + $0x14] sm:$0xf]
    %v248 = vld [vmem:[%s8 + $0x18] sm:$0xf]
    %v249 = vld [vmem:[%s8 + $0x1c] sm:$0xf]
    %v250 = vld [vmem:[%s9] sm:$0x1]
    %v252 = vlaneseq
    %v253 = vshrl.u32 %v252, 7
    %v254 = vsub.s32 0, %v253
    %v255 = vrot.slane %v250, %v254
    %v265 = vunpack.c.l.b16 %v242
    %v266 = vunpack.c.l.b16 %v243
    %v267 = vunpack.c.l.b16 %v244
    %v268 = vunpack.c.l.b16 %v245
    %v269 = vunpack.c.l.b16 %v246
    %v270 = vunpack.c.l.b16 %v247
    %v271 = vunpack.c.l.b16 %v248
    %v272 = vunpack.c.l.b16 %v249
    %v273 = vpack.c.b16 %v266, %v265
    %v274 = vpack.c.b16 %v268, %v267
    %v275 = vpack.c.b16 %v270, %v269
    %v276 = vpack.c.b16 %v272, %v271
    %vm281 = vcmask 523264
    %v283 = vsel %vm281, %v241, 0
    %285 = vmatprep.subr.bf16.mxu0 0
    %286 = vmatpush1.bf16.msra.mxu0 0
    %287 = vmatprep.subr.bf16.mxu0 0
    %288 = vmatpush1.bf16.msra.mxu0 0
    %289 = vmatprep.subr.bf16.mxu0 0
    %290 = vmatpush1.bf16.msra.mxu0 0
    %291 = vmatprep.subr.bf16.mxu0 0
    %292 = vmatpush1.bf16.msra.mxu0 0
    %293 = vmatprep.subr.bf16.mxu0 0
    %294 = vmatpush1.bf16.msra.mxu0 %v276
    %295 = vmatprep.subr.bf16.mxu0 0
    %296 = vmatpush1.bf16.msra.mxu0 %v275
    %297 = vmatprep.subr.bf16.mxu0 0
    %298 = vmatpush1.bf16.msra.mxu0 %v274
    %299 = vmatprep.subr.bf16.mxu0 0
    %300 = vmatpush1.bf16.msra.mxu0 %v273
    %301 = vmatprep.subr.bf16.mxu0 0
    %302 = vmatpush2.bf16.msra.mxu0 0
    %303 = vmatprep.subr.bf16.mxu0 0
    %304 = vmatpush2.bf16.msra.mxu0 0
    %305 = vmatprep.subr.bf16.mxu0 0
    %306 = vmatpush2.bf16.msra.mxu0 0
    %307 = vmatprep.subr.bf16.mxu0 0
    %308 = vmatpush2.bf16.msra.mxu0 0
    %309 = vmatprep.subr.bf16.mxu0 0
    %310 = vmatpush2.bf16.msra.mxu0 0
    %311 = vmatprep.subr.bf16.mxu0 0
    %312 = vmatpush2.bf16.msra.mxu0 0
    %313 = vmatprep.subr.bf16.mxu0 0
    %314 = vmatpush2.bf16.msra.mxu0 0
    %315 = vmatprep.subr.bf16.mxu0 0
    %316 = vmatpush2.bf16.msra.mxu0 0
    %317 = vmatprep.mubr.bf16.mxu0 0
    %318 = vmatmul.mubr.bf16.gmra.mxu0 %v283
    %v319 = vpop.f32.mrf.mxu0
    %v320 = vadd.f32 %v255, %v319
    %v321 = vpop.f32.mrf.mxu0
    %v322 = vpop.f32.mrf.mxu0
    %v323 = vadd.f32 %v255, %v322
    %v324 = vpop.f32.mrf.mxu0
    %325 = vdwg.mxu0
    %v326 = vadd.f32 %v320, %v110
    %v327 = vadd.f32 %v323, %v111
    %328 = vst.msk [vmem:[#allocation2] sm:$0xff] %vm63, %v326
    %329 = vst.msk [vmem:[#allocation2 + $0x8] sm:$0xff] %vm63, %v327
    // Predicated region
    $region42: #{encoder_layer.5} parent=1 // pred_check
      _
    $region43: #{encoder_layer.5} parent=1 // pred_check_branch
      %331 = sbr.rel (0) target = $region45
    $region44: #{encoder_layer.5} parent=1 // pred_region
      %s333 = ssub.s32 256, 256
      %334 = vsyncadd [#allocation3], %s333
      %s335 = sshll.u32 [#allocation2], 4
      %s336 = int_to_ptr.vmem [resolvable:$true] %s335
      %341 = dma.vmem_to_hbm [thread:$0]  %s336, 256, %s10, [#allocation3], 128, 128, 8
    $region45: #{encoder_layer.5} parent=1 // pred_fallthru
      _
    // Predicated region
    $region46: #{encoder_layer.5} parent=1 // pred_check
      _
    $region47: #{encoder_layer.5} parent=1 // pred_check_branch
      %343 = sbr.rel (0) target = $region49
    $region48: #{encoder_layer.5} parent=1 // pred_region
      %344 = dma.done [#allocation3], 256
    $region49: #{encoder_layer.5} parent=1 // pred_fallthru
      _
    %345 = vsyncpa [#allocation3], 1

// kernel: encoder_layer.4
$region0: #{encoder_layer.4}
  #allocation0 [shape = 'u32[]', space=smem, size = 0x4, offset = 0x4, fixed_abs, tag = 'smem constant byte address 0x4 - core index']
  #allocation1 [shape = 'u32[144,128]{1,0:T(1,128)}', space=vmem, size = 0x12000, scoped, tag = 'internal scratch']
  %s0 = inlined_call_operand.vmem [shape: f32[16,96], index: 0, kind: input, shape index: {}]
  %s1 = inlined_call_operand.vmem [shape: f32[2,1,8], index: 1, kind: input, shape index: {}]
  %s2 = inlined_call_operand.vmem [shape: f32[16,32], index: 2, kind: output, shape index: {}]
  %s3 = sld [smem:[#allocation0]]
  $region41: #{encoder_layer.4} parent=0
    _
  %s5 = ssub.s32 1, %s3
  %s6 = scalar_select 0, %s5, %s3
  loop: start=0, step=1, limit=4
  $region2: #{encoder_layer.4} parent=0 // loop_pre_header
    _
  $region3: #{encoder_layer.4} parent=0 // loop_header
    %s8 = sphi 0, %s12
    %p9 = scmp.ge.s32.totalorder %s8, 4
    %s18 = sphi 0, %s20
    %s21 = sphi 0, %s18
    %s22 = sphi 0, %s21
    %s38 = sphi 0, %s22
    %s44 = sphi 0, %s46
    %s47 = sphi 0, %s44
    %s48 = sphi 0, %s47
    %s64 = sphi 0, %s48
    %s70 = sphi 0, %s72
    %s73 = sphi 0, %s70
    %s74 = sphi 0, %s73
    %s90 = sphi 0, %s74
  $region4: #{encoder_layer.4} parent=0 // loop_header_branch
    %11 = sbr.rel (%p9) target = $region8
  $region5: #{encoder_layer.4} parent=0 // loop_body
    %s13 = ssub.s32 %s8, 1
    %s14 = ssub.s32 %s8, 2
    %s15 = sadd.s32 %s8, 1
    %s16 = ssub.s32 %s8, %s15
    %p17 = scmp.eq.s32.totalorder %s16, 0
    %s19 = sadd.s32 %s18, 1
    %s20 = scalar_select %p17, %s18, %s19
    %p23 = pneg %p17
    %p24 = scmp.eq.s32.totalorder %s8, 1
    %p25 = por %p23, %p24
    %p26 = scmp.ne.s32.totalorder %s18, %s21
    %p27 = scmp.eq.s32.totalorder %s8, 0
    %p28 = por %p26, %p27
    %p29 = scmp.ne.s32.totalorder %s18, %s21
    %p30 = scmp.eq.s32.totalorder %s13, 1
    %p31 = por %p29, %p30
    %p32 = scmp.ne.s32.totalorder %s21, %s22
    %p33 = scmp.eq.s32.totalorder %s13, 0
    %p34 = por %p32, %p33
    %p35 = scmp.ne.s32.totalorder %s21, %s22
    %p36 = scmp.eq.s32.totalorder %s14, 1
    %p37 = por %p35, %p36
    %p39 = scmp.ne.s32.totalorder %s22, %s38
    %p40 = scmp.eq.s32.totalorder %s14, 0
    %p41 = por %p39, %p40
    %s42 = ssub.s32 %s8, %s15
    %p43 = scmp.eq.s32.totalorder %s42, 0
    %s45 = sadd.s32 %s44, 1
    %s46 = scalar_select %p43, %s44, %s45
    %p49 = pneg %p43
    %p50 = scmp.eq.s32.totalorder %s8, 1
    %p51 = por %p49, %p50
    %p52 = scmp.ne.s32.totalorder %s44, %s47
    %p53 = scmp.eq.s32.totalorder %s8, 0
    %p54 = por %p52, %p53
    %p55 = scmp.ne.s32.totalorder %s44, %s47
    %p56 = scmp.eq.s32.totalorder %s13, 1
    %p57 = por %p55, %p56
    %p58 = scmp.ne.s32.totalorder %s47, %s48
    %p59 = scmp.eq.s32.totalorder %s13, 0
    %p60 = por %p58, %p59
    %p61 = scmp.ne.s32.totalorder %s47, %s48
    %p62 = scmp.eq.s32.totalorder %s14, 1
    %p63 = por %p61, %p62
    %p65 = scmp.ne.s32.totalorder %s48, %s64
    %p66 = scmp.eq.s32.totalorder %s14, 0
    %p67 = por %p65, %p66
    %s68 = ssub.s32 %s8, %s15
    %p69 = scmp.eq.s32.totalorder %s68, 0
    %s71 = sadd.s32 %s70, 1
    %s72 = scalar_select %p69, %s70, %s71
    %p75 = pneg %p69
    %p76 = scmp.eq.s32.totalorder %s8, 1
    %p77 = por %p75, %p76
    %p78 = scmp.ne.s32.totalorder %s70, %s73
    %p79 = scmp.eq.s32.totalorder %s8, 0
    %p80 = por %p78, %p79
    %p81 = scmp.ne.s32.totalorder %s70, %s73
    %p82 = scmp.eq.s32.totalorder %s13, 1
    %p83 = por %p81, %p82
    %p84 = scmp.ne.s32.totalorder %s73, %s74
    %p85 = scmp.eq.s32.totalorder %s13, 0
    %p86 = por %p84, %p85
    %p87 = scmp.ne.s32.totalorder %s73, %s74
    %p88 = scmp.eq.s32.totalorder %s14, 1
    %p89 = por %p87, %p88
    %p91 = scmp.ne.s32.totalorder %s74, %s90
    %p92 = scmp.eq.s32.totalorder %s14, 0
    %p93 = por %p91, %p92
    %p94 = scmp.le.s32.totalorder 1, %s8
    %p95 = scmp.lt.s32.totalorder %s8, 3
    %p96 = pnand %p94, %p95
    %p97 = pneg %p96
    // Predicated region
    $region9: #{encoder_layer.4} parent=5 // pred_check
      _
    $region10: #{encoder_layer.4} parent=5 // pred_check_branch
      %99 = sbr.rel (%p96) target = $region12
    $region11: #{encoder_layer.4} parent=5 // pred_region
      %s100 = ssub.s32 %s8, 1
    $region12: #{encoder_layer.4} parent=5 // pred_fallthru
      _
    %p101 = scmp.lt.s32.totalorder %s8, 2
    // Predicated region
    $region13: #{encoder_layer.4} parent=5 // pred_check
      %p102 = pneg %p101
    $region14: #{encoder_layer.4} parent=5 // pred_check_branch
      %104 = sbr.rel (%p102) target = $region16
    $region15: #{encoder_layer.4} parent=5 // pred_region
      // Predicated region
      $region17: #{encoder_layer.4} parent=15 // pred_check
        %p105 = pneg %p28
      $region18: #{encoder_layer.4} parent=15 // pred_check_branch
        %107 = sbr.rel (%p105) target = $region20
      $region19: #{encoder_layer.4} parent=15 // pred_region
        %p108 = scmp.lt.s32.totalorder %s8, 1
        %s109 = scalar_select %p108, %s8, 1
        %s110 = smul.addr %s109, 8
        %s111 = scalar_lea.vmem %s0, %s110
      $region20: #{encoder_layer.4} parent=15 // pred_fallthru
        _
      // Predicated region
      $region21: #{encoder_layer.4} parent=15 // pred_check
        %p112 = pneg %p54
      $region22: #{encoder_layer.4} parent=15 // pred_check_branch
        %114 = sbr.rel (%p112) target = $region24
      $region23: #{encoder_layer.4} parent=15 // pred_region
        %p115 = scmp.lt.s32.totalorder %s8, 1
        %s116 = scalar_select %p115, %s8, 1
        %s117 = scalar_lea.vmem %s1, %s116
      $region24: #{encoder_layer.4} parent=15 // pred_fallthru
        _
    $region16: #{encoder_layer.4} parent=5 // pred_fallthru
      _
    %p118 = scmp.le.s32.totalorder 1, %s8
    %p119 = scmp.lt.s32.totalorder %s8, 3
    %p120 = pnand %p118, %p119
    %p121 = pneg %p120
    // Predicated region
    $region25: #{encoder_layer.4} parent=5 // pred_check
      _
    $region26: #{encoder_layer.4} parent=5 // pred_check_branch
      %123 = sbr.rel (%p120) target = $region28
    $region27: #{encoder_layer.4} parent=5 // pred_region
      %s124 = ssub.s32 %s8, 1
      %p125 = scmp.lt.s32.totalorder %s13, 1
      %s126 = scalar_select %p125, %s13, 1
      %s127 = smul.addr %s126, 8
      %s128 = scalar_lea.vmem %s0, %s127
      %p129 = pneg %p34
      %p130 = pneg %p31
      %p131 = scmp.lt.s32.totalorder %s13, 1
      %s132 = scalar_select %p131, %s13, 1
      %s133 = scalar_lea.vmem %s1, %s132
      %p134 = pneg %p60
      %p135 = pneg %p57
      %p136 = pneg %p86
      %p137 = pneg %p83
      %p138 = scmp.lt.s32.totalorder %s13, 1
      %s139 = scalar_select %p138, %s13, 1
      %s140 = smul.addr %s139, 8
      %s141 = scalar_lea.vmem %s2, %s140
      %p142 = scmp.lt.s32.totalorder %s13, 1
      %s143 = scalar_select %p142, %s13, 1
      %s144 = smul.addr %s143, 8
      %s145 = scalar_lea.vmem %s0, %s144
      %p146 = scmp.lt.s32.totalorder %s13, 1
      %s147 = scalar_select %p146, %s13, 1
      %s148 = scalar_lea.vmem %s1, %s147
      %p149 = scmp.lt.s32.totalorder %s13, 1
      %s150 = scalar_select %p149, %s13, 1
      %s151 = smul.addr %s150, 8
      %s152 = scalar_lea.vmem %s2, %s151
      %v154 = vld [vmem:[%s145] sm:$0xff]
      %v155 = vld [vmem:[%s148] sm:$0x1]
      %v156 = vpack.c.bf16 %v154, %v154
      %158 = vrot.lane.b32.xlu0 %v156, 120
      %v159 = vpop.permute.xlu0 %158
      %vm160 = vcmask 64512
      %v162 = vsel %vm160, %v156, 0
      %v165 = vsel %vm160, %v159, 0
      %167 = vmatprep.subr.bf16.mxu0 0
      %168 = vmatpush1.bf16.xpose.msra.mxu0 0
      %169 = vmatprep.subr.bf16.mxu0 0
      %170 = vmatpush1.bf16.xpose.msra.mxu0 0
      %171 = vmatprep.subr.bf16.mxu0 0
      %172 = vmatpush1.bf16.xpose.msra.mxu0 0
      %173 = vmatprep.subr.bf16.mxu0 0
      %174 = vmatpush1.bf16.xpose.msra.mxu0 0
      %175 = vmatprep.subr.bf16.mxu0 0
      %176 = vmatpush1.bf16.xpose.msra.mxu0 0
      %177 = vmatprep.subr.bf16.mxu0 0
      %178 = vmatpush1.bf16.xpose.msra.mxu0 0
      %179 = vmatprep.subr.bf16.mxu0 0
      %180 = vmatpush1.bf16.xpose.msra.mxu0 0
      %181 = vmatprep.subr.bf16.mxu0 0
      %182 = vmatpush1.bf16.xpose.msra.mxu0 %v165
      %183 = vmatprep.subr.bf16.mxu0 0
      %184 = vmatpush2.bf16.xpose.msra.mxu0 0
      %185 = vmatprep.subr.bf16.mxu0 0
      %186 = vmatpush2.bf16.xpose.msra.mxu0 0
      %187 = vmatprep.subr.bf16.mxu0 0
      %188 = vmatpush2.bf16.xpose.msra.mxu0 0
      %189 = vmatprep.subr.bf16.mxu0 0
      %190 = vmatpush2.bf16.xpose.msra.mxu0 0
      %191 = vmatprep.subr.bf16.mxu0 0
      %192 = vmatpush2.bf16.xpose.msra.mxu0 0
      %193 = vmatprep.subr.bf16.mxu0 0
      %194 = vmatpush2.bf16.xpose.msra.mxu0 0
      %195 = vmatprep.subr.bf16.mxu0 0
      %196 = vmatpush2.bf16.xpose.msra.mxu0 0
      %197 = vmatprep.subr.bf16.mxu0 0
      %198 = vmatpush2.bf16.xpose.msra.mxu0 0
      %199 = vmatprep.mubr.bf16.mxu0 0
      %200 = vmatmul.mubr.bf16.gmra.mxu0 %v162
      %v201 = vpop.f32.mrf.mxu0
      %v202 = vadd.f32 0.0, %v201
      %v203 = vpop.f32.mrf.mxu0
      %v204 = vpop.f32.mrf.mxu0
      %v205 = vpop.f32.mrf.mxu0
      %206 = vdwg.mxu0
      %v207 = vmul.f32 %v202, 0.35355338
      %vm208 = vcmp.eq.f32.partialorder %v155, 0.0
      %v209 = vsel %vm208, 1, 0
      %v210 = vlaneseq
      %v211 = vshrl.u32 %v210, 7
      %v212 = vsub.s32 0, %v211
      %v213 = vrot.slane %v209, %v212
      %vm214 = vcmp.eq.s32.totalorder %v213, 1
      %v215 = vsel %vm214, -1e+09, %v207
      %v216 = vsel %vm160, %v215, -inf
      %217 = vmax.xlane.f32.xlu0 %v216
      %v218 = vpop.xlane.xlu0 %217
      %v219 = vsub.f32 %v215, %v218
      %v220 = vmul.f32 %v219, 1.442695
      %v221 = vpow.pop %v220
      %v222 = vsel %vm160, %v221, 0.0
      %223 = vadd.xlane.f32.xlu0 %v222
      %v224 = vpop.xlane.xlu0 %223
      %v225 = vrcp.pop %v224
      %v226 = vmul.f32 %v221, %v225
      %v227 = vpack.c.bf16 %v226, %v226
      %228 = vrot.lane.b32.xlu0 %v156, 112
      %v229 = vpop.permute.xlu0 %228
      %v231 = vsel %vm160, %v227, 0
      %vm233 = vcmask 1043456
      %v235 = vsel %vm233, %v229, 0
      %237 = vmatprep.subr.bf16.mxu0 0
      %238 = vmatpush1.bf16.msra.mxu0 0
      %239 = vmatprep.subr.bf16.mxu0 0
      %240 = vmatpush1.bf16.msra.mxu0 0
      %241 = vmatprep.subr.bf16.mxu0 0
      %242 = vmatpush1.bf16.msra.mxu0 0
      %243 = vmatprep.subr.bf16.mxu0 0
      %244 = vmatpush1.bf16.msra.mxu0 0
      %245 = vmatprep.subr.bf16.mxu0 0
      %246 = vmatpush1.bf16.msra.mxu0 0
      %247 = vmatprep.subr.bf16.mxu0 0
      %248 = vmatpush1.bf16.msra.mxu0 0
      %249 = vmatprep.subr.bf16.mxu0 0
      %250 = vmatpush1.bf16.msra.mxu0 0
      %251 = vmatprep.subr.bf16.mxu0 0
      %252 = vmatpush1.bf16.msra.mxu0 %v235
      %253 = vmatprep.subr.bf16.mxu0 0
      %254 = vmatpush2.bf16.msra.mxu0 0
      %255 = vmatprep.subr.bf16.mxu0 0
      %256 = vmatpush2.bf16.msra.mxu0 0
      %257 = vmatprep.subr.bf16.mxu0 0
      %258 = vmatpush2.bf16.msra.mxu0 0
      %259 = vmatprep.subr.bf16.mxu0 0
      %260 = vmatpush2.bf16.msra.mxu0 0
      %261 = vmatprep.subr.bf16.mxu0 0
      %262 = vmatpush2.bf16.msra.mxu0 0
      %263 = vmatprep.subr.bf16.mxu0 0
      %264 = vmatpush2.bf16.msra.mxu0 0
      %265 = vmatprep.subr.bf16.mxu0 0
      %266 = vmatpush2.bf16.msra.mxu0 0
      %267 = vmatprep.subr.bf16.mxu0 0
      %268 = vmatpush2.bf16.msra.mxu0 0
      %269 = vmatprep.mubr.bf16.mxu0 0
      %270 = vmatmul.mubr.bf16.gmra.mxu0 %v231
      %v271 = vpop.f32.mrf.mxu0
      %v272 = vadd.f32 0.0, %v271
      %v273 = vpop.f32.mrf.mxu0
      %v274 = vpop.f32.mrf.mxu0
      %v275 = vpop.f32.mrf.mxu0
      %276 = vdwg.mxu0
      %277 = vst.msk [vmem:[%s152] sm:$0xff] %vm160, %v272
      %278 = vrot.lane.b32.xlu0 %v156, 104
      %v279 = vpop.permute.xlu0 %278
      %280 = vrot.lane.b32.xlu0 %v156, 96
      %v281 = vpop.permute.xlu0 %280
      %v283 = vsel %vm160, %v279, 0
      %v286 = vsel %vm160, %v281, 0
      %288 = vmatprep.subr.bf16.mxu0 0
      %289 = vmatpush1.bf16.xpose.msra.mxu0 0
      %290 = vmatprep.subr.bf16.mxu0 0
      %291 = vmatpush1.bf16.xpose.msra.mxu0 0
      %292 = vmatprep.subr.bf16.mxu0 0
      %293 = vmatpush1.bf16.xpose.msra.mxu0 0
      %294 = vmatprep.subr.bf16.mxu0 0
      %295 = vmatpush1.bf16.xpose.msra.mxu0 0
      %296 = vmatprep.subr.bf16.mxu0 0
      %297 = vmatpush1.bf16.xpose.msra.mxu0 0
      %298 = vmatprep.subr.bf16.mxu0 0
      %299 = vmatpush1.bf16.xpose.msra.mxu0 0
      %300 = vmatprep.subr.bf16.mxu0 0
      %301 = vmatpush1.bf16.xpose.msra.mxu0 0
      %302 = vmatprep.subr.bf16.mxu0 0
      %303 = vmatpush1.bf16.xpose.msra.mxu0 %v286
      %304 = vmatprep.subr.bf16.mxu0 0
      %305 = vmatpush2.bf16.xpose.msra.mxu0 0
      %306 = vmatprep.subr.bf16.mxu0 0
      %307 = vmatpush2.bf16.xpose.msra.mxu0 0
      %308 = vmatprep.subr.bf16.mxu0 0
      %309 = vmatpush2.bf16.xpose.msra.mxu0 0
      %310 = vmatprep.subr.bf16.mxu0 0
      %311 = vmatpush2.bf16.xpose.msra.mxu0 0
      %312 = vmatprep.subr.bf16.mxu0 0
      %313 = vmatpush2.bf16.xpose.msra.mxu0 0
      %314 = vmatprep.subr.bf16.mxu0 0
      %315 = vmatpush2.bf16.xpose.msra.mxu0 0
      %316 = vmatprep.subr.bf16.mxu0 0
      %317 = vmatpush2.bf16.xpose.msra.mxu0 0
      %318 = vmatprep.subr.bf16.mxu0 0
      %319 = vmatpush2.bf16.xpose.msra.mxu0 0
      %320 = vmatprep.mubr.bf16.mxu0 0
      %321 = vmatmul.mubr.bf16.gmra.mxu0 %v283
      %v322 = vpop.f32.mrf.mxu0
      %v323 = vadd.f32 0.0, %v322
      %v324 = vpop.f32.mrf.mxu0
      %v325 = vpop.f32.mrf.mxu0
      %v326 = vpop.f32.mrf.mxu0
      %327 = vdwg.mxu0
      %v328 = vmul.f32 %v323, 0.35355338
      %v329 = vsel %vm214, -1e+09, %v328
      %v330 = vsel %vm160, %v329, -inf
      %331 = vmax.xlane.f32.xlu0 %v330
      %v332 = vpop.xlane.xlu0 %331
      %v333 = vsub.f32 %v329, %v332
      %v334 = vmul.f32 %v333, 1.442695
      %v335 = vpow.pop %v334
      %v336 = vsel %vm160, %v335, 0.0
      %337 = vadd.xlane.f32.xlu0 %v336
      %v338 = vpop.xlane.xlu0 %337
      %v339 = vrcp.pop %v338
      %v340 = vmul.f32 %v335, %v339
      %v341 = vpack.c.bf16 %v340, %v340
      %342 = vrot.lane.b32.xlu0 %v156, 88
      %v343 = vpop.permute.xlu0 %342
      %v345 = vsel %vm160, %v341, 0
      %v348 = vsel %vm233, %v343, 0
      %350 = vmatprep.subr.bf16.mxu0 0
      %351 = vmatpush1.bf16.msra.mxu0 0
      %352 = vmatprep.subr.bf16.mxu0 0
      %353 = vmatpush1.bf16.msra.mxu0 0
      %354 = vmatprep.subr.bf16.mxu0 0
      %355 = vmatpush1.bf16.msra.mxu0 0
      %356 = vmatprep.subr.bf16.mxu0 0
      %357 = vmatpush1.bf16.msra.mxu0 0
      %358 = vmatprep.subr.bf16.mxu0 0
      %359 = vmatpush1.bf16.msra.mxu0 0
      %360 = vmatprep.subr.bf16.mxu0 0
      %361 = vmatpush1.bf16.msra.mxu0 0
      %362 = vmatprep.subr.bf16.mxu0 0
      %363 = vmatpush1.bf16.msra.mxu0 0
      %364 = vmatprep.subr.bf16.mxu0 0
      %365 = vmatpush1.bf16.msra.mxu0 %v348
      %366 = vmatprep.subr.bf16.mxu0 0
      %367 = vmatpush2.bf16.msra.mxu0 0
      %368 = vmatprep.subr.bf16.mxu0 0
      %369 = vmatpush2.bf16.msra.mxu0 0
      %370 = vmatprep.subr.bf16.mxu0 0
      %371 = vmatpush2.bf16.msra.mxu0 0
      %372 = vmatprep.subr.bf16.mxu0 0
      %373 = vmatpush2.bf16.msra.mxu0 0
      %374 = vmatprep.subr.bf16.mxu0 0
      %375 = vmatpush2.bf16.msra.mxu0 0
      %376 = vmatprep.subr.bf16.mxu0 0
      %377 = vmatpush2.bf16.msra.mxu0 0
      %378 = vmatprep.subr.bf16.mxu0 0
      %379 = vmatpush2.bf16.msra.mxu0 0
      %380 = vmatprep.subr.bf16.mxu0 0
      %381 = vmatpush2.bf16.msra.mxu0 0
      %382 = vmatprep.mubr.bf16.mxu0 0
      %383 = vmatmul.mubr.bf16.gmra.mxu0 %v345
      %v384 = vpop.f32.mrf.mxu0
      %v385 = vadd.f32 0.0, %v384
      %v386 = vpop.f32.mrf.mxu0
      %v387 = vpop.f32.mrf.mxu0
      %v388 = vpop.f32.mrf.mxu0
      %389 = vdwg.mxu0
      %391 = vrot.lane.b32.xlu0 %v385, 8
      %v392 = vpop.permute.xlu0 %391
      %vm394 = vcmask 130112
      %395 = vst.msk [vmem:[%s152] sm:$0xff] %vm394, %v392
      %396 = vrot.lane.b32.xlu0 %v156, 80
      %v397 = vpop.permute.xlu0 %396
      %398 = vrot.lane.b32.xlu0 %v156, 72
      %v399 = vpop.permute.xlu0 %398
      %v401 = vsel %vm160, %v397, 0
      %v404 = vsel %vm160, %v399, 0
      %406 = vmatprep.subr.bf16.mxu0 0
      %407 = vmatpush1.bf16.xpose.msra.mxu0 0
      %408 = vmatprep.subr.bf16.mxu0 0
      %409 = vmatpush1.bf16.xpose.msra.mxu0 0
      %410 = vmatprep.subr.bf16.mxu0 0
      %411 = vmatpush1.bf16.xpose.msra.mxu0 0
      %412 = vmatprep.subr.bf16.mxu0 0
      %413 = vmatpush1.bf16.xpose.msra.mxu0 0
      %414 = vmatprep.subr.bf16.mxu0 0
      %415 = vmatpush1.bf16.xpose.msra.mxu0 0
      %416 = vmatprep.subr.bf16.mxu0 0
      %417 = vmatpush1.bf16.xpose.msra.mxu0 0
      %418 = vmatprep.subr.bf16.mxu0 0
      %419 = vmatpush1.bf16.xpose.msra.mxu0 0
      %420 = vmatprep.subr.bf16.mxu0 0
      %421 = vmatpush1.bf16.xpose.msra.mxu0 %v404
      %422 = vmatprep.subr.bf16.mxu0 0
      %423 = vmatpush2.bf16.xpose.msra.mxu0 0
      %424 = vmatprep.subr.bf16.mxu0 0
      %425 = vmatpush2.bf16.xpose.msra.mxu0 0
      %426 = vmatprep.subr.bf16.mxu0 0
      %427 = vmatpush2.bf16.xpose.msra.mxu0 0
      %428 = vmatprep.subr.bf16.mxu0 0
      %429 = vmatpush2.bf16.xpose.msra.mxu0 0
      %430 = vmatprep.subr.bf16.mxu0 0
      %431 = vmatpush2.bf16.xpose.msra.mxu0 0
      %432 = vmatprep.subr.bf16.mxu0 0
      %433 = vmatpush2.bf16.xpose.msra.mxu0 0
      %434 = vmatprep.subr.bf16.mxu0 0
      %435 = vmatpush2.bf16.xpose.msra.mxu0 0
      %436 = vmatprep.subr.bf16.mxu0 0
      %437 = vmatpush2.bf16.xpose.msra.mxu0 0
      %438 = vmatprep.mubr.bf16.mxu0 0
      %439 = vmatmul.mubr.bf16.gmra.mxu0 %v401
      %v440 = vpop.f32.mrf.mxu0
      %v441 = vadd.f32 0.0, %v440
      %v442 = vpop.f32.mrf.mxu0
      %v443 = vpop.f32.mrf.mxu0
      %v444 = vpop.f32.mrf.mxu0
      %445 = vdwg.mxu0
      %v446 = vmul.f32 %v441, 0.35355338
      %v447 = vsel %vm214, -1e+09, %v446
      %v448 = vsel %vm160, %v447, -inf
      %449 = vmax.xlane.f32.xlu0 %v448
      %v450 = vpop.xlane.xlu0 %449
      %v451 = vsub.f32 %v447, %v450
      %v452 = vmul.f32 %v451, 1.442695
      %v453 = vpow.pop %v452
      %v454 = vsel %vm160, %v453, 0.0
      %455 = vadd.xlane.f32.xlu0 %v454
      %v456 = vpop.xlane.xlu0 %455
      %v457 = vrcp.pop %v456
      %v458 = vmul.f32 %v453, %v457
      %v459 = vpack.c.bf16 %v458, %v458
      %460 = vrot.lane.b32.xlu0 %v156, 64
      %v461 = vpop.permute.xlu0 %460
      %v463 = vsel %vm160, %v459, 0
      %v466 = vsel %vm233, %v461, 0
      %468 = vmatprep.subr.bf16.mxu0 0
      %469 = vmatpush1.bf16.msra.mxu0 0
      %470 = vmatprep.subr.bf16.mxu0 0
      %471 = vmatpush1.bf16.msra.mxu0 0
      %472 = vmatprep.subr.bf16.mxu0 0
      %473 = vmatpush1.bf16.msra.mxu0 0
      %474 = vmatprep.subr.bf16.mxu0 0
      %475 = vmatpush1.bf16.msra.mxu0 0
      %476 = vmatprep.subr.bf16.mxu0 0
      %477 = vmatpush1.bf16.msra.mxu0 0
      %478 = vmatprep.subr.bf16.mxu0 0
      %479 = vmatpush1.bf16.msra.mxu0 0
      %480 = vmatprep.subr.bf16.mxu0 0
      %481 = vmatpush1.bf16.msra.mxu0 0
      %482 = vmatprep.subr.bf16.mxu0 0
      %483 = vmatpush1.bf16.msra.mxu0 %v466
      %484 = vmatprep.subr.bf16.mxu0 0
      %485 = vmatpush2.bf16.msra.mxu0 0
      %486 = vmatprep.subr.bf16.mxu0 0
      %487 = vmatpush2.bf16.msra.mxu0 0
      %488 = vmatprep.subr.bf16.mxu0 0
      %489 = vmatpush2.bf16.msra.mxu0 0
      %490 = vmatprep.subr.bf16.mxu0 0
      %491 = vmatpush2.bf16.msra.mxu0 0
      %492 = vmatprep.subr.bf16.mxu0 0
      %493 = vmatpush2.bf16.msra.mxu0 0
      %494 = vmatprep.subr.bf16.mxu0 0
      %495 = vmatpush2.bf16.msra.mxu0 0
      %496 = vmatprep.subr.bf16.mxu0 0
      %497 = vmatpush2.bf16.msra.mxu0 0
      %498 = vmatprep.subr.bf16.mxu0 0
      %499 = vmatpush2.bf16.msra.mxu0 0
      %500 = vmatprep.mubr.bf16.mxu0 0
      %501 = vmatmul.mubr.bf16.gmra.mxu0 %v463
      %v502 = vpop.f32.mrf.mxu0
      %v503 = vadd.f32 0.0, %v502
      %v504 = vpop.f32.mrf.mxu0
      %v505 = vpop.f32.mrf.mxu0
      %v506 = vpop.f32.mrf.mxu0
      %507 = vdwg.mxu0
      %509 = vrot.lane.b32.xlu0 %v503, 16
      %v510 = vpop.permute.xlu0 %509
      %vm512 = vcmask 195712
      %513 = vst.msk [vmem:[%s152] sm:$0xff] %vm512, %v510
      %514 = vrot.lane.b32.xlu0 %v156, 56
      %v515 = vpop.permute.xlu0 %514
      %516 = vrot.lane.b32.xlu0 %v156, 48
      %v517 = vpop.permute.xlu0 %516
      %v519 = vsel %vm160, %v515, 0
      %v522 = vsel %vm160, %v517, 0
      %524 = vmatprep.subr.bf16.mxu0 0
      %525 = vmatpush1.bf16.xpose.msra.mxu0 0
      %526 = vmatprep.subr.bf16.mxu0 0
      %527 = vmatpush1.bf16.xpose.msra.mxu0 0
      %528 = vmatprep.subr.bf16.mxu0 0
      %529 = vmatpush1.bf16.xpose.msra.mxu0 0
      %530 = vmatprep.subr.bf16.mxu0 0
      %531 = vmatpush1.bf16.xpose.msra.mxu0 0
      %532 = vmatprep.subr.bf16.mxu0 0
      %533 = vmatpush1.bf16.xpose.msra.mxu0 0
      %534 = vmatprep.subr.bf16.mxu0 0
      %535 = vmatpush1.bf16.xpose.msra.mxu0 0
      %536 = vmatprep.subr.bf16.mxu0 0
      %537 = vmatpush1.bf16.xpose.msra.mxu0 0
      %538 = vmatprep.subr.bf16.mxu0 0
      %539 = vmatpush1.bf16.xpose.msra.mxu0 %v522
      %540 = vmatprep.subr.bf16.mxu0 0
      %541 = vmatpush2.bf16.xpose.msra.mxu0 0
      %542 = vmatprep.subr.bf16.mxu0 0
      %543 = vmatpush2.bf16.xpose.msra.mxu0 0
      %544 = vmatprep.subr.bf16.mxu0 0
      %545 = vmatpush2.bf16.xpose.msra.mxu0 0
      %546 = vmatprep.subr.bf16.mxu0 0
      %547 = vmatpush2.bf16.xpose.msra.mxu0 0
      %548 = vmatprep.subr.bf16.mxu0 0
      %549 = vmatpush2.bf16.xpose.msra.mxu0 0
      %550 = vmatprep.subr.bf16.mxu0 0
      %551 = vmatpush2.bf16.xpose.msra.mxu0 0
      %552 = vmatprep.subr.bf16.mxu0 0
      %553 = vmatpush2.bf16.xpose.msra.mxu0 0
      %554 = vmatprep.subr.bf16.mxu0 0
      %555 = vmatpush2.bf16.xpose.msra.mxu0 0
      %556 = vmatprep.mubr.bf16.mxu0 0
      %557 = vmatmul.mubr.bf16.gmra.mxu0 %v519
      %v558 = vpop.f32.mrf.mxu0
      %v559 = vadd.f32 0.0, %v558
      %v560 = vpop.f32.mrf.mxu0
      %v561 = vpop.f32.mrf.mxu0
      %v562 = vpop.f32.mrf.mxu0
      %563 = vdwg.mxu0
      %v564 = vmul.f32 %v559, 0.35355338
      %v565 = vsel %vm214, -1e+09, %v564
      %v566 = vsel %vm160, %v565, -inf
      %567 = vmax.xlane.f32.xlu0 %v566
      %v568 = vpop.xlane.xlu0 %567
      %v569 = vsub.f32 %v565, %v568
      %v570 = vmul.f32 %v569, 1.442695
      %v571 = vpow.pop %v570
      %v572 = vsel %vm160, %v571, 0.0
      %573 = vadd.xlane.f32.xlu0 %v572
      %v574 = vpop.xlane.xlu0 %573
      %v575 = vrcp.pop %v574
      %v576 = vmul.f32 %v571, %v575
      %v577 = vpack.c.bf16 %v576, %v576
      %578 = vrot.lane.b32.xlu0 %v156, 40
      %v579 = vpop.permute.xlu0 %578
      %v581 = vsel %vm160, %v577, 0
      %v584 = vsel %vm233, %v579, 0
      %586 = vmatprep.subr.bf16.mxu0 0
      %587 = vmatpush1.bf16.msra.mxu0 0
      %588 = vmatprep.subr.bf16.mxu0 0
      %589 = vmatpush1.bf16.msra.mxu0 0
      %590 = vmatprep.subr.bf16.mxu0 0
      %591 = vmatpush1.bf16.msra.mxu0 0
      %592 = vmatprep.subr.bf16.mxu0 0
      %593 = vmatpush1.bf16.msra.mxu0 0
      %594 = vmatprep.subr.bf16.mxu0 0
      %595 = vmatpush1.bf16.msra.mxu0 0
      %596 = vmatprep.subr.bf16.mxu0 0
      %597 = vmatpush1.bf16.msra.mxu0 0
      %598 = vmatprep.subr.bf16.mxu0 0
      %599 = vmatpush1.bf16.msra.mxu0 0
      %600 = vmatprep.subr.bf16.mxu0 0
      %601 = vmatpush1.bf16.msra.mxu0 %v584
      %602 = vmatprep.subr.bf16.mxu0 0
      %603 = vmatpush2.bf16.msra.mxu0 0
      %604 = vmatprep.subr.bf16.mxu0 0
      %605 = vmatpush2.bf16.msra.mxu0 0
      %606 = vmatprep.subr.bf16.mxu0 0
      %607 = vmatpush2.bf16.msra.mxu0 0
      %608 = vmatprep.subr.bf16.mxu0 0
      %609 = vmatpush2.bf16.msra.mxu0 0
      %610 = vmatprep.subr.bf16.mxu0 0
      %611 = vmatpush2.bf16.msra.mxu0 0
      %612 = vmatprep.subr.bf16.mxu0 0
      %613 = vmatpush2.bf16.msra.mxu0 0
      %614 = vmatprep.subr.bf16.mxu0 0
      %615 = vmatpush2.bf16.msra.mxu0 0
      %616 = vmatprep.subr.bf16.mxu0 0
      %617 = vmatpush2.bf16.msra.mxu0 0
      %618 = vmatprep.mubr.bf16.mxu0 0
      %619 = vmatmul.mubr.bf16.gmra.mxu0 %v581
      %v620 = vpop.f32.mrf.mxu0
      %v621 = vadd.f32 0.0, %v620
      %v622 = vpop.f32.mrf.mxu0
      %v623 = vpop.f32.mrf.mxu0
      %v624 = vpop.f32.mrf.mxu0
      %625 = vdwg.mxu0
      %627 = vrot.lane.b32.xlu0 %v621, 24
      %v628 = vpop.permute.xlu0 %627
      %vm630 = vcmask 261312
      %631 = vst.msk [vmem:[%s152] sm:$0xff] %vm630, %v628
      %p632 = scmp.lt.s32.totalorder %s13, 1
      %s633 = scalar_select %p632, %s13, 1
      %s634 = smul.addr %s633, 8
      %s635 = scalar_lea.vmem %s2, %s634
      // Predicated region
      $region29: #{encoder_layer.4} parent=27 // pred_check
        %p636 = pneg %p83
      $region30: #{encoder_layer.4} parent=27 // pred_check_branch
        %638 = sbr.rel (%p636) target = $region32
      $region31: #{encoder_layer.4} parent=27 // pred_region
        _
      $region32: #{encoder_layer.4} parent=27 // pred_fallthru
        _
    $region28: #{encoder_layer.4} parent=5 // pred_fallthru
      _
    %p639 = scmp.le.s32.totalorder 2, %s8
    // Predicated region
    $region33: #{encoder_layer.4} parent=5 // pred_check
      %p640 = pneg %p639
    $region34: #{encoder_layer.4} parent=5 // pred_check_branch
      %642 = sbr.rel (%p640) target = $region36
    $region35: #{encoder_layer.4} parent=5 // pred_region
      %s643 = ssub.s32 %s8, 2
      // Predicated region
      $region37: #{encoder_layer.4} parent=35 // pred_check
        %p644 = pneg %p89
      $region38: #{encoder_layer.4} parent=35 // pred_check_branch
        %646 = sbr.rel (%p644) target = $region40
      $region39: #{encoder_layer.4} parent=35 // pred_region
        %p647 = scmp.lt.s32.totalorder %s14, 1
        %s648 = scalar_select %p647, %s14, 1
        %s649 = smul.addr %s648, 8
        %s650 = scalar_lea.vmem %s2, %s649
      $region40: #{encoder_layer.4} parent=35 // pred_fallthru
        _
    $region36: #{encoder_layer.4} parent=5 // pred_fallthru
      _
  $region6: #{encoder_layer.4} parent=0 // loop_footer
    %s12 = sadd.s32 1, %s8
  $region7: #{encoder_layer.4} parent=0 // loop_footer_branch
    %7 = sbr.rel target = $region3
  $region8: #{encoder_layer.4} parent=0 // loop_exit
    _

</llo_original>
